<compile_context>
chip_gen: v7x
topology: tpu7x:2x2x1
jax: 0.10.0
libtpu: 0.0.40
codegen_flags: <defaults>
</compile_context>

<pallas_src>
import functools
import math
from typing import NamedTuple

import jax
import jax.numpy as jnp
from jax import lax
from jax.experimental import pallas as pl
from jax.experimental.pallas import tpu as pltpu

CP = 128                      # channel pad = lane width
ACT_DTYPE = jnp.bfloat16      # activation storage dtype in HBM
ROW_ALIGN = 16                # padded row width multiple (bf16 sublane packing)
VMEM_LIMIT = 48 * 1024 * 1024


class PaddedFlat(NamedTuple):
    """Activation already in the padded flat layout a 3x3/pad-1 conv consumes:
    arr is (B, (H+3)*Wp, CP) bf16 with valid pixel (i, j) stored at flat row
    (i+1)*Wp + (j+1); every padding position is an exact zero."""
    arr: jax.Array
    H: int
    W: int
    Wp: int


def _round_up(x, m):
    return (x + m - 1) // m * m


# ----------------------------------------------------------------------------
# Pallas kernels
# ----------------------------------------------------------------------------

def _fused_conv_kernel(*refs, n_in, offsets, L, L_in, Wp, Wo, pad, relu,
                       with_stats, padded_out, normalize, norm_hw, out_L):
    """Fused stride-1 conv: optional BN prologue, kh*kw shifted-slice matmuls
    accumulated locally, bias/ReLU, garbage-column mask, BN stats, and either
    a flat or a padded-layout single-store epilogue.

    refs = x_0..x_{n-1}, w_0..w_{n-1}, bias, [scale, shift],
           out, [sum, sumsq], [x_norm scratch]
    """
    pos = 0
    x_refs = refs[pos:pos + n_in]; pos += n_in
    w_refs = refs[pos:pos + n_in]; pos += n_in
    b_ref = refs[pos]; pos += 1
    if normalize:
        ns_ref = refs[pos]; nh_ref = refs[pos + 1]; pos += 2
    o_ref = refs[pos]; pos += 1
    if with_stats:
        sum_ref = refs[pos]; sq_ref = refs[pos + 1]; pos += 2
    xn_ref = refs[pos] if normalize else None

    f32 = jnp.float32

    # Fused BatchNorm (+ time bias) prologue: x_norm = x*scale + shift on the
    # valid interior, exact 0 on the zero-padding border.  Done once in VMEM.
    if normalize:
        hin, win = norm_hw
        hp = L_in // Wp
        xv = x_refs[0][0].astype(f32) * ns_ref[...] + nh_ref[0]
        flat_i = lax.broadcasted_iota(jnp.int32, (L_in, CP), 0)
        row_ok = ((flat_i >= pad * Wp) & (flat_i < (pad + hin) * Wp)).astype(f32)
        col_i = lax.broadcasted_iota(jnp.int32, (Wp, CP), 0)
        col_ok = ((col_i >= pad) & (col_i < pad + win)).astype(f32)
        col_ok = jnp.broadcast_to(col_ok[None], (hp, Wp, CP)).reshape(L_in, CP)
        xn_ref[...] = (xv * (row_ok * col_ok)).astype(xn_ref.dtype)

    # kh*kw (* n_in) shifted-slice matmuls, accumulated in a local f32 value.
    acc = None
    for xi in range(n_in):
        for t, off in enumerate(offsets):
            if normalize:
                chunk = xn_ref[off:off + L, :]
            else:
                chunk = x_refs[xi][0, off:off + L, :]
            part = jnp.dot(chunk, w_refs[xi][t], preferred_element_type=f32)
            acc = part if acc is None else acc + part

    acc = acc + b_ref[...]
    if relu:
        acc = jnp.maximum(acc, 0.0)

    # Mask the wrap-around garbage columns (output col >= Wo) so BN statistics
    # only see valid pixels and the padded-layout handoff keeps zeros clean.
    if with_stats or padded_out:
        col_i = lax.broadcasted_iota(jnp.int32, (Wp, CP), 0)
        keep = (col_i < Wo).astype(f32)
        keep = jnp.broadcast_to(keep[None], (L // Wp, Wp, CP)).reshape(L, CP)
        acc = acc * keep

    # Per-batch BN partial sums via a tiny MXU matmul (avoids XLU reductions).
    if with_stats:
        e0 = (lax.broadcasted_iota(jnp.int32, (8, L), 0) == 0).astype(f32)
        sum_ref[...] = jnp.dot(e0, acc, preferred_element_type=f32)
        sq_ref[...] = jnp.dot(e0, acc * acc, preferred_element_type=f32)

    if padded_out:
        # Write directly in the padded flat layout the next 3x3/pad-1 conv
        # consumes: valid pixel (i, j) lands at flat (i+1)*Wp + (j+1).
        head = pad * Wp + pad
        tail = out_L - head - L
        full = jnp.concatenate(
            [jnp.zeros((head, CP), f32), acc, jnp.zeros((tail, CP), f32)],
            axis=0)
        o_ref[0] = full.astype(o_ref.dtype)
    else:
        o_ref[0] = acc.astype(o_ref.dtype)


def _matmul_bias_kernel(x_ref, w_ref, b_ref, o_ref, *, relu):
    acc = jnp.dot(x_ref[...], w_ref[...], preferred_element_type=jnp.float32)
    acc = acc + b_ref[...]
    if relu:
        acc = jnp.maximum(acc, 0.0)
    o_ref[...] = acc


# ----------------------------------------------------------------------------
# Kernel wrappers
# ----------------------------------------------------------------------------

def fused_conv(xs, ws, bias, *, kh, kw, pad, relu, with_stats,
               padded_out=False, normalize=None):
    """Stride-1 conv of one or more inputs (weights split along K for concat).

    xs elements are NHWC arrays (B, H, W, CP) or PaddedFlat.  Returns
    (out, (Ho, Wp, Wo), stats) where out is a PaddedFlat if padded_out else a
    flat (B, Ho*Wp, CP) bf16 array, and stats = (sums, sumsqs) or None.
    """
    first = xs[0]
    if isinstance(first, PaddedFlat):
        assert kh == 3 and kw == 3 and pad == 1
        B = int(first.arr.shape[0])
        H, W, Wp = first.H, first.W, first.Wp
    else:
        B, H, W, _ = (int(s) for s in first.shape)
        Wp = _round_up(W + 2 * pad, ROW_ALIGN)
    extra = 1 if kw > 1 else 0
    Hp = H + 2 * pad + extra
    Ho = H + 2 * pad - kh + 1
    Wo = W + 2 * pad - kw + 1
    L = Ho * Wp
    if padded_out:
        assert kh == 3 and kw == 3 and pad == 1
    if normalize is not None:
        assert len(xs) == 1

    flats = []
    for x in xs:
        if isinstance(x, PaddedFlat):
            assert x.Wp == Wp and x.H == H and x.W == W
            flats.append(x.arr)
        else:
            xp = jnp.pad(x.astype(ACT_DTYPE),
                         ((0, 0), (pad, pad + extra), (pad, Wp - W - pad), (0, 0)))
            flats.append(xp.reshape(B, Hp * Wp, CP))
    L_in = int(flats[0].shape[1])

    w_list = []
    for w in ws:
        co, ci = int(w.shape[0]), int(w.shape[1])
        wt = jnp.transpose(w, (2, 3, 1, 0))                       # (kh,kw,ci,co)
        wt = jnp.pad(wt, ((0, 0), (0, 0), (0, CP - ci), (0, CP - co)))
        w_list.append(wt.reshape(kh * kw, CP, CP).astype(jnp.bfloat16))
    b_pad = jnp.pad(bias, (0, CP - int(bias.shape[0]))).reshape(1, CP)
    b_pad = b_pad.astype(jnp.float32)

    offsets = tuple(i * Wp + j for i in range(kh) for j in range(kw))
    n_in = len(xs)

    inputs = flats + w_list + [b_pad]
    in_specs = (
        [pl.BlockSpec((1, L_in, CP), lambda b: (b, 0, 0)) for _ in flats]
        + [pl.BlockSpec((kh * kw, CP, CP), lambda b: (0, 0, 0)) for _ in w_list]
        + [pl.BlockSpec((1, CP), lambda b: (0, 0))])
    if normalize is not None:
        scale, shift = normalize
        inputs += [scale.reshape(1, CP).astype(jnp.float32),
                   shift.reshape(B, 1, CP).astype(jnp.float32)]
        in_specs += [pl.BlockSpec((1, CP), lambda b: (0, 0)),
                     pl.BlockSpec((1, 1, CP), lambda b: (b, 0, 0))]

    out_L = (Ho + 2 * pad + extra) * Wp if padded_out else L
    o_sd = jax.ShapeDtypeStruct((B, out_L, CP), ACT_DTYPE)
    o_spec = pl.BlockSpec((1, out_L, CP), lambda b: (b, 0, 0))
    if with_stats:
        s_sd = jax.ShapeDtypeStruct((B * 8, CP), jnp.float32)
        s_spec = pl.BlockSpec((8, CP), lambda b: (b, 0))
        out_shape = (o_sd, s_sd, s_sd)
        out_specs = (o_spec, s_spec, s_spec)
    else:
        out_shape = o_sd
        out_specs = o_spec

    scratch = ([pltpu.VMEM((L_in, CP), ACT_DTYPE)]
               if normalize is not None else [])

    kernel = functools.partial(
        _fused_conv_kernel, n_in=n_in, offsets=offsets, L=L, L_in=L_in,
        Wp=Wp, Wo=Wo, pad=pad, relu=relu, with_stats=with_stats,
        padded_out=padded_out, normalize=normalize is not None,
        norm_hw=(H, W), out_L=out_L)

    res = pl.pallas_call(
        kernel,
        out_shape=out_shape,
        grid=(B,),
        in_specs=in_specs,
        out_specs=out_specs,
        scratch_shapes=scratch,
        compiler_params=pltpu.CompilerParams(
            dimension_semantics=("parallel",),
            vmem_limit_bytes=VMEM_LIMIT),
    )(*inputs)

    if with_stats:
        y, sums, sqs = res
        stats = (sums, sqs)
    else:
        y, stats = res, None
    out = PaddedFlat(y, Ho, Wo, Wp) if padded_out else y
    return out, (Ho, Wp, Wo), stats


def from_flat(y_flat, Ho, Wp, Wo):
    """(B, Ho*Wp, C) conv-kernel layout -> (B, Ho, Wo, C)."""
    B, _, C = y_flat.shape
    return y_flat.reshape(B, Ho, Wp, C)[:, :, :Wo, :]


def bn_scale_shift(sums, sqs, gamma, beta, count, tbias=None, eps=1e-5):
    """Reduce per-batch BN partial sums into per-channel scale/shift (f32)."""
    C = int(sums.shape[-1])
    B = int(sums.shape[0]) // 8
    total = jnp.sum(sums, axis=0)
    total_sq = jnp.sum(sqs, axis=0)
    mean = total / float(count)
    var = jnp.maximum(total_sq / float(count) - mean * mean, 0.0)  # clamp >= 0
    g = jnp.pad(gamma, (0, C - int(gamma.shape[0]))).astype(jnp.float32)
    bt = jnp.pad(beta, (0, C - int(beta.shape[0]))).astype(jnp.float32)
    scale = g * jax.lax.rsqrt(var + eps)
    shift = bt - mean * scale
    shift = jnp.broadcast_to(shift[None, :], (B, C))
    if tbias is not None:
        shift = shift + tbias.astype(jnp.float32)
    return scale.astype(jnp.float32), shift


def matmul_bias(x, w, b, *, relu=False):
    """x: (M, K), w: (K, N), b: (N,) -> (M, N) f32, fused bias/ReLU."""
    M, K = (int(s) for s in x.shape)
    N = int(w.shape[1])
    if M >= 256 and M % 256 == 0:
        tm = 256
    elif M >= 128 and M % 128 == 0:
        tm = 128
    else:
        tm = M  # TODO(synk): tile & pad large non-multiple M at realistic sizes
    return pl.pallas_call(
        functools.partial(_matmul_bias_kernel, relu=relu),
        out_shape=jax.ShapeDtypeStruct((M, N), jnp.float32),
        grid=(M // tm,),
        in_specs=[
            pl.BlockSpec((tm, K), lambda i: (i, 0)),
            pl.BlockSpec((K, N), lambda i: (0, 0)),
            pl.BlockSpec((1, N), lambda i: (0, 0)),
        ],
        out_specs=pl.BlockSpec((tm, N), lambda i: (i, 0)),
        compiler_params=pltpu.CompilerParams(
            dimension_semantics=("parallel",),
            vmem_limit_bytes=VMEM_LIMIT),
    )(x.astype(jnp.bfloat16), w.astype(jnp.bfloat16),
      b.reshape(1, N).astype(jnp.float32))


# ----------------------------------------------------------------------------
# Conv variants built on the kernels
# ----------------------------------------------------------------------------

def _im2col(x, kh, kw, stride, pad):
    B, H, W, C = x.shape
    xp = jnp.pad(x, ((0, 0), (pad, pad), (pad, pad), (0, 0)))
    Ho = (H + 2 * pad - kh) // stride + 1
    Wo = (W + 2 * pad - kw) // stride + 1
    patches = [xp[:, i:i + stride * (Ho - 1) + 1:stride,
                    j:j + stride * (Wo - 1) + 1:stride, :]
               for i in range(kh) for j in range(kw)]
    cols = jnp.stack(patches, axis=3)
    return cols.reshape(B * Ho * Wo, kh * kw * C), (B, Ho, Wo)


def conv2d_strided(x, w, b, *, stride, pad):
    """Strided Conv2d (downsample 'final') via im2col + lane-dense matmul.

    TODO(synk): polyphase-decompose the stride-2 conv to remove the im2col."""
    co, ci, kh, kw = (int(s) for s in w.shape)
    cols, (B, Ho, Wo) = _im2col(x[..., :ci], kh, kw, stride, pad)
    wm = jnp.transpose(w, (2, 3, 1, 0)).reshape(kh * kw * ci, co)
    wm = jnp.pad(wm, ((0, 0), (0, CP - co)))
    bp = jnp.pad(b, (0, CP - co))
    out = matmul_bias(cols, wm, bp, relu=False)
    return out.reshape(B, Ho, Wo, CP).astype(ACT_DTYPE)


def conv_transpose2d(x, w, b):
    """ConvTranspose2d(k=4,s=2,p=1) = stride-1 conv (pad=2) on the zero-dilated
    input with the spatially flipped, channel-swapped weight (fused kernel).

    TODO(synk): sub-pixel (polyphase) decomposition to avoid the 4x dilated
    input and 4x extra MXU work."""
    xd = lax.pad(x, jnp.array(0.0, x.dtype),
                 ((0, 0, 0), (0, 0, 1), (0, 0, 1), (0, 0, 0)))
    w_eq = jnp.transpose(jnp.flip(w, axis=(2, 3)), (1, 0, 2, 3))  # (Cout,Cin,4,4)
    y, dims, _ = fused_conv([xd], [w_eq], b, kh=4, kw=4, pad=2,
                            relu=False, with_stats=False)
    return from_flat(y, *dims)


def time_mlp_forward(t_emb, p):
    """relu(Linear(time_embedding)) with the output channel dim padded to CP."""
    w = p["w"]                                     # (c_out, tdim), torch layout
    co = int(w.shape[0])
    wp = jnp.pad(w.T, ((0, 0), (0, CP - co)))
    bp = jnp.pad(p["b"], (0, CP - co))
    return matmul_bias(t_emb, wp, bp, relu=True)   # (B, CP) f32


def sinusoidal_embedding(t, dim):
    half = dim // 2
    freqs = jnp.exp(
        jnp.arange(half, dtype=jnp.float32) * -(math.log(10000.0) / (half - 1)))
    args = t.astype(jnp.float32)[:, None] * freqs[None, :]
    return jnp.concatenate([jnp.sin(args), jnp.cos(args)], axis=-1)


# ----------------------------------------------------------------------------
# Block / UNet forward (matches the PyTorch module semantics, labels=False)
# ----------------------------------------------------------------------------

def block_forward(p, xs, t_emb):
    """xs: list of block inputs (NHWC (B,H,W,CP) or PaddedFlat); up blocks get
    two operands so the torch.cat is never materialized (weight split on K)."""
    B = int(t_emb.shape[0])
    cin = p["channels_in"]
    if p["downsample"]:
        ws1 = [p["conv1"]["w"]]
    else:
        w = p["conv1"]["w"]
        ws1 = [w[:, :cin], w[:, cin:]]            # torch.cat order: (o, res)

    # y1 = relu(conv1(x)); stats for bnorm1 computed in the same kernel; the
    # output is emitted directly in the padded layout conv2 consumes.
    pf1, dims1, (s1, q1) = fused_conv(xs, ws1, p["conv1"]["b"], kh=3, kw=3,
                                      pad=1, relu=True, with_stats=True,
                                      padded_out=True)
    Ho, _, Wo = dims1
    tb = time_mlp_forward(t_emb, p["time_mlp"])
    scale1, shift1 = bn_scale_shift(s1, q1, p["bn1"]["gamma"], p["bn1"]["beta"],
                                    count=B * Ho * Wo, tbias=tb)

    # conv2 fuses the bnorm1 normalize + time bias as an in-VMEM prologue.
    y2, dims2, (s2, q2) = fused_conv([pf1], [p["conv2"]["w"]], p["conv2"]["b"],
                                     kh=3, kw=3, pad=1, relu=True,
                                     with_stats=True, padded_out=False,
                                     normalize=(scale1, shift1))
    Ho2, Wp2, Wo2 = dims2
    scale2, shift2 = bn_scale_shift(s2, q2, p["bn2"]["gamma"], p["bn2"]["beta"],
                                    count=B * Ho2 * Wo2, tbias=None)

    # bnorm2 applied as a cheap elementwise fused with the layout glue feeding
    # the final (strided / transposed) conv.
    o2 = from_flat(y2, Ho2, Wp2, Wo2)
    o2 = (o2.astype(jnp.float32) * scale2[None, None, None, :]
          + shift2[:, None, None, :]).astype(ACT_DTYPE)

    if p["downsample"]:
        return conv2d_strided(o2, p["final"]["w"], p["final"]["b"],
                              stride=2, pad=1)
    return conv_transpose2d(o2, p["final"]["w"], p["final"]["b"])


def unet_forward(params, x_nchw, t):
    x = jnp.transpose(x_nchw, (0, 2, 3, 1)).astype(jnp.float32)    # NCHW -> NHWC
    B, H, W, C = x.shape
    x = jnp.pad(x, ((0, 0), (0, 0), (0, 0), (0, CP - C)))          # lane-pad C
    t_emb = sinusoidal_embedding(t, params["time_embedding_dims"])

    # Initial conv writes straight into the padded layout the first block eats.
    o, _, _ = fused_conv([x], [params["conv1"]["w"]], params["conv1"]["b"],
                         kh=3, kw=3, pad=1, relu=False, with_stats=False,
                         padded_out=True)

    residuals = []
    for bp in params["downs"]:
        o = block_forward(bp, [o], t_emb)
        residuals.append(o)
    for bp, res in zip(params["ups"], reversed(residuals)):
        o = block_forward(bp, [o, res], t_emb)

    # Final 1x1 conv as a lane-dense matmul.
    Bf, Hf, Wf, _ = (int(s) for s in o.shape)
    w2 = params["conv2"]["w"]                        # (img, sc0, 1, 1)
    co, ci = int(w2.shape[0]), int(w2.shape[1])
    wm = jnp.pad(w2[:, :, 0, 0].T, ((0, CP - ci), (0, CP - co)))
    bp_ = jnp.pad(params["conv2"]["b"], (0, CP - co))
    y = matmul_bias(o.reshape(Bf * Hf * Wf, CP), wm, bp_, relu=False)
    y = y.reshape(Bf, Hf, Wf, CP)[..., :co]
    return jnp.transpose(y, (0, 3, 1, 2))                          # NHWC -> NCHW


# ----------------------------------------------------------------------------
# Deterministic parameter init (shapes follow the PyTorch module __init__)
# ----------------------------------------------------------------------------

class _KeyGen:
    def __init__(self, key):
        self._key = key

    def __call__(self):
        self._key, sub = jax.random.split(self._key)
        return sub


def _init_conv(kg, c_out, c_in, k, scale=0.1):
    return {"w": jax.random.normal(kg(), (c_out, c_in, k, k), jnp.float32) * scale,
            "b": jax.random.normal(kg(), (c_out,), jnp.float32) * 0.05}


def _init_convT(kg, c_in, c_out, k, scale=0.1):
    return {"w": jax.random.normal(kg(), (c_in, c_out, k, k), jnp.float32) * scale,
            "b": jax.random.normal(kg(), (c_out,), jnp.float32) * 0.05}


def _init_linear(kg, f_in, f_out, scale=0.1):
    return {"w": jax.random.normal(kg(), (f_out, f_in), jnp.float32) * scale,
            "b": jax.random.normal(kg(), (f_out,), jnp.float32) * 0.05}


def _init_bn(c):
    return {"gamma": jnp.ones((c,), jnp.float32),
            "beta": jnp.zeros((c,), jnp.float32)}


def _init_block(kg, c_in, c_out, tdim, downsample):
    p = {"downsample": downsample, "channels_in": c_in}
    if downsample:
        p["conv1"] = _init_conv(kg, c_out, c_in, 3)
        p["final"] = _init_conv(kg, c_out, c_out, 4)   # Conv2d(c_out, c_out, 4, 2, 1)
    else:
        p["conv1"] = _init_conv(kg, c_out, 2 * c_in, 3)
        p["final"] = _init_convT(kg, c_out, c_out, 4)  # ConvTranspose2d(c_out, c_out, 4, 2, 1)
    p["bn1"] = _init_bn(c_out)
    p["bn2"] = _init_bn(c_out)
    p["conv2"] = _init_conv(kg, c_out, c_out, 3)
    p["time_mlp"] = _init_linear(kg, tdim, c_out)
    return p


def init_unet_params(key, img_channels=1, time_embedding_dims=32,
                     sequence_channels=(8, 16, 32)):
    kg = _KeyGen(key)
    sc = sequence_channels
    return {
        "img_channels": img_channels,
        "time_embedding_dims": time_embedding_dims,
        "conv1": _init_conv(kg, sc[0], img_channels, 3),
        "conv2": _init_conv(kg, img_channels, sc[0], 1),
        "downs": [_init_block(kg, ci, co, time_embedding_dims, True)
                  for ci, co in zip(sc, sc[1:])],
        "ups": [_init_block(kg, ci, co, time_embedding_dims, False)
                for ci, co in zip(sc[::-1], sc[::-1][1:])],
    }


# ----------------------------------------------------------------------------
# Main
# ----------------------------------------------------------------------------

if __name__ == "__main__":
    key = jax.random.PRNGKey(0)
    kp, kx, kt = jax.random.split(key, 3)

    # Small-but-consistent config: 1 image channel, 16x16 images, batch 2,
    # sequence_channels=(8, 16, 32), time_embedding_dims=32.
    params = init_unet_params(kp, img_channels=1, time_embedding_dims=32,
                              sequence_channels=(8, 16, 32))

    x = jax.random.normal(kx, (2, 1, 16, 16), dtype=jnp.float32)   # NCHW
    t = jax.random.uniform(kt, (2,), dtype=jnp.float32, minval=0.0, maxval=100.0)

    out = unet_forward(params, x, t)
    out = jax.block_until_ready(out)

    assert out.shape == (2, 1, 16, 16), out.shape
    assert bool(jnp.all(jnp.isfinite(out)))
    print("KERNEL_OK")
</pallas_src>

<mosaic_0001>
module attributes {stable_mosaic.version = 11 : i64} {
  func.func @_fused_conv_kernel(%arg0: i32, %arg1: memref<1x608x128xbf16, #tpu.memory_space<vmem>>, %arg2: memref<9x128x128xbf16, #tpu.memory_space<vmem>>, %arg3: memref<1x128xf32, #tpu.memory_space<vmem>>, %arg4: memref<1x608x128xbf16, #tpu.memory_space<vmem>>) attributes {dimension_semantics = [#tpu.dimension_semantics<parallel>], iteration_bounds = array<i64: 2>, scalar_prefetch = 0 : i64, scratch_operands = 0 : i64, tpu.core_type = #tpu.core_type<tc>, window_params = [{transform_indices = @transform_0, window_bounds = array<i64: 1, 608, 128>}, {pipeline_mode = #tpu.pipeline_mode<synchronous>, transform_indices = @transform_1, window_bounds = array<i64: 9, 128, 128>}, {pipeline_mode = #tpu.pipeline_mode<synchronous>, transform_indices = @transform_2, window_bounds = array<i64: 1, 128>}, {transform_indices = @transform_3, window_bounds = array<i64: 1, 608, 128>}]} {
    %c0 = arith.constant 0 : index
    %c0_0 = arith.constant 0 : index
    %c0_1 = arith.constant 0 : index
    %0 = vector.load %arg1[%c0, %c0_0, %c0_1] : memref<1x608x128xbf16, #tpu.memory_space<vmem>>, vector<1x512x128xbf16>
    %1 = vector.shape_cast %0 : vector<1x512x128xbf16> to vector<512x128xbf16>
    %c0_2 = arith.constant 0 : index
    %c0_3 = arith.constant 0 : index
    %c0_4 = arith.constant 0 : index
    %2 = vector.load %arg2[%c0_2, %c0_3, %c0_4] : memref<9x128x128xbf16, #tpu.memory_space<vmem>>, vector<1x128x128xbf16>
    %3 = vector.shape_cast %2 : vector<1x128x128xbf16> to vector<128x128xbf16>
    %cst = arith.constant dense<0.000000e+00> : vector<512x128xf32>
    %4 = tpu.matmul %1, %3, %cst {dimension_numbers = #tpu.dot_dimension_numbers<[1], [0], [0], [1], [0, 0, 1, 1], [], []>} : vector<512x128xbf16>, vector<128x128xbf16>, vector<512x128xf32> -> vector<512x128xf32>
    %c0_5 = arith.constant 0 : index
    %c1 = arith.constant 1 : index
    %c0_6 = arith.constant 0 : index
    %5 = vector.load %arg1[%c0_5, %c1, %c0_6] : memref<1x608x128xbf16, #tpu.memory_space<vmem>>, vector<1x512x128xbf16>
    %6 = vector.shape_cast %5 : vector<1x512x128xbf16> to vector<512x128xbf16>
    %c1_7 = arith.constant 1 : index
    %c0_8 = arith.constant 0 : index
    %c0_9 = arith.constant 0 : index
    %7 = vector.load %arg2[%c1_7, %c0_8, %c0_9] : memref<9x128x128xbf16, #tpu.memory_space<vmem>>, vector<1x128x128xbf16>
    %8 = vector.shape_cast %7 : vector<1x128x128xbf16> to vector<128x128xbf16>
    %cst_10 = arith.constant dense<0.000000e+00> : vector<512x128xf32>
    %9 = tpu.matmul %6, %8, %cst_10 {dimension_numbers = #tpu.dot_dimension_numbers<[1], [0], [0], [1], [0, 0, 1, 1], [], []>} : vector<512x128xbf16>, vector<128x128xbf16>, vector<512x128xf32> -> vector<512x128xf32>
    %10 = arith.addf %4, %9 : vector<512x128xf32>
    %c0_11 = arith.constant 0 : index
    %c2 = arith.constant 2 : index
    %c0_12 = arith.constant 0 : index
    %11 = vector.load %arg1[%c0_11, %c2, %c0_12] : memref<1x608x128xbf16, #tpu.memory_space<vmem>>, vector<1x512x128xbf16>
    %12 = vector.shape_cast %11 : vector<1x512x128xbf16> to vector<512x128xbf16>
    %c2_13 = arith.constant 2 : index
    %c0_14 = arith.constant 0 : index
    %c0_15 = arith.constant 0 : index
    %13 = vector.load %arg2[%c2_13, %c0_14, %c0_15] : memref<9x128x128xbf16, #tpu.memory_space<vmem>>, vector<1x128x128xbf16>
    %14 = vector.shape_cast %13 : vector<1x128x128xbf16> to vector<128x128xbf16>
    %cst_16 = arith.constant dense<0.000000e+00> : vector<512x128xf32>
    %15 = tpu.matmul %12, %14, %cst_16 {dimension_numbers = #tpu.dot_dimension_numbers<[1], [0], [0], [1], [0, 0, 1, 1], [], []>} : vector<512x128xbf16>, vector<128x128xbf16>, vector<512x128xf32> -> vector<512x128xf32>
    %16 = arith.addf %10, %15 : vector<512x128xf32>
    %c0_17 = arith.constant 0 : index
    %c32 = arith.constant 32 : index
    %c0_18 = arith.constant 0 : index
    %17 = vector.load %arg1[%c0_17, %c32, %c0_18] : memref<1x608x128xbf16, #tpu.memory_space<vmem>>, vector<1x512x128xbf16>
    %18 = vector.shape_cast %17 : vector<1x512x128xbf16> to vector<512x128xbf16>
    %c3 = arith.constant 3 : index
    %c0_19 = arith.constant 0 : index
    %c0_20 = arith.constant 0 : index
    %19 = vector.load %arg2[%c3, %c0_19, %c0_20] : memref<9x128x128xbf16, #tpu.memory_space<vmem>>, vector<1x128x128xbf16>
    %20 = vector.shape_cast %19 : vector<1x128x128xbf16> to vector<128x128xbf16>
    %cst_21 = arith.constant dense<0.000000e+00> : vector<512x128xf32>
    %21 = tpu.matmul %18, %20, %cst_21 {dimension_numbers = #tpu.dot_dimension_numbers<[1], [0], [0], [1], [0, 0, 1, 1], [], []>} : vector<512x128xbf16>, vector<128x128xbf16>, vector<512x128xf32> -> vector<512x128xf32>
    %22 = arith.addf %16, %21 : vector<512x128xf32>
    %c0_22 = arith.constant 0 : index
    %c33 = arith.constant 33 : index
    %c0_23 = arith.constant 0 : index
    %23 = vector.load %arg1[%c0_22, %c33, %c0_23] : memref<1x608x128xbf16, #tpu.memory_space<vmem>>, vector<1x512x128xbf16>
    %24 = vector.shape_cast %23 : vector<1x512x128xbf16> to vector<512x128xbf16>
    %c4 = arith.constant 4 : index
    %c0_24 = arith.constant 0 : index
    %c0_25 = arith.constant 0 : index
    %25 = vector.load %arg2[%c4, %c0_24, %c0_25] : memref<9x128x128xbf16, #tpu.memory_space<vmem>>, vector<1x128x128xbf16>
    %26 = vector.shape_cast %25 : vector<1x128x128xbf16> to vector<128x128xbf16>
    %cst_26 = arith.constant dense<0.000000e+00> : vector<512x128xf32>
    %27 = tpu.matmul %24, %26, %cst_26 {dimension_numbers = #tpu.dot_dimension_numbers<[1], [0], [0], [1], [0, 0, 1, 1], [], []>} : vector<512x128xbf16>, vector<128x128xbf16>, vector<512x128xf32> -> vector<512x128xf32>
    %28 = arith.addf %22, %27 : vector<512x128xf32>
    %c0_27 = arith.constant 0 : index
    %c34 = arith.constant 34 : index
    %c0_28 = arith.constant 0 : index
    %29 = vector.load %arg1[%c0_27, %c34, %c0_28] : memref<1x608x128xbf16, #tpu.memory_space<vmem>>, vector<1x512x128xbf16>
    %30 = vector.shape_cast %29 : vector<1x512x128xbf16> to vector<512x128xbf16>
    %c5 = arith.constant 5 : index
    %c0_29 = arith.constant 0 : index
    %c0_30 = arith.constant 0 : index
    %31 = vector.load %arg2[%c5, %c0_29, %c0_30] : memref<9x128x128xbf16, #tpu.memory_space<vmem>>, vector<1x128x128xbf16>
    %32 = vector.shape_cast %31 : vector<1x128x128xbf16> to vector<128x128xbf16>
    %cst_31 = arith.constant dense<0.000000e+00> : vector<512x128xf32>
    %33 = tpu.matmul %30, %32, %cst_31 {dimension_numbers = #tpu.dot_dimension_numbers<[1], [0], [0], [1], [0, 0, 1, 1], [], []>} : vector<512x128xbf16>, vector<128x128xbf16>, vector<512x128xf32> -> vector<512x128xf32>
    %34 = arith.addf %28, %33 : vector<512x128xf32>
    %c0_32 = arith.constant 0 : index
    %c64 = arith.constant 64 : index
    %c0_33 = arith.constant 0 : index
    %35 = vector.load %arg1[%c0_32, %c64, %c0_33] : memref<1x608x128xbf16, #tpu.memory_space<vmem>>, vector<1x512x128xbf16>
    %36 = vector.shape_cast %35 : vector<1x512x128xbf16> to vector<512x128xbf16>
    %c6 = arith.constant 6 : index
    %c0_34 = arith.constant 0 : index
    %c0_35 = arith.constant 0 : index
    %37 = vector.load %arg2[%c6, %c0_34, %c0_35] : memref<9x128x128xbf16, #tpu.memory_space<vmem>>, vector<1x128x128xbf16>
    %38 = vector.shape_cast %37 : vector<1x128x128xbf16> to vector<128x128xbf16>
    %cst_36 = arith.constant dense<0.000000e+00> : vector<512x128xf32>
    %39 = tpu.matmul %36, %38, %cst_36 {dimension_numbers = #tpu.dot_dimension_numbers<[1], [0], [0], [1], [0, 0, 1, 1], [], []>} : vector<512x128xbf16>, vector<128x128xbf16>, vector<512x128xf32> -> vector<512x128xf32>
    %40 = arith.addf %34, %39 : vector<512x128xf32>
    %c0_37 = arith.constant 0 : index
    %c65 = arith.constant 65 : index
    %c0_38 = arith.constant 0 : index
    %41 = vector.load %arg1[%c0_37, %c65, %c0_38] : memref<1x608x128xbf16, #tpu.memory_space<vmem>>, vector<1x512x128xbf16>
    %42 = vector.shape_cast %41 : vector<1x512x128xbf16> to vector<512x128xbf16>
    %c7 = arith.constant 7 : index
    %c0_39 = arith.constant 0 : index
    %c0_40 = arith.constant 0 : index
    %43 = vector.load %arg2[%c7, %c0_39, %c0_40] : memref<9x128x128xbf16, #tpu.memory_space<vmem>>, vector<1x128x128xbf16>
    %44 = vector.shape_cast %43 : vector<1x128x128xbf16> to vector<128x128xbf16>
    %cst_41 = arith.constant dense<0.000000e+00> : vector<512x128xf32>
    %45 = tpu.matmul %42, %44, %cst_41 {dimension_numbers = #tpu.dot_dimension_numbers<[1], [0], [0], [1], [0, 0, 1, 1], [], []>} : vector<512x128xbf16>, vector<128x128xbf16>, vector<512x128xf32> -> vector<512x128xf32>
    %46 = arith.addf %40, %45 : vector<512x128xf32>
    %c0_42 = arith.constant 0 : index
    %c66 = arith.constant 66 : index
    %c0_43 = arith.constant 0 : index
    %47 = vector.load %arg1[%c0_42, %c66, %c0_43] : memref<1x608x128xbf16, #tpu.memory_space<vmem>>, vector<1x512x128xbf16>
    %48 = vector.shape_cast %47 : vector<1x512x128xbf16> to vector<512x128xbf16>
    %c8 = arith.constant 8 : index
    %c0_44 = arith.constant 0 : index
    %c0_45 = arith.constant 0 : index
    %49 = vector.load %arg2[%c8, %c0_44, %c0_45] : memref<9x128x128xbf16, #tpu.memory_space<vmem>>, vector<1x128x128xbf16>
    %50 = vector.shape_cast %49 : vector<1x128x128xbf16> to vector<128x128xbf16>
    %cst_46 = arith.constant dense<0.000000e+00> : vector<512x128xf32>
    %51 = tpu.matmul %48, %50, %cst_46 {dimension_numbers = #tpu.dot_dimension_numbers<[1], [0], [0], [1], [0, 0, 1, 1], [], []>} : vector<512x128xbf16>, vector<128x128xbf16>, vector<512x128xf32> -> vector<512x128xf32>
    %52 = arith.addf %46, %51 : vector<512x128xf32>
    %c0_47 = arith.constant 0 : index
    %c0_48 = arith.constant 0 : index
    %53 = vector.load %arg3[%c0_47, %c0_48] : memref<1x128xf32, #tpu.memory_space<vmem>>, vector<1x128xf32>
    %54 = vector.broadcast %53 : vector<1x128xf32> to vector<512x128xf32>
    %55 = arith.addf %52, %54 : vector<512x128xf32>
    %56 = tpu.iota {dimensions = array<i32: 0>} : vector<32x128xi32>
    %c16_i32 = arith.constant 16 : i32
    %57 = vector.broadcast %c16_i32 : i32 to vector<32x128xi32>
    %58 = arith.cmpi slt, %56, %57 : vector<32x128xi32>
    %59 = arith.extui %58 : vector<32x128xi1> to vector<32x128xi32>
    %60 = arith.sitofp %59 : vector<32x128xi32> to vector<32x128xf32>
    %61 = vector.shape_cast %60 : vector<32x128xf32> to vector<1x32x128xf32>
    %62 = vector.shape_cast %61 : vector<1x32x128xf32> to vector<1x32x128xf32>
    %63 = vector.broadcast %62 : vector<1x32x128xf32> to vector<16x32x128xf32>
    %64 = vector.shape_cast %63 : vector<16x32x128xf32> to vector<512x128xf32>
    %65 = arith.mulf %55, %64 : vector<512x128xf32>
    %cst_49 = arith.constant 0.000000e+00 : f32
    %66 = vector.broadcast %cst_49 : f32 to vector<33x128xf32>
    %cst_50 = arith.constant 0.000000e+00 : f32
    %67 = vector.broadcast %cst_50 : f32 to vector<63x128xf32>
    %68 = tpu.concatenate %66, %65, %67 in 0 : vector<33x128xf32>, vector<512x128xf32>, vector<63x128xf32> -> vector<608x128xf32>
    %69 = arith.truncf %68 : vector<608x128xf32> to vector<608x128xbf16>
    %c0_51 = arith.constant 0 : index
    %c0_52 = arith.constant 0 : index
    %c0_53 = arith.constant 0 : index
    %70 = vector.load %arg4[%c0_51, %c0_52, %c0_53] : memref<1x608x128xbf16, #tpu.memory_space<vmem>>, vector<1x608x128xbf16>
    %71 = vector.shape_cast %70 : vector<1x608x128xbf16> to vector<608x128xbf16>
    %72 = vector.shape_cast %69 : vector<608x128xbf16> to vector<1x608x128xbf16>
    tpu.vector_store %arg4[%c0_51, %c0_52, %c0_53], %72 {strides = array<i32>} : memref<1x608x128xbf16, #tpu.memory_space<vmem>>, vector<1x608x128xbf16>,
    return
  }
  func.func @transform_0(%arg0: i32) -> (i32, i32, i32) {
    %c0_i32 = arith.constant 0 : i32
    %c0_i32_0 = arith.constant 0 : i32
    %c0_i32_1 = arith.constant 0 : i32
    return %arg0, %c0_i32, %c0_i32_0 : i32, i32, i32
  }
  func.func @transform_1(%arg0: i32) -> (i32, i32, i32) {
    %c0_i32 = arith.constant 0 : i32
    %c0_i32_0 = arith.constant 0 : i32
    %c0_i32_1 = arith.constant 0 : i32
    %c0_i32_2 = arith.constant 0 : i32
    return %c0_i32, %c0_i32_0, %c0_i32_1 : i32, i32, i32
  }
  func.func @transform_2(%arg0: i32) -> (i32, i32) {
    %c0_i32 = arith.constant 0 : i32
    %c0_i32_0 = arith.constant 0 : i32
    %c0_i32_1 = arith.constant 0 : i32
    return %c0_i32, %c0_i32_0 : i32, i32
  }
  func.func @transform_3(%arg0: i32) -> (i32, i32, i32) {
    %c0_i32 = arith.constant 0 : i32
    %c0_i32_0 = arith.constant 0 : i32
    %c0_i32_1 = arith.constant 0 : i32
    return %arg0, %c0_i32, %c0_i32_0 : i32, i32, i32
  }
}

</mosaic_0001>

<llo_original>
// kernel: tpu_custom_call.1
$region0: #{tpu_custom_call.1}
  #allocation0 [shape = 'u32[]', space=smem, size = 0x4, offset = 0x4, fixed_abs, tag = 'smem constant byte address 0x4 - core index']
  #allocation1 [shape = 'u32[144,128]{1,0:T(1,128)}', space=vmem, size = 0x12000, scoped, tag = 'internal scratch']
  %s0 = inlined_call_operand.hbm [shape: bf16[2,608,128], index: 0, kind: input, shape index: {}]
  %s1 = inlined_call_operand.hbm [shape: bf16[9,128,128], index: 1, kind: input, shape index: {}]
  %s2 = inlined_call_operand.vmem [shape: f32[1,128], index: 2, kind: input, shape index: {}]
  %s3 = inlined_call_operand.hbm [shape: bf16[2,608,128], index: 3, kind: output, shape index: {}]
  %s4 = sld [smem:[#allocation0]]
  $region53: #{tpu_custom_call.1} parent=0
    _
  %s6 = ssub.s32 1, %s4
  %s7 = scalar_select 0, %s6, %s4
  $region1: #{tpu_custom_call.1} parent=0
    #allocation2 [shape = 'u8[311296]{0}', space=vmem, size = 0x4c000, scoped, tag = 'input window, operand 0']
    #allocation3 [shape = 's32[2]{0}', space=sflag, size = 0x8, scoped, tag = 'scoped memory for tpu_custom_call.1']
    #allocation4 [shape = 's32[2]{0}', space=sflag, size = 0x8, scoped, tag = 'scoped memory for tpu_custom_call.1']
    #allocation5 [shape = 'u8[294912]{0}', space=vmem, size = 0x48000, scoped, tag = 'input window, operand 1, single buffered']
    #allocation6 [shape = 's32[1]{0}', space=sflag, size = 0x4, scoped, tag = 'scoped memory for tpu_custom_call.1']
    #allocation7 [shape = 'u8[311296]{0}', space=vmem, size = 0x4c000, scoped, tag = 'output window, operand 0']
    %8 = vsyncpa [#allocation3], 0
    %s9 = scalar_lea.sflag [#allocation3], 1
    %10 = vsyncpa %s9, 0
    %11 = vsyncpa [#allocation6], 0
    %12 = vsyncpa [#allocation4], 0
    %s13 = scalar_lea.sflag [#allocation4], 1
    %14 = vsyncpa %s13, 0
    loop: start=0, step=1, limit=4
    $region2: #{tpu_custom_call.1} parent=1 // loop_pre_header
      _
    $region3: #{tpu_custom_call.1} parent=1 // loop_header
      %s16 = sphi 0, %s20
      %p17 = scmp.ge.s32.totalorder %s16, 4
      %s26 = sphi 0, %s28
      %s29 = sphi 0, %s26
      %s30 = sphi 0, %s29
      %s46 = sphi 0, %s30
      %s50 = sphi 0, %s50
      %s52 = sphi 0, %s50
      %s53 = sphi 0, %s52
      %s67 = sphi 0, %s53
      %s71 = sphi 0, %s71
      %s73 = sphi 0, %s71
      %s74 = sphi 0, %s73
      %s88 = sphi 0, %s74
      %s94 = sphi 0, %s96
      %s97 = sphi 0, %s94
      %s98 = sphi 0, %s97
      %s114 = sphi 0, %s98
    $region4: #{tpu_custom_call.1} parent=1 // loop_header_branch
      %19 = sbr.rel (%p17) target = $region8
    $region5: #{tpu_custom_call.1} parent=1 // loop_body
      %s21 = ssub.s32 %s16, 1
      %s22 = ssub.s32 %s16, 2
      %s23 = sadd.s32 %s16, 1
      %s24 = ssub.s32 %s16, %s23
      %p25 = scmp.eq.s32.totalorder %s24, 0
      %s27 = sadd.s32 %s26, 1
      %s28 = scalar_select %p25, %s26, %s27
      %p31 = pneg %p25
      %p32 = scmp.eq.s32.totalorder %s16, 1
      %p33 = por %p31, %p32
      %p34 = scmp.ne.s32.totalorder %s26, %s29
      %p35 = scmp.eq.s32.totalorder %s16, 0
      %p36 = por %p34, %p35
      %p37 = scmp.ne.s32.totalorder %s26, %s29
      %p38 = scmp.eq.s32.totalorder %s21, 1
      %p39 = por %p37, %p38
      %p40 = scmp.ne.s32.totalorder %s29, %s30
      %p41 = scmp.eq.s32.totalorder %s21, 0
      %p42 = por %p40, %p41
      %p43 = scmp.ne.s32.totalorder %s29, %s30
      %p44 = scmp.eq.s32.totalorder %s22, 1
      %p45 = por %p43, %p44
      %p47 = scmp.ne.s32.totalorder %s30, %s46
      %p48 = scmp.eq.s32.totalorder %s22, 0
      %p49 = por %p47, %p48
      %s51 = sadd.s32 %s50, 1
      %p54 = scmp.eq.s32.totalorder %s16, 1
      %p55 = scmp.ne.s32.totalorder %s50, %s52
      %p56 = scmp.eq.s32.totalorder %s16, 0
      %p57 = por %p55, %p56
      %p58 = scmp.ne.s32.totalorder %s50, %s52
      %p59 = scmp.eq.s32.totalorder %s21, 1
      %p60 = por %p58, %p59
      %p61 = scmp.ne.s32.totalorder %s52, %s53
      %p62 = scmp.eq.s32.totalorder %s21, 0
      %p63 = por %p61, %p62
      %p64 = scmp.ne.s32.totalorder %s52, %s53
      %p65 = scmp.eq.s32.totalorder %s22, 1
      %p66 = por %p64, %p65
      %p68 = scmp.ne.s32.totalorder %s53, %s67
      %p69 = scmp.eq.s32.totalorder %s22, 0
      %p70 = por %p68, %p69
      %s72 = sadd.s32 %s71, 1
      %p75 = scmp.eq.s32.totalorder %s16, 1
      %p76 = scmp.ne.s32.totalorder %s71, %s73
      %p77 = scmp.eq.s32.totalorder %s16, 0
      %p78 = por %p76, %p77
      %p79 = scmp.ne.s32.totalorder %s71, %s73
      %p80 = scmp.eq.s32.totalorder %s21, 1
      %p81 = por %p79, %p80
      %p82 = scmp.ne.s32.totalorder %s73, %s74
      %p83 = scmp.eq.s32.totalorder %s21, 0
      %p84 = por %p82, %p83
      %p85 = scmp.ne.s32.totalorder %s73, %s74
      %p86 = scmp.eq.s32.totalorder %s22, 1
      %p87 = por %p85, %p86
      %p89 = scmp.ne.s32.totalorder %s74, %s88
      %p90 = scmp.eq.s32.totalorder %s22, 0
      %p91 = por %p89, %p90
      %s92 = ssub.s32 %s16, %s23
      %p93 = scmp.eq.s32.totalorder %s92, 0
      %s95 = sadd.s32 %s94, 1
      %s96 = scalar_select %p93, %s94, %s95
      %p99 = pneg %p93
      %p100 = scmp.eq.s32.totalorder %s16, 1
      %p101 = por %p99, %p100
      %p102 = scmp.ne.s32.totalorder %s94, %s97
      %p103 = scmp.eq.s32.totalorder %s16, 0
      %p104 = por %p102, %p103
      %p105 = scmp.ne.s32.totalorder %s94, %s97
      %p106 = scmp.eq.s32.totalorder %s21, 1
      %p107 = por %p105, %p106
      %p108 = scmp.ne.s32.totalorder %s97, %s98
      %p109 = scmp.eq.s32.totalorder %s21, 0
      %p110 = por %p108, %p109
      %p111 = scmp.ne.s32.totalorder %s97, %s98
      %p112 = scmp.eq.s32.totalorder %s22, 1
      %p113 = por %p111, %p112
      %p115 = scmp.ne.s32.totalorder %s98, %s114
      %p116 = scmp.eq.s32.totalorder %s22, 0
      %p117 = por %p115, %p116
      %p118 = scmp.le.s32.totalorder 1, %s16
      %p119 = scmp.lt.s32.totalorder %s16, 3
      %p120 = pnand %p118, %p119
      %p121 = pneg %p120
      // Predicated region
      $region9: #{tpu_custom_call.1} parent=5 // pred_check
        _
      $region10: #{tpu_custom_call.1} parent=5 // pred_check_branch
        %123 = sbr.rel (%p120) target = $region12
      $region11: #{tpu_custom_call.1} parent=5 // pred_region
        %s124 = ssub.s32 %s16, 1
        // Predicated region
        $region13: #{tpu_custom_call.1} parent=11 // pred_check
          %p125 = pneg %p63
        $region14: #{tpu_custom_call.1} parent=11 // pred_check_branch
          %127 = sbr.rel (%p125) target = $region16
        $region15: #{tpu_custom_call.1} parent=11 // pred_region
          %s129 = ssub.s32 9216, 9216
          %130 = vsyncadd [#allocation6], %s129
          %s131 = sshll.u32 [#allocation5], 4
          %s132 = int_to_ptr.vmem [resolvable:$true] %s131
          %137 = dma.hbm_to_vmem [thread:$0]  %s1, 9216, %s132, [#allocation6], 64, 64, 4
        $region16: #{tpu_custom_call.1} parent=11 // pred_fallthru
          _
        // Predicated region
        $region17: #{tpu_custom_call.1} parent=11 // pred_check
          %p138 = pneg %p84
        $region18: #{tpu_custom_call.1} parent=11 // pred_check_branch
          %140 = sbr.rel (%p138) target = $region20
        $region19: #{tpu_custom_call.1} parent=11 // pred_region
          _
        $region20: #{tpu_custom_call.1} parent=11 // pred_fallthru
          _
      $region12: #{tpu_custom_call.1} parent=5 // pred_fallthru
        _
      %p141 = scmp.lt.s32.totalorder %s16, 2
      // Predicated region
      $region21: #{tpu_custom_call.1} parent=5 // pred_check
        %p142 = pneg %p141
      $region22: #{tpu_custom_call.1} parent=5 // pred_check_branch
        %144 = sbr.rel (%p142) target = $region24
      $region23: #{tpu_custom_call.1} parent=5 // pred_region
        // Predicated region
        $region25: #{tpu_custom_call.1} parent=23 // pred_check
          %p145 = pneg %p36
        $region26: #{tpu_custom_call.1} parent=23 // pred_check_branch
          %147 = sbr.rel (%p145) target = $region28
        $region27: #{tpu_custom_call.1} parent=23 // pred_region
          %s148 = sand.u32 %s26, 1
          %s149 = scalar_lea.sflag [#allocation3], %s148
          %s150 = sand.u32 %s26, 1
          %s151 = smul.addr %s150, 304
          %s152 = scalar_lea.vmem [#allocation2], %s151
          %s154 = ssub.s32 4864, 4864
          %155 = vsyncadd %s149, %s154
          %s156 = smul.addr %s16, 76
          %s157 = smul.addr %s156, 64
          %s158 = scalar_lea.hbm %s0, %s157
          %s159 = sshll.u32 %s152, 4
          %s160 = int_to_ptr.vmem [resolvable:$true] %s159
          %165 = dma.hbm_to_vmem [thread:$0]  %s158, 4864, %s160, %s149, 64, 64, 4
        $region28: #{tpu_custom_call.1} parent=23 // pred_fallthru
          _
      $region24: #{tpu_custom_call.1} parent=5 // pred_fallthru
        _
      %p166 = scmp.le.s32.totalorder 1, %s16
      %p167 = scmp.lt.s32.totalorder %s16, 3
      %p168 = pnand %p166, %p167
      %p169 = pneg %p168
      // Predicated region
      $region29: #{tpu_custom_call.1} parent=5 // pred_check
        _
      $region30: #{tpu_custom_call.1} parent=5 // pred_check_branch
        %171 = sbr.rel (%p168) target = $region32
      $region31: #{tpu_custom_call.1} parent=5 // pred_region
        %s172 = ssub.s32 %s16, 1
        %s173 = sand.u32 %s29, 1
        %s174 = scalar_lea.sflag [#allocation3], %s173
        %s175 = sand.u32 %s29, 1
        %s176 = smul.addr %s175, 304
        %s177 = scalar_lea.vmem [#allocation2], %s176
        // Predicated region
        $region33: #{tpu_custom_call.1} parent=31 // pred_check
          %p178 = pneg %p42
        $region34: #{tpu_custom_call.1} parent=31 // pred_check_branch
          %180 = sbr.rel (%p178) target = $region36
        $region35: #{tpu_custom_call.1} parent=31 // pred_region
          %181 = dma.done %s174, 4864
        $region36: #{tpu_custom_call.1} parent=31 // pred_fallthru
          _
        // Predicated region
        $region37: #{tpu_custom_call.1} parent=31 // pred_check
          %p182 = pneg %p63
        $region38: #{tpu_custom_call.1} parent=31 // pred_check_branch
          %184 = sbr.rel (%p182) target = $region40
        $region39: #{tpu_custom_call.1} parent=31 // pred_region
          %185 = dma.done [#allocation6], 9216
        $region40: #{tpu_custom_call.1} parent=31 // pred_fallthru
          _
        %s186 = sand.u32 %s29, 1
        %s187 = scalar_lea.sflag [#allocation3], %s186
        %s188 = sand.u32 %s29, 1
        %s189 = smul.addr %s188, 304
        %s190 = scalar_lea.vmem [#allocation2], %s189
        %p191 = pneg %p42
        %p192 = pneg %p39
        %p193 = pneg %p63
        %p194 = pneg %p60
        %p195 = pneg %p84
        %p196 = pneg %p81
        %p197 = pneg %p110
        %p198 = pneg %p107
        %s199 = sand.u32 %s97, 1
        %s200 = scalar_lea.sflag [#allocation4], %s199
        %s201 = sand.u32 %s97, 1
        %s202 = smul.addr %s201, 304
        %s203 = scalar_lea.vmem [#allocation7], %s202
        %v205 = vld [vmem:[%s177] sm:$0xf]
        %v206 = vld [vmem:[%s177 + $0x4] sm:$0xf]
        %v207 = vld [vmem:[%s177 + $0x8] sm:$0xf]
        %v208 = vld [vmem:[%s177 + $0xc] sm:$0xf]
        %v209 = vld [vmem:[%s177 + $0x10] sm:$0xf]
        %v210 = vld [vmem:[%s177 + $0x14] sm:$0xf]
        %v211 = vld [vmem:[%s177 + $0x18] sm:$0xf]
        %v212 = vld [vmem:[%s177 + $0x1c] sm:$0xf]
        %v213 = vld [vmem:[%s177 + $0x20] sm:$0xf]
        %v214 = vld [vmem:[%s177 + $0x24] sm:$0xf]
        %v215 = vld [vmem:[%s177 + $0x28] sm:$0xf]
        %v216 = vld [vmem:[%s177 + $0x2c] sm:$0xf]
        %v217 = vld [vmem:[%s177 + $0x30] sm:$0xf]
        %v218 = vld [vmem:[%s177 + $0x34] sm:$0xf]
        %v219 = vld [vmem:[%s177 + $0x38] sm:$0xf]
        %v220 = vld [vmem:[%s177 + $0x3c] sm:$0xf]
        %v221 = vld [vmem:[%s177 + $0x40] sm:$0xf]
        %v222 = vld [vmem:[%s177 + $0x44] sm:$0xf]
        %v223 = vld [vmem:[%s177 + $0x48] sm:$0xf]
        %v224 = vld [vmem:[%s177 + $0x4c] sm:$0xf]
        %v225 = vld [vmem:[%s177 + $0x50] sm:$0xf]
        %v226 = vld [vmem:[%s177 + $0x54] sm:$0xf]
        %v227 = vld [vmem:[%s177 + $0x58] sm:$0xf]
        %v228 = vld [vmem:[%s177 + $0x5c] sm:$0xf]
        %v229 = vld [vmem:[%s177 + $0x60] sm:$0xf]
        %v230 = vld [vmem:[%s177 + $0x64] sm:$0xf]
        %v231 = vld [vmem:[%s177 + $0x68] sm:$0xf]
        %v232 = vld [vmem:[%s177 + $0x6c] sm:$0xf]
        %v233 = vld [vmem:[%s177 + $0x70] sm:$0xf]
        %v234 = vld [vmem:[%s177 + $0x74] sm:$0xf]
        %v235 = vld [vmem:[%s177 + $0x78] sm:$0xf]
        %v236 = vld [vmem:[%s177 + $0x7c] sm:$0xf]
        %v237 = vld [vmem:[%s177 + $0x80] sm:$0xf]
        %v238 = vld [vmem:[%s177 + $0x84] sm:$0xf]
        %v239 = vld [vmem:[%s177 + $0x88] sm:$0xf]
        %v240 = vld [vmem:[%s177 + $0x8c] sm:$0xf]
        %v241 = vld [vmem:[%s177 + $0x90] sm:$0xf]
        %v242 = vld [vmem:[%s177 + $0x94] sm:$0xf]
        %v243 = vld [vmem:[%s177 + $0x98] sm:$0xf]
        %v244 = vld [vmem:[%s177 + $0x9c] sm:$0xf]
        %v245 = vld [vmem:[%s177 + $0xa0] sm:$0xf]
        %v246 = vld [vmem:[%s177 + $0xa4] sm:$0xf]
        %v247 = vld [vmem:[%s177 + $0xa8] sm:$0xf]
        %v248 = vld [vmem:[%s177 + $0xac] sm:$0xf]
        %v249 = vld [vmem:[%s177 + $0xb0] sm:$0xf]
        %v250 = vld [vmem:[%s177 + $0xb4] sm:$0xf]
        %v251 = vld [vmem:[%s177 + $0xb8] sm:$0xf]
        %v252 = vld [vmem:[%s177 + $0xbc] sm:$0xf]
        %v253 = vld [vmem:[%s177 + $0xc0] sm:$0xf]
        %v254 = vld [vmem:[%s177 + $0xc4] sm:$0xf]
        %v255 = vld [vmem:[%s177 + $0xc8] sm:$0xf]
        %v256 = vld [vmem:[%s177 + $0xcc] sm:$0xf]
        %v257 = vld [vmem:[%s177 + $0xd0] sm:$0xf]
        %v258 = vld [vmem:[%s177 + $0xd4] sm:$0xf]
        %v259 = vld [vmem:[%s177 + $0xd8] sm:$0xf]
        %v260 = vld [vmem:[%s177 + $0xdc] sm:$0xf]
        %v261 = vld [vmem:[%s177 + $0xe0] sm:$0xf]
        %v262 = vld [vmem:[%s177 + $0xe4] sm:$0xf]
        %v263 = vld [vmem:[%s177 + $0xe8] sm:$0xf]
        %v264 = vld [vmem:[%s177 + $0xec] sm:$0xf]
        %v265 = vld [vmem:[%s177 + $0xf0] sm:$0xf]
        %v266 = vld [vmem:[%s177 + $0xf4] sm:$0xf]
        %v267 = vld [vmem:[%s177 + $0xf8] sm:$0xf]
        %v268 = vld [vmem:[%s177 + $0xfc] sm:$0xf]
        %v269 = vld [vmem:[#allocation5] sm:$0xf]
        %v270 = vld [vmem:[#allocation5 + $0x4] sm:$0xf]
        %v271 = vld [vmem:[#allocation5 + $0x8] sm:$0xf]
        %v272 = vld [vmem:[#allocation5 + $0xc] sm:$0xf]
        %v273 = vld [vmem:[#allocation5 + $0x10] sm:$0xf]
        %v274 = vld [vmem:[#allocation5 + $0x14] sm:$0xf]
        %v275 = vld [vmem:[#allocation5 + $0x18] sm:$0xf]
        %v276 = vld [vmem:[#allocation5 + $0x1c] sm:$0xf]
        %v277 = vld [vmem:[#allocation5 + $0x20] sm:$0xf]
        %v278 = vld [vmem:[#allocation5 + $0x24] sm:$0xf]
        %v279 = vld [vmem:[#allocation5 + $0x28] sm:$0xf]
        %v280 = vld [vmem:[#allocation5 + $0x2c] sm:$0xf]
        %v281 = vld [vmem:[#allocation5 + $0x30] sm:$0xf]
        %v282 = vld [vmem:[#allocation5 + $0x34] sm:$0xf]
        %v283 = vld [vmem:[#allocation5 + $0x38] sm:$0xf]
        %v284 = vld [vmem:[#allocation5 + $0x3c] sm:$0xf]
        %v285 = vld [vmem:[%s177 + $0x100] sm:$0x1]
        %s286 = scalar_lea.vmem [#allocation5], 64
        %v287 = vld [vmem:[%s286] sm:$0xf]
        %v288 = vld [vmem:[%s286 + $0x4] sm:$0xf]
        %v289 = vld [vmem:[%s286 + $0x8] sm:$0xf]
        %v290 = vld [vmem:[%s286 + $0xc] sm:$0xf]
        %v291 = vld [vmem:[%s286 + $0x10] sm:$0xf]
        %v292 = vld [vmem:[%s286 + $0x14] sm:$0xf]
        %v293 = vld [vmem:[%s286 + $0x18] sm:$0xf]
        %v294 = vld [vmem:[%s286 + $0x1c] sm:$0xf]
        %v295 = vld [vmem:[%s286 + $0x20] sm:$0xf]
        %v296 = vld [vmem:[%s286 + $0x24] sm:$0xf]
        %v297 = vld [vmem:[%s286 + $0x28] sm:$0xf]
        %v298 = vld [vmem:[%s286 + $0x2c] sm:$0xf]
        %v299 = vld [vmem:[%s286 + $0x30] sm:$0xf]
        %v300 = vld [vmem:[%s286 + $0x34] sm:$0xf]
        %v301 = vld [vmem:[%s286 + $0x38] sm:$0xf]
        %v302 = vld [vmem:[%s286 + $0x3c] sm:$0xf]
        %v368 = vunpack.c.l.b16 %v205
        %v369 = vunpack.c.l.b16 %v206
        %v370 = vunpack.c.l.b16 %v207
        %v371 = vunpack.c.l.b16 %v208
        %v372 = vunpack.c.l.b16 %v209
        %v373 = vunpack.c.l.b16 %v210
        %v374 = vunpack.c.l.b16 %v211
        %v375 = vunpack.c.l.b16 %v212
        %v376 = vunpack.c.l.b16 %v213
        %v377 = vunpack.c.l.b16 %v214
        %v378 = vunpack.c.l.b16 %v215
        %v379 = vunpack.c.l.b16 %v216
        %v380 = vunpack.c.l.b16 %v217
        %v381 = vunpack.c.l.b16 %v218
        %v382 = vunpack.c.l.b16 %v219
        %v383 = vunpack.c.l.b16 %v220
        %v384 = vunpack.c.l.b16 %v221
        %v385 = vunpack.c.l.b16 %v222
        %v386 = vunpack.c.l.b16 %v223
        %v387 = vunpack.c.l.b16 %v224
        %v388 = vunpack.c.l.b16 %v225
        %v389 = vunpack.c.l.b16 %v226
        %v390 = vunpack.c.l.b16 %v227
        %v391 = vunpack.c.l.b16 %v228
        %v392 = vunpack.c.l.b16 %v229
        %v393 = vunpack.c.l.b16 %v230
        %v394 = vunpack.c.l.b16 %v231
        %v395 = vunpack.c.l.b16 %v232
        %v396 = vunpack.c.l.b16 %v233
        %v397 = vunpack.c.l.b16 %v234
        %v398 = vunpack.c.l.b16 %v235
        %v399 = vunpack.c.l.b16 %v236
        %v400 = vunpack.c.l.b16 %v237
        %v401 = vunpack.c.l.b16 %v238
        %v402 = vunpack.c.l.b16 %v239
        %v403 = vunpack.c.l.b16 %v240
        %v404 = vunpack.c.l.b16 %v241
        %v405 = vunpack.c.l.b16 %v242
        %v406 = vunpack.c.l.b16 %v243
        %v407 = vunpack.c.l.b16 %v244
        %v408 = vunpack.c.l.b16 %v245
        %v409 = vunpack.c.l.b16 %v246
        %v410 = vunpack.c.l.b16 %v247
        %v411 = vunpack.c.l.b16 %v248
        %v412 = vunpack.c.l.b16 %v249
        %v413 = vunpack.c.l.b16 %v250
        %v414 = vunpack.c.l.b16 %v251
        %v415 = vunpack.c.l.b16 %v252
        %v416 = vunpack.c.l.b16 %v253
        %v417 = vunpack.c.l.b16 %v254
        %v418 = vunpack.c.l.b16 %v255
        %v419 = vunpack.c.l.b16 %v256
        %v420 = vunpack.c.l.b16 %v257
        %v421 = vunpack.c.l.b16 %v258
        %v422 = vunpack.c.l.b16 %v259
        %v423 = vunpack.c.l.b16 %v260
        %v424 = vunpack.c.l.b16 %v261
        %v425 = vunpack.c.l.b16 %v262
        %v426 = vunpack.c.l.b16 %v263
        %v427 = vunpack.c.l.b16 %v264
        %v428 = vunpack.c.l.b16 %v265
        %v429 = vunpack.c.l.b16 %v266
        %v430 = vunpack.c.l.b16 %v267
        %v431 = vunpack.c.l.b16 %v268
        %v432 = vunpack.c.l.b16 %v285
        %v433 = vpack.c.b16 %v369, %v368
        %v434 = vpack.c.b16 %v371, %v370
        %v435 = vpack.c.b16 %v373, %v372
        %v436 = vpack.c.b16 %v375, %v374
        %v437 = vpack.c.b16 %v377, %v376
        %v438 = vpack.c.b16 %v379, %v378
        %v439 = vpack.c.b16 %v381, %v380
        %v440 = vpack.c.b16 %v383, %v382
        %v441 = vpack.c.b16 %v385, %v384
        %v442 = vpack.c.b16 %v387, %v386
        %v443 = vpack.c.b16 %v389, %v388
        %v444 = vpack.c.b16 %v391, %v390
        %v445 = vpack.c.b16 %v393, %v392
        %v446 = vpack.c.b16 %v395, %v394
        %v447 = vpack.c.b16 %v397, %v396
        %v448 = vpack.c.b16 %v399, %v398
        %v449 = vpack.c.b16 %v401, %v400
        %v450 = vpack.c.b16 %v403, %v402
        %v451 = vpack.c.b16 %v405, %v404
        %v452 = vpack.c.b16 %v407, %v406
        %v453 = vpack.c.b16 %v409, %v408
        %v454 = vpack.c.b16 %v411, %v410
        %v455 = vpack.c.b16 %v413, %v412
        %v456 = vpack.c.b16 %v415, %v414
        %v457 = vpack.c.b16 %v417, %v416
        %v458 = vpack.c.b16 %v419, %v418
        %v459 = vpack.c.b16 %v421, %v420
        %v460 = vpack.c.b16 %v423, %v422
        %v461 = vpack.c.b16 %v425, %v424
        %v462 = vpack.c.b16 %v427, %v426
        %v463 = vpack.c.b16 %v429, %v428
        %v464 = vpack.c.b16 %v431, %v430
        %v465 = vpack.c.b16 %v432, %v432
        %vm466 = vsmask.f32 7424
        %v468 = vshrl.u32 %v433, 16
        %v470 = vshll.u32 %v433, 16
        %v472 = vrot.slane %v470, 1
        %v473 = vor.u32 %v468, %v472
        %v475 = vshll.u32 %v434, 16
        %v477 = vrot.slane %v475, 1
        %v478 = vsel %vm466, %v473, %v477
        %v479 = vshrl.u32 %v434, 16
        %v481 = vor.u32 %v479, %v477
        %v483 = vshll.u32 %v435, 16
        %v485 = vrot.slane %v483, 1
        %v486 = vsel %vm466, %v481, %v485
        %v487 = vshrl.u32 %v435, 16
        %v489 = vor.u32 %v487, %v485
        %v491 = vshll.u32 %v436, 16
        %v493 = vrot.slane %v491, 1
        %v494 = vsel %vm466, %v489, %v493
        %v495 = vshrl.u32 %v436, 16
        %v497 = vor.u32 %v495, %v493
        %v499 = vshll.u32 %v437, 16
        %v501 = vrot.slane %v499, 1
        %v502 = vsel %vm466, %v497, %v501
        %v503 = vshrl.u32 %v437, 16
        %v505 = vor.u32 %v503, %v501
        %v507 = vshll.u32 %v438, 16
        %v509 = vrot.slane %v507, 1
        %v510 = vsel %vm466, %v505, %v509
        %v511 = vshrl.u32 %v438, 16
        %v513 = vor.u32 %v511, %v509
        %v515 = vshll.u32 %v439, 16
        %v517 = vrot.slane %v515, 1
        %v518 = vsel %vm466, %v513, %v517
        %v519 = vshrl.u32 %v439, 16
        %v521 = vor.u32 %v519, %v517
        %v523 = vshll.u32 %v440, 16
        %v525 = vrot.slane %v523, 1
        %v526 = vsel %vm466, %v521, %v525
        %v527 = vshrl.u32 %v440, 16
        %v529 = vor.u32 %v527, %v525
        %v531 = vshll.u32 %v441, 16
        %v533 = vrot.slane %v531, 1
        %v534 = vsel %vm466, %v529, %v533
        %v535 = vshrl.u32 %v441, 16
        %v537 = vor.u32 %v535, %v533
        %v539 = vshll.u32 %v442, 16
        %v541 = vrot.slane %v539, 1
        %v542 = vsel %vm466, %v537, %v541
        %v543 = vshrl.u32 %v442, 16
        %v545 = vor.u32 %v543, %v541
        %v547 = vshll.u32 %v443, 16
        %v549 = vrot.slane %v547, 1
        %v550 = vsel %vm466, %v545, %v549
        %v551 = vshrl.u32 %v443, 16
        %v553 = vor.u32 %v551, %v549
        %v555 = vshll.u32 %v444, 16
        %v557 = vrot.slane %v555, 1
        %v558 = vsel %vm466, %v553, %v557
        %v559 = vshrl.u32 %v444, 16
        %v561 = vor.u32 %v559, %v557
        %v563 = vshll.u32 %v445, 16
        %v565 = vrot.slane %v563, 1
        %v566 = vsel %vm466, %v561, %v565
        %v567 = vshrl.u32 %v445, 16
        %v569 = vor.u32 %v567, %v565
        %v571 = vshll.u32 %v446, 16
        %v573 = vrot.slane %v571, 1
        %v574 = vsel %vm466, %v569, %v573
        %v575 = vshrl.u32 %v446, 16
        %v577 = vor.u32 %v575, %v573
        %v579 = vshll.u32 %v447, 16
        %v581 = vrot.slane %v579, 1
        %v582 = vsel %vm466, %v577, %v581
        %v583 = vshrl.u32 %v447, 16
        %v585 = vor.u32 %v583, %v581
        %v587 = vshll.u32 %v448, 16
        %v589 = vrot.slane %v587, 1
        %v590 = vsel %vm466, %v585, %v589
        %v591 = vshrl.u32 %v448, 16
        %v593 = vor.u32 %v591, %v589
        %v595 = vshll.u32 %v449, 16
        %v597 = vrot.slane %v595, 1
        %v598 = vsel %vm466, %v593, %v597
        %v599 = vshrl.u32 %v449, 16
        %v601 = vor.u32 %v599, %v597
        %v603 = vshll.u32 %v450, 16
        %v605 = vrot.slane %v603, 1
        %v606 = vsel %vm466, %v601, %v605
        %v607 = vshrl.u32 %v450, 16
        %v609 = vor.u32 %v607, %v605
        %v611 = vshll.u32 %v451, 16
        %v613 = vrot.slane %v611, 1
        %v614 = vsel %vm466, %v609, %v613
        %v615 = vshrl.u32 %v451, 16
        %v617 = vor.u32 %v615, %v613
        %v619 = vshll.u32 %v452, 16
        %v621 = vrot.slane %v619, 1
        %v622 = vsel %vm466, %v617, %v621
        %v623 = vshrl.u32 %v452, 16
        %v625 = vor.u32 %v623, %v621
        %v627 = vshll.u32 %v453, 16
        %v629 = vrot.slane %v627, 1
        %v630 = vsel %vm466, %v625, %v629
        %v631 = vshrl.u32 %v453, 16
        %v633 = vor.u32 %v631, %v629
        %v635 = vshll.u32 %v454, 16
        %v637 = vrot.slane %v635, 1
        %v638 = vsel %vm466, %v633, %v637
        %v639 = vshrl.u32 %v454, 16
        %v641 = vor.u32 %v639, %v637
        %v643 = vshll.u32 %v455, 16
        %v645 = vrot.slane %v643, 1
        %v646 = vsel %vm466, %v641, %v645
        %v647 = vshrl.u32 %v455, 16
        %v649 = vor.u32 %v647, %v645
        %v651 = vshll.u32 %v456, 16
        %v653 = vrot.slane %v651, 1
        %v654 = vsel %vm466, %v649, %v653
        %v655 = vshrl.u32 %v456, 16
        %v657 = vor.u32 %v655, %v653
        %v659 = vshll.u32 %v457, 16
        %v661 = vrot.slane %v659, 1
        %v662 = vsel %vm466, %v657, %v661
        %v663 = vshrl.u32 %v457, 16
        %v665 = vor.u32 %v663, %v661
        %v667 = vshll.u32 %v458, 16
        %v669 = vrot.slane %v667, 1
        %v670 = vsel %vm466, %v665, %v669
        %v671 = vshrl.u32 %v458, 16
        %v673 = vor.u32 %v671, %v669
        %v675 = vshll.u32 %v459, 16
        %v677 = vrot.slane %v675, 1
        %v678 = vsel %vm466, %v673, %v677
        %v679 = vshrl.u32 %v459, 16
        %v681 = vor.u32 %v679, %v677
        %v683 = vshll.u32 %v460, 16
        %v685 = vrot.slane %v683, 1
        %v686 = vsel %vm466, %v681, %v685
        %v687 = vshrl.u32 %v460, 16
        %v689 = vor.u32 %v687, %v685
        %v691 = vshll.u32 %v461, 16
        %v693 = vrot.slane %v691, 1
        %v694 = vsel %vm466, %v689, %v693
        %v695 = vshrl.u32 %v461, 16
        %v697 = vor.u32 %v695, %v693
        %v699 = vshll.u32 %v462, 16
        %v701 = vrot.slane %v699, 1
        %v702 = vsel %vm466, %v697, %v701
        %v703 = vshrl.u32 %v462, 16
        %v705 = vor.u32 %v703, %v701
        %v707 = vshll.u32 %v463, 16
        %v709 = vrot.slane %v707, 1
        %v710 = vsel %vm466, %v705, %v709
        %v711 = vshrl.u32 %v463, 16
        %v713 = vor.u32 %v711, %v709
        %v715 = vshll.u32 %v464, 16
        %v717 = vrot.slane %v715, 1
        %v718 = vsel %vm466, %v713, %v717
        %v719 = vshrl.u32 %v464, 16
        %v721 = vor.u32 %v719, %v717
        %v723 = vshll.u32 %v465, 16
        %v725 = vrot.slane %v723, 1
        %v726 = vsel %vm466, %v721, %v725
        %v775 = vunpack.c.l.b16 %v287
        %v776 = vunpack.c.l.b16 %v288
        %v777 = vunpack.c.l.b16 %v289
        %v778 = vunpack.c.l.b16 %v290
        %v779 = vunpack.c.l.b16 %v291
        %v780 = vunpack.c.l.b16 %v292
        %v781 = vunpack.c.l.b16 %v293
        %v782 = vunpack.c.l.b16 %v294
        %v783 = vunpack.c.l.b16 %v295
        %v784 = vunpack.c.l.b16 %v296
        %v785 = vunpack.c.l.b16 %v297
        %v786 = vunpack.c.l.b16 %v298
        %v787 = vunpack.c.l.b16 %v299
        %v788 = vunpack.c.l.b16 %v300
        %v789 = vunpack.c.l.b16 %v301
        %v790 = vunpack.c.l.b16 %v302
        %v791 = vpack.c.b16 %v776, %v775
        %v792 = vpack.c.b16 %v778, %v777
        %v793 = vpack.c.b16 %v780, %v779
        %v794 = vpack.c.b16 %v782, %v781
        %v795 = vpack.c.b16 %v784, %v783
        %v796 = vpack.c.b16 %v786, %v785
        %v797 = vpack.c.b16 %v788, %v787
        %v798 = vpack.c.b16 %v790, %v789
        %807 = vmatprep.subr.bf16.mxu0 0
        %808 = vmatpush1.bf16.msra.mxu0 %v791
        %809 = vmatprep.subr.bf16.mxu0 0
        %810 = vmatpush1.bf16.msra.mxu0 %v792
        %811 = vmatprep.subr.bf16.mxu0 0
        %812 = vmatpush1.bf16.msra.mxu0 %v793
        %813 = vmatprep.subr.bf16.mxu0 0
        %814 = vmatpush1.bf16.msra.mxu0 %v794
        %815 = vmatprep.subr.bf16.mxu0 0
        %816 = vmatpush1.bf16.msra.mxu0 %v795
        %817 = vmatprep.subr.bf16.mxu0 0
        %818 = vmatpush1.bf16.msra.mxu0 %v796
        %819 = vmatprep.subr.bf16.mxu0 0
        %820 = vmatpush1.bf16.msra.mxu0 %v797
        %821 = vmatprep.subr.bf16.mxu0 0
        %822 = vmatpush1.bf16.msra.mxu0 %v798
        %823 = vmatprep.subr.bf16.mxu0 0
        %824 = vmatpush1.bf16.msra.mxu0 0
        %825 = vmatprep.subr.bf16.mxu0 0
        %826 = vmatpush1.bf16.msra.mxu0 0
        %827 = vmatprep.subr.bf16.mxu0 0
        %828 = vmatpush1.bf16.msra.mxu0 0
        %829 = vmatprep.subr.bf16.mxu0 0
        %830 = vmatpush1.bf16.msra.mxu0 0
        %831 = vmatprep.subr.bf16.mxu0 0
        %832 = vmatpush1.bf16.msra.mxu0 0
        %833 = vmatprep.subr.bf16.mxu0 0
        %834 = vmatpush1.bf16.msra.mxu0 0
        %835 = vmatprep.subr.bf16.mxu0 0
        %836 = vmatpush1.bf16.msra.mxu0 0
        %837 = vmatprep.subr.bf16.mxu0 0
        %838 = vmatpush1.bf16.msra.mxu0 0
        %839 = vmatprep.mubr.bf16.mxu0 0
        %840 = vmatmul.mubr.bf16.gmra.mrb[0].mxu0 %v478
        %v841 = vpop.f32.mrb[0].mxu0
        %v842 = vadd.f32 0.0, %v841
        %v843 = vpop.f32.mrb[0].mxu0
        %v844 = vpop.f32.mrb[0].mxu0
        %v845 = vadd.f32 0.0, %v844
        %v846 = vpop.f32.mrb[0].mxu0
        %847 = vmatprep.mubr.bf16.mxu0 0
        %848 = vmatmul.mubr.bf16.gmra.mrb[0].mxu0 %v486
        %v849 = vpop.f32.mrb[0].mxu0
        %v850 = vadd.f32 0.0, %v849
        %v851 = vpop.f32.mrb[0].mxu0
        %v852 = vpop.f32.mrb[0].mxu0
        %v853 = vadd.f32 0.0, %v852
        %v854 = vpop.f32.mrb[0].mxu0
        %855 = vmatprep.mubr.bf16.mxu0 0
        %856 = vmatmul.mubr.bf16.gmra.mrb[0].mxu0 %v494
        %v857 = vpop.f32.mrb[0].mxu0
        %v858 = vadd.f32 0.0, %v857
        %v859 = vpop.f32.mrb[0].mxu0
        %v860 = vpop.f32.mrb[0].mxu0
        %v861 = vadd.f32 0.0, %v860
        %v862 = vpop.f32.mrb[0].mxu0
        %863 = vmatprep.mubr.bf16.mxu0 0
        %864 = vmatmul.mubr.bf16.gmra.mrb[0].mxu0 %v502
        %v865 = vpop.f32.mrb[0].mxu0
        %v866 = vadd.f32 0.0, %v865
        %v867 = vpop.f32.mrb[0].mxu0
        %v868 = vpop.f32.mrb[0].mxu0
        %v869 = vadd.f32 0.0, %v868
        %v870 = vpop.f32.mrb[0].mxu0
        %871 = vmatprep.mubr.bf16.mxu0 0
        %872 = vmatmul.mubr.bf16.gmra.mrb[0].mxu0 %v510
        %v873 = vpop.f32.mrb[0].mxu0
        %v874 = vadd.f32 0.0, %v873
        %v875 = vpop.f32.mrb[0].mxu0
        %v876 = vpop.f32.mrb[0].mxu0
        %v877 = vadd.f32 0.0, %v876
        %v878 = vpop.f32.mrb[0].mxu0
        %879 = vmatprep.mubr.bf16.mxu0 0
        %880 = vmatmul.mubr.bf16.gmra.mrb[0].mxu0 %v518
        %v881 = vpop.f32.mrb[0].mxu0
        %v882 = vadd.f32 0.0, %v881
        %v883 = vpop.f32.mrb[0].mxu0
        %v884 = vpop.f32.mrb[0].mxu0
        %v885 = vadd.f32 0.0, %v884
        %v886 = vpop.f32.mrb[0].mxu0
        %887 = vmatprep.mubr.bf16.mxu0 0
        %888 = vmatmul.mubr.bf16.gmra.mrb[0].mxu0 %v526
        %v889 = vpop.f32.mrb[0].mxu0
        %v890 = vadd.f32 0.0, %v889
        %v891 = vpop.f32.mrb[0].mxu0
        %v892 = vpop.f32.mrb[0].mxu0
        %v893 = vadd.f32 0.0, %v892
        %v894 = vpop.f32.mrb[0].mxu0
        %895 = vmatprep.mubr.bf16.mxu0 0
        %896 = vmatmul.mubr.bf16.gmra.mrb[0].mxu0 %v534
        %v897 = vpop.f32.mrb[0].mxu0
        %v898 = vadd.f32 0.0, %v897
        %v899 = vpop.f32.mrb[0].mxu0
        %v900 = vpop.f32.mrb[0].mxu0
        %v901 = vadd.f32 0.0, %v900
        %v902 = vpop.f32.mrb[0].mxu0
        %903 = vmatprep.mubr.bf16.mxu0 0
        %904 = vmatmul.mubr.bf16.gmra.mrb[0].mxu0 %v542
        %v905 = vpop.f32.mrb[0].mxu0
        %v906 = vadd.f32 0.0, %v905
        %v907 = vpop.f32.mrb[0].mxu0
        %v908 = vpop.f32.mrb[0].mxu0
        %v909 = vadd.f32 0.0, %v908
        %v910 = vpop.f32.mrb[0].mxu0
        %911 = vmatprep.mubr.bf16.mxu0 0
        %912 = vmatmul.mubr.bf16.gmra.mrb[0].mxu0 %v550
        %v913 = vpop.f32.mrb[0].mxu0
        %v914 = vadd.f32 0.0, %v913
        %v915 = vpop.f32.mrb[0].mxu0
        %v916 = vpop.f32.mrb[0].mxu0
        %v917 = vadd.f32 0.0, %v916
        %v918 = vpop.f32.mrb[0].mxu0
        %919 = vmatprep.mubr.bf16.mxu0 0
        %920 = vmatmul.mubr.bf16.gmra.mrb[0].mxu0 %v558
        %v921 = vpop.f32.mrb[0].mxu0
        %v922 = vadd.f32 0.0, %v921
        %v923 = vpop.f32.mrb[0].mxu0
        %v924 = vpop.f32.mrb[0].mxu0
        %v925 = vadd.f32 0.0, %v924
        %v926 = vpop.f32.mrb[0].mxu0
        %927 = vmatprep.mubr.bf16.mxu0 0
        %928 = vmatmul.mubr.bf16.gmra.mrb[0].mxu0 %v566
        %v929 = vpop.f32.mrb[0].mxu0
        %v930 = vadd.f32 0.0, %v929
        %v931 = vpop.f32.mrb[0].mxu0
        %v932 = vpop.f32.mrb[0].mxu0
        %v933 = vadd.f32 0.0, %v932
        %v934 = vpop.f32.mrb[0].mxu0
        %935 = vmatprep.mubr.bf16.mxu0 0
        %936 = vmatmul.mubr.bf16.gmra.mrb[0].mxu0 %v574
        %v937 = vpop.f32.mrb[0].mxu0
        %v938 = vadd.f32 0.0, %v937
        %v939 = vpop.f32.mrb[0].mxu0
        %v940 = vpop.f32.mrb[0].mxu0
        %v941 = vadd.f32 0.0, %v940
        %v942 = vpop.f32.mrb[0].mxu0
        %943 = vmatprep.mubr.bf16.mxu0 0
        %944 = vmatmul.mubr.bf16.gmra.mrb[0].mxu0 %v582
        %v945 = vpop.f32.mrb[0].mxu0
        %v946 = vadd.f32 0.0, %v945
        %v947 = vpop.f32.mrb[0].mxu0
        %v948 = vpop.f32.mrb[0].mxu0
        %v949 = vadd.f32 0.0, %v948
        %v950 = vpop.f32.mrb[0].mxu0
        %951 = vmatprep.mubr.bf16.mxu0 0
        %952 = vmatmul.mubr.bf16.gmra.mrb[0].mxu0 %v590
        %v953 = vpop.f32.mrb[0].mxu0
        %v954 = vadd.f32 0.0, %v953
        %v955 = vpop.f32.mrb[0].mxu0
        %v956 = vpop.f32.mrb[0].mxu0
        %v957 = vadd.f32 0.0, %v956
        %v958 = vpop.f32.mrb[0].mxu0
        %959 = vmatprep.mubr.bf16.mxu0 0
        %960 = vmatmul.mubr.bf16.gmra.mrb[0].mxu0 %v598
        %v961 = vpop.f32.mrb[0].mxu0
        %v962 = vadd.f32 0.0, %v961
        %v963 = vpop.f32.mrb[0].mxu0
        %v964 = vpop.f32.mrb[0].mxu0
        %v965 = vadd.f32 0.0, %v964
        %v966 = vpop.f32.mrb[0].mxu0
        %967 = vmatprep.mubr.bf16.mxu0 0
        %968 = vmatmul.mubr.bf16.gmra.mrb[0].mxu0 %v606
        %v969 = vpop.f32.mrb[0].mxu0
        %v970 = vadd.f32 0.0, %v969
        %v971 = vpop.f32.mrb[0].mxu0
        %v972 = vpop.f32.mrb[0].mxu0
        %v973 = vadd.f32 0.0, %v972
        %v974 = vpop.f32.mrb[0].mxu0
        %975 = vmatprep.mubr.bf16.mxu0 0
        %976 = vmatmul.mubr.bf16.gmra.mrb[0].mxu0 %v614
        %v977 = vpop.f32.mrb[0].mxu0
        %v978 = vadd.f32 0.0, %v977
        %v979 = vpop.f32.mrb[0].mxu0
        %v980 = vpop.f32.mrb[0].mxu0
        %v981 = vadd.f32 0.0, %v980
        %v982 = vpop.f32.mrb[0].mxu0
        %983 = vmatprep.mubr.bf16.mxu0 0
        %984 = vmatmul.mubr.bf16.gmra.mrb[0].mxu0 %v622
        %v985 = vpop.f32.mrb[0].mxu0
        %v986 = vadd.f32 0.0, %v985
        %v987 = vpop.f32.mrb[0].mxu0
        %v988 = vpop.f32.mrb[0].mxu0
        %v989 = vadd.f32 0.0, %v988
        %v990 = vpop.f32.mrb[0].mxu0
        %991 = vmatprep.mubr.bf16.mxu0 0
        %992 = vmatmul.mubr.bf16.gmra.mrb[0].mxu0 %v630
        %v993 = vpop.f32.mrb[0].mxu0
        %v994 = vadd.f32 0.0, %v993
        %v995 = vpop.f32.mrb[0].mxu0
        %v996 = vpop.f32.mrb[0].mxu0
        %v997 = vadd.f32 0.0, %v996
        %v998 = vpop.f32.mrb[0].mxu0
        %999 = vmatprep.mubr.bf16.mxu0 0
        %1000 = vmatmul.mubr.bf16.gmra.mrb[0].mxu0 %v638
        %v1001 = vpop.f32.mrb[0].mxu0
        %v1002 = vadd.f32 0.0, %v1001
        %v1003 = vpop.f32.mrb[0].mxu0
        %v1004 = vpop.f32.mrb[0].mxu0
        %v1005 = vadd.f32 0.0, %v1004
        %v1006 = vpop.f32.mrb[0].mxu0
        %1007 = vmatprep.mubr.bf16.mxu0 0
        %1008 = vmatmul.mubr.bf16.gmra.mrb[0].mxu0 %v646
        %v1009 = vpop.f32.mrb[0].mxu0
        %v1010 = vadd.f32 0.0, %v1009
        %v1011 = vpop.f32.mrb[0].mxu0
        %v1012 = vpop.f32.mrb[0].mxu0
        %v1013 = vadd.f32 0.0, %v1012
        %v1014 = vpop.f32.mrb[0].mxu0
        %1015 = vmatprep.mubr.bf16.mxu0 0
        %1016 = vmatmul.mubr.bf16.gmra.mrb[0].mxu0 %v654
        %v1017 = vpop.f32.mrb[0].mxu0
        %v1018 = vadd.f32 0.0, %v1017
        %v1019 = vpop.f32.mrb[0].mxu0
        %v1020 = vpop.f32.mrb[0].mxu0
        %v1021 = vadd.f32 0.0, %v1020
        %v1022 = vpop.f32.mrb[0].mxu0
        %1023 = vmatprep.mubr.bf16.mxu0 0
        %1024 = vmatmul.mubr.bf16.gmra.mrb[0].mxu0 %v662
        %v1025 = vpop.f32.mrb[0].mxu0
        %v1026 = vadd.f32 0.0, %v1025
        %v1027 = vpop.f32.mrb[0].mxu0
        %v1028 = vpop.f32.mrb[0].mxu0
        %v1029 = vadd.f32 0.0, %v1028
        %v1030 = vpop.f32.mrb[0].mxu0
        %1031 = vmatprep.mubr.bf16.mxu0 0
        %1032 = vmatmul.mubr.bf16.gmra.mrb[0].mxu0 %v670
        %v1033 = vpop.f32.mrb[0].mxu0
        %v1034 = vadd.f32 0.0, %v1033
        %v1035 = vpop.f32.mrb[0].mxu0
        %v1036 = vpop.f32.mrb[0].mxu0
        %v1037 = vadd.f32 0.0, %v1036
        %v1038 = vpop.f32.mrb[0].mxu0
        %1039 = vmatprep.mubr.bf16.mxu0 0
        %1040 = vmatmul.mubr.bf16.gmra.mrb[0].mxu0 %v678
        %v1041 = vpop.f32.mrb[0].mxu0
        %v1042 = vadd.f32 0.0, %v1041
        %v1043 = vpop.f32.mrb[0].mxu0
        %v1044 = vpop.f32.mrb[0].mxu0
        %v1045 = vadd.f32 0.0, %v1044
        %v1046 = vpop.f32.mrb[0].mxu0
        %1047 = vmatprep.mubr.bf16.mxu0 0
        %1048 = vmatmul.mubr.bf16.gmra.mrb[0].mxu0 %v686
        %v1049 = vpop.f32.mrb[0].mxu0
        %v1050 = vadd.f32 0.0, %v1049
        %v1051 = vpop.f32.mrb[0].mxu0
        %v1052 = vpop.f32.mrb[0].mxu0
        %v1053 = vadd.f32 0.0, %v1052
        %v1054 = vpop.f32.mrb[0].mxu0
        %1055 = vmatprep.mubr.bf16.mxu0 0
        %1056 = vmatmul.mubr.bf16.gmra.mrb[0].mxu0 %v694
        %v1057 = vpop.f32.mrb[0].mxu0
        %v1058 = vadd.f32 0.0, %v1057
        %v1059 = vpop.f32.mrb[0].mxu0
        %v1060 = vpop.f32.mrb[0].mxu0
        %v1061 = vadd.f32 0.0, %v1060
        %v1062 = vpop.f32.mrb[0].mxu0
        %1063 = vmatprep.mubr.bf16.mxu0 0
        %1064 = vmatmul.mubr.bf16.gmra.mrb[0].mxu0 %v702
        %v1065 = vpop.f32.mrb[0].mxu0
        %v1066 = vadd.f32 0.0, %v1065
        %v1067 = vpop.f32.mrb[0].mxu0
        %v1068 = vpop.f32.mrb[0].mxu0
        %v1069 = vadd.f32 0.0, %v1068
        %v1070 = vpop.f32.mrb[0].mxu0
        %1071 = vmatprep.mubr.bf16.mxu0 0
        %1072 = vmatmul.mubr.bf16.gmra.mrb[0].mxu0 %v710
        %v1073 = vpop.f32.mrb[0].mxu0
        %v1074 = vadd.f32 0.0, %v1073
        %v1075 = vpop.f32.mrb[0].mxu0
        %v1076 = vpop.f32.mrb[0].mxu0
        %v1077 = vadd.f32 0.0, %v1076
        %v1078 = vpop.f32.mrb[0].mxu0
        %1079 = vmatprep.mubr.bf16.mxu0 0
        %1080 = vmatmul.mubr.bf16.gmra.mrb[0].mxu0 %v718
        %v1081 = vpop.f32.mrb[0].mxu0
        %v1082 = vadd.f32 0.0, %v1081
        %v1083 = vpop.f32.mrb[0].mxu0
        %v1084 = vpop.f32.mrb[0].mxu0
        %v1085 = vadd.f32 0.0, %v1084
        %v1086 = vpop.f32.mrb[0].mxu0
        %1087 = vmatprep.mubr.bf16.mxu0 0
        %1088 = vmatmul.mubr.bf16.gmra.mrb[0].mxu0 %v726
        %v1089 = vpop.f32.mrb[0].mxu0
        %v1090 = vadd.f32 0.0, %v1089
        %v1091 = vpop.f32.mrb[0].mxu0
        %v1092 = vpop.f32.mrb[0].mxu0
        %v1093 = vadd.f32 0.0, %v1092
        %v1094 = vpop.f32.mrb[0].mxu0
        %1095 = vdwg.mxu0
        %v1144 = vunpack.c.l.b16 %v269
        %v1145 = vunpack.c.l.b16 %v270
        %v1146 = vunpack.c.l.b16 %v271
        %v1147 = vunpack.c.l.b16 %v272
        %v1148 = vunpack.c.l.b16 %v273
        %v1149 = vunpack.c.l.b16 %v274
        %v1150 = vunpack.c.l.b16 %v275
        %v1151 = vunpack.c.l.b16 %v276
        %v1152 = vunpack.c.l.b16 %v277
        %v1153 = vunpack.c.l.b16 %v278
        %v1154 = vunpack.c.l.b16 %v279
        %v1155 = vunpack.c.l.b16 %v280
        %v1156 = vunpack.c.l.b16 %v281
        %v1157 = vunpack.c.l.b16 %v282
        %v1158 = vunpack.c.l.b16 %v283
        %v1159 = vunpack.c.l.b16 %v284
        %v1160 = vpack.c.b16 %v1145, %v1144
        %v1161 = vpack.c.b16 %v1147, %v1146
        %v1162 = vpack.c.b16 %v1149, %v1148
        %v1163 = vpack.c.b16 %v1151, %v1150
        %v1164 = vpack.c.b16 %v1153, %v1152
        %v1165 = vpack.c.b16 %v1155, %v1154
        %v1166 = vpack.c.b16 %v1157, %v1156
        %v1167 = vpack.c.b16 %v1159, %v1158
        %1176 = vmatprep.subr.bf16.mxu0 0
        %1177 = vmatpush1.bf16.msra.mxu0 %v1160
        %1178 = vmatprep.subr.bf16.mxu0 0
        %1179 = vmatpush1.bf16.msra.mxu0 %v1161
        %1180 = vmatprep.subr.bf16.mxu0 0
        %1181 = vmatpush1.bf16.msra.mxu0 %v1162
        %1182 = vmatprep.subr.bf16.mxu0 0
        %1183 = vmatpush1.bf16.msra.mxu0 %v1163
        %1184 = vmatprep.subr.bf16.mxu0 0
        %1185 = vmatpush1.bf16.msra.mxu0 %v1164
        %1186 = vmatprep.subr.bf16.mxu0 0
        %1187 = vmatpush1.bf16.msra.mxu0 %v1165
        %1188 = vmatprep.subr.bf16.mxu0 0
        %1189 = vmatpush1.bf16.msra.mxu0 %v1166
        %1190 = vmatprep.subr.bf16.mxu0 0
        %1191 = vmatpush1.bf16.msra.mxu0 %v1167
        %1192 = vmatprep.subr.bf16.mxu0 0
        %1193 = vmatpush1.bf16.msra.mxu0 0
        %1194 = vmatprep.subr.bf16.mxu0 0
        %1195 = vmatpush1.bf16.msra.mxu0 0
        %1196 = vmatprep.subr.bf16.mxu0 0
        %1197 = vmatpush1.bf16.msra.mxu0 0
        %1198 = vmatprep.subr.bf16.mxu0 0
        %1199 = vmatpush1.bf16.msra.mxu0 0
        %1200 = vmatprep.subr.bf16.mxu0 0
        %1201 = vmatpush1.bf16.msra.mxu0 0
        %1202 = vmatprep.subr.bf16.mxu0 0
        %1203 = vmatpush1.bf16.msra.mxu0 0
        %1204 = vmatprep.subr.bf16.mxu0 0
        %1205 = vmatpush1.bf16.msra.mxu0 0
        %1206 = vmatprep.subr.bf16.mxu0 0
        %1207 = vmatpush1.bf16.msra.mxu0 0
        %1208 = vmatprep.mubr.bf16.mxu0 0
        %1209 = vmatmul.mubr.bf16.gmra.mrb[0].mxu0 %v433
        %v1210 = vpop.f32.mrb[0].mxu0
        %v1211 = vadd.f32 %v842, %v1210
        %v1212 = vpop.f32.mrb[0].mxu0
        %v1213 = vpop.f32.mrb[0].mxu0
        %v1214 = vadd.f32 %v845, %v1213
        %v1215 = vpop.f32.mrb[0].mxu0
        %1216 = vmatprep.mubr.bf16.mxu0 0
        %1217 = vmatmul.mubr.bf16.gmra.mrb[0].mxu0 %v434
        %v1218 = vpop.f32.mrb[0].mxu0
        %v1219 = vadd.f32 %v850, %v1218
        %v1220 = vpop.f32.mrb[0].mxu0
        %v1221 = vpop.f32.mrb[0].mxu0
        %v1222 = vadd.f32 %v853, %v1221
        %v1223 = vpop.f32.mrb[0].mxu0
        %1224 = vmatprep.mubr.bf16.mxu0 0
        %1225 = vmatmul.mubr.bf16.gmra.mrb[0].mxu0 %v435
        %v1226 = vpop.f32.mrb[0].mxu0
        %v1227 = vadd.f32 %v858, %v1226
        %v1228 = vpop.f32.mrb[0].mxu0
        %v1229 = vpop.f32.mrb[0].mxu0
        %v1230 = vadd.f32 %v861, %v1229
        %v1231 = vpop.f32.mrb[0].mxu0
        %1232 = vmatprep.mubr.bf16.mxu0 0
        %1233 = vmatmul.mubr.bf16.gmra.mrb[0].mxu0 %v436
        %v1234 = vpop.f32.mrb[0].mxu0
        %v1235 = vadd.f32 %v866, %v1234
        %v1236 = vpop.f32.mrb[0].mxu0
        %v1237 = vpop.f32.mrb[0].mxu0
        %v1238 = vadd.f32 %v869, %v1237
        %v1239 = vpop.f32.mrb[0].mxu0
        %1240 = vmatprep.mubr.bf16.mxu0 0
        %1241 = vmatmul.mubr.bf16.gmra.mrb[0].mxu0 %v437
        %v1242 = vpop.f32.mrb[0].mxu0
        %v1243 = vadd.f32 %v874, %v1242
        %v1244 = vpop.f32.mrb[0].mxu0
        %v1245 = vpop.f32.mrb[0].mxu0
        %v1246 = vadd.f32 %v877, %v1245
        %v1247 = vpop.f32.mrb[0].mxu0
        %1248 = vmatprep.mubr.bf16.mxu0 0
        %1249 = vmatmul.mubr.bf16.gmra.mrb[0].mxu0 %v438
        %v1250 = vpop.f32.mrb[0].mxu0
        %v1251 = vadd.f32 %v882, %v1250
        %v1252 = vpop.f32.mrb[0].mxu0
        %v1253 = vpop.f32.mrb[0].mxu0
        %v1254 = vadd.f32 %v885, %v1253
        %v1255 = vpop.f32.mrb[0].mxu0
        %1256 = vmatprep.mubr.bf16.mxu0 0
        %1257 = vmatmul.mubr.bf16.gmra.mrb[0].mxu0 %v439
        %v1258 = vpop.f32.mrb[0].mxu0
        %v1259 = vadd.f32 %v890, %v1258
        %v1260 = vpop.f32.mrb[0].mxu0
        %v1261 = vpop.f32.mrb[0].mxu0
        %v1262 = vadd.f32 %v893, %v1261
        %v1263 = vpop.f32.mrb[0].mxu0
        %1264 = vmatprep.mubr.bf16.mxu0 0
        %1265 = vmatmul.mubr.bf16.gmra.mrb[0].mxu0 %v440
        %v1266 = vpop.f32.mrb[0].mxu0
        %v1267 = vadd.f32 %v898, %v1266
        %v1268 = vpop.f32.mrb[0].mxu0
        %v1269 = vpop.f32.mrb[0].mxu0
        %v1270 = vadd.f32 %v901, %v1269
        %v1271 = vpop.f32.mrb[0].mxu0
        %1272 = vmatprep.mubr.bf16.mxu0 0
        %1273 = vmatmul.mubr.bf16.gmra.mrb[0].mxu0 %v441
        %v1274 = vpop.f32.mrb[0].mxu0
        %v1275 = vadd.f32 %v906, %v1274
        %v1276 = vpop.f32.mrb[0].mxu0
        %v1277 = vpop.f32.mrb[0].mxu0
        %v1278 = vadd.f32 %v909, %v1277
        %v1279 = vpop.f32.mrb[0].mxu0
        %1280 = vmatprep.mubr.bf16.mxu0 0
        %1281 = vmatmul.mubr.bf16.gmra.mrb[0].mxu0 %v442
        %v1282 = vpop.f32.mrb[0].mxu0
        %v1283 = vadd.f32 %v914, %v1282
        %v1284 = vpop.f32.mrb[0].mxu0
        %v1285 = vpop.f32.mrb[0].mxu0
        %v1286 = vadd.f32 %v917, %v1285
        %v1287 = vpop.f32.mrb[0].mxu0
        %1288 = vmatprep.mubr.bf16.mxu0 0
        %1289 = vmatmul.mubr.bf16.gmra.mrb[0].mxu0 %v443
        %v1290 = vpop.f32.mrb[0].mxu0
        %v1291 = vadd.f32 %v922, %v1290
        %v1292 = vpop.f32.mrb[0].mxu0
        %v1293 = vpop.f32.mrb[0].mxu0
        %v1294 = vadd.f32 %v925, %v1293
        %v1295 = vpop.f32.mrb[0].mxu0
        %1296 = vmatprep.mubr.bf16.mxu0 0
        %1297 = vmatmul.mubr.bf16.gmra.mrb[0].mxu0 %v444
        %v1298 = vpop.f32.mrb[0].mxu0
        %v1299 = vadd.f32 %v930, %v1298
        %v1300 = vpop.f32.mrb[0].mxu0
        %v1301 = vpop.f32.mrb[0].mxu0
        %v1302 = vadd.f32 %v933, %v1301
        %v1303 = vpop.f32.mrb[0].mxu0
        %1304 = vmatprep.mubr.bf16.mxu0 0
        %1305 = vmatmul.mubr.bf16.gmra.mrb[0].mxu0 %v445
        %v1306 = vpop.f32.mrb[0].mxu0
        %v1307 = vadd.f32 %v938, %v1306
        %v1308 = vpop.f32.mrb[0].mxu0
        %v1309 = vpop.f32.mrb[0].mxu0
        %v1310 = vadd.f32 %v941, %v1309
        %v1311 = vpop.f32.mrb[0].mxu0
        %1312 = vmatprep.mubr.bf16.mxu0 0
        %1313 = vmatmul.mubr.bf16.gmra.mrb[0].mxu0 %v446
        %v1314 = vpop.f32.mrb[0].mxu0
        %v1315 = vadd.f32 %v946, %v1314
        %v1316 = vpop.f32.mrb[0].mxu0
        %v1317 = vpop.f32.mrb[0].mxu0
        %v1318 = vadd.f32 %v949, %v1317
        %v1319 = vpop.f32.mrb[0].mxu0
        %1320 = vmatprep.mubr.bf16.mxu0 0
        %1321 = vmatmul.mubr.bf16.gmra.mrb[0].mxu0 %v447
        %v1322 = vpop.f32.mrb[0].mxu0
        %v1323 = vadd.f32 %v954, %v1322
        %v1324 = vpop.f32.mrb[0].mxu0
        %v1325 = vpop.f32.mrb[0].mxu0
        %v1326 = vadd.f32 %v957, %v1325
        %v1327 = vpop.f32.mrb[0].mxu0
        %1328 = vmatprep.mubr.bf16.mxu0 0
        %1329 = vmatmul.mubr.bf16.gmra.mrb[0].mxu0 %v448
        %v1330 = vpop.f32.mrb[0].mxu0
        %v1331 = vadd.f32 %v962, %v1330
        %v1332 = vpop.f32.mrb[0].mxu0
        %v1333 = vpop.f32.mrb[0].mxu0
        %v1334 = vadd.f32 %v965, %v1333
        %v1335 = vpop.f32.mrb[0].mxu0
        %1336 = vmatprep.mubr.bf16.mxu0 0
        %1337 = vmatmul.mubr.bf16.gmra.mrb[0].mxu0 %v449
        %v1338 = vpop.f32.mrb[0].mxu0
        %v1339 = vadd.f32 %v970, %v1338
        %v1340 = vpop.f32.mrb[0].mxu0
        %v1341 = vpop.f32.mrb[0].mxu0
        %v1342 = vadd.f32 %v973, %v1341
        %v1343 = vpop.f32.mrb[0].mxu0
        %1344 = vmatprep.mubr.bf16.mxu0 0
        %1345 = vmatmul.mubr.bf16.gmra.mrb[0].mxu0 %v450
        %v1346 = vpop.f32.mrb[0].mxu0
        %v1347 = vadd.f32 %v978, %v1346
        %v1348 = vpop.f32.mrb[0].mxu0
        %v1349 = vpop.f32.mrb[0].mxu0
        %v1350 = vadd.f32 %v981, %v1349
        %v1351 = vpop.f32.mrb[0].mxu0
        %1352 = vmatprep.mubr.bf16.mxu0 0
        %1353 = vmatmul.mubr.bf16.gmra.mrb[0].mxu0 %v451
        %v1354 = vpop.f32.mrb[0].mxu0
        %v1355 = vadd.f32 %v986, %v1354
        %v1356 = vpop.f32.mrb[0].mxu0
        %v1357 = vpop.f32.mrb[0].mxu0
        %v1358 = vadd.f32 %v989, %v1357
        %v1359 = vpop.f32.mrb[0].mxu0
        %1360 = vmatprep.mubr.bf16.mxu0 0
        %1361 = vmatmul.mubr.bf16.gmra.mrb[0].mxu0 %v452
        %v1362 = vpop.f32.mrb[0].mxu0
        %v1363 = vadd.f32 %v994, %v1362
        %v1364 = vpop.f32.mrb[0].mxu0
        %v1365 = vpop.f32.mrb[0].mxu0
        %v1366 = vadd.f32 %v997, %v1365
        %v1367 = vpop.f32.mrb[0].mxu0
        %1368 = vmatprep.mubr.bf16.mxu0 0
        %1369 = vmatmul.mubr.bf16.gmra.mrb[0].mxu0 %v453
        %v1370 = vpop.f32.mrb[0].mxu0
        %v1371 = vadd.f32 %v1002, %v1370
        %v1372 = vpop.f32.mrb[0].mxu0
        %v1373 = vpop.f32.mrb[0].mxu0
        %v1374 = vadd.f32 %v1005, %v1373
        %v1375 = vpop.f32.mrb[0].mxu0
        %1376 = vmatprep.mubr.bf16.mxu0 0
        %1377 = vmatmul.mubr.bf16.gmra.mrb[0].mxu0 %v454
        %v1378 = vpop.f32.mrb[0].mxu0
        %v1379 = vadd.f32 %v1010, %v1378
        %v1380 = vpop.f32.mrb[0].mxu0
        %v1381 = vpop.f32.mrb[0].mxu0
        %v1382 = vadd.f32 %v1013, %v1381
        %v1383 = vpop.f32.mrb[0].mxu0
        %1384 = vmatprep.mubr.bf16.mxu0 0
        %1385 = vmatmul.mubr.bf16.gmra.mrb[0].mxu0 %v455
        %v1386 = vpop.f32.mrb[0].mxu0
        %v1387 = vadd.f32 %v1018, %v1386
        %v1388 = vpop.f32.mrb[0].mxu0
        %v1389 = vpop.f32.mrb[0].mxu0
        %v1390 = vadd.f32 %v1021, %v1389
        %v1391 = vpop.f32.mrb[0].mxu0
        %1392 = vmatprep.mubr.bf16.mxu0 0
        %1393 = vmatmul.mubr.bf16.gmra.mrb[0].mxu0 %v456
        %v1394 = vpop.f32.mrb[0].mxu0
        %v1395 = vadd.f32 %v1026, %v1394
        %v1396 = vpop.f32.mrb[0].mxu0
        %v1397 = vpop.f32.mrb[0].mxu0
        %v1398 = vadd.f32 %v1029, %v1397
        %v1399 = vpop.f32.mrb[0].mxu0
        %1400 = vmatprep.mubr.bf16.mxu0 0
        %1401 = vmatmul.mubr.bf16.gmra.mrb[0].mxu0 %v457
        %v1402 = vpop.f32.mrb[0].mxu0
        %v1403 = vadd.f32 %v1034, %v1402
        %v1404 = vpop.f32.mrb[0].mxu0
        %v1405 = vpop.f32.mrb[0].mxu0
        %v1406 = vadd.f32 %v1037, %v1405
        %v1407 = vpop.f32.mrb[0].mxu0
        %1408 = vmatprep.mubr.bf16.mxu0 0
        %1409 = vmatmul.mubr.bf16.gmra.mrb[0].mxu0 %v458
        %v1410 = vpop.f32.mrb[0].mxu0
        %v1411 = vadd.f32 %v1042, %v1410
        %v1412 = vpop.f32.mrb[0].mxu0
        %v1413 = vpop.f32.mrb[0].mxu0
        %v1414 = vadd.f32 %v1045, %v1413
        %v1415 = vpop.f32.mrb[0].mxu0
        %1416 = vmatprep.mubr.bf16.mxu0 0
        %1417 = vmatmul.mubr.bf16.gmra.mrb[0].mxu0 %v459
        %v1418 = vpop.f32.mrb[0].mxu0
        %v1419 = vadd.f32 %v1050, %v1418
        %v1420 = vpop.f32.mrb[0].mxu0
        %v1421 = vpop.f32.mrb[0].mxu0
        %v1422 = vadd.f32 %v1053, %v1421
        %v1423 = vpop.f32.mrb[0].mxu0
        %1424 = vmatprep.mubr.bf16.mxu0 0
        %1425 = vmatmul.mubr.bf16.gmra.mrb[0].mxu0 %v460
        %v1426 = vpop.f32.mrb[0].mxu0
        %v1427 = vadd.f32 %v1058, %v1426
        %v1428 = vpop.f32.mrb[0].mxu0
        %v1429 = vpop.f32.mrb[0].mxu0
        %v1430 = vadd.f32 %v1061, %v1429
        %v1431 = vpop.f32.mrb[0].mxu0
        %1432 = vmatprep.mubr.bf16.mxu0 0
        %1433 = vmatmul.mubr.bf16.gmra.mrb[0].mxu0 %v461
        %v1434 = vpop.f32.mrb[0].mxu0
        %v1435 = vadd.f32 %v1066, %v1434
        %v1436 = vpop.f32.mrb[0].mxu0
        %v1437 = vpop.f32.mrb[0].mxu0
        %v1438 = vadd.f32 %v1069, %v1437
        %v1439 = vpop.f32.mrb[0].mxu0
        %1440 = vmatprep.mubr.bf16.mxu0 0
        %1441 = vmatmul.mubr.bf16.gmra.mrb[0].mxu0 %v462
        %v1442 = vpop.f32.mrb[0].mxu0
        %v1443 = vadd.f32 %v1074, %v1442
        %v1444 = vpop.f32.mrb[0].mxu0
        %v1445 = vpop.f32.mrb[0].mxu0
        %v1446 = vadd.f32 %v1077, %v1445
        %v1447 = vpop.f32.mrb[0].mxu0
        %1448 = vmatprep.mubr.bf16.mxu0 0
        %1449 = vmatmul.mubr.bf16.gmra.mrb[0].mxu0 %v463
        %v1450 = vpop.f32.mrb[0].mxu0
        %v1451 = vadd.f32 %v1082, %v1450
        %v1452 = vpop.f32.mrb[0].mxu0
        %v1453 = vpop.f32.mrb[0].mxu0
        %v1454 = vadd.f32 %v1085, %v1453
        %v1455 = vpop.f32.mrb[0].mxu0
        %1456 = vmatprep.mubr.bf16.mxu0 0
        %1457 = vmatmul.mubr.bf16.gmra.mrb[0].mxu0 %v464
        %v1458 = vpop.f32.mrb[0].mxu0
        %v1459 = vadd.f32 %v1090, %v1458
        %v1460 = vpop.f32.mrb[0].mxu0
        %v1461 = vpop.f32.mrb[0].mxu0
        %v1462 = vadd.f32 %v1093, %v1461
        %v1463 = vpop.f32.mrb[0].mxu0
        %1464 = vdwg.mxu0
        %v1465 = vld [vmem:[%s177] sm:$0xe]
        %s1466 = scalar_lea.vmem [#allocation5], 128
        %v1467 = vld [vmem:[%s1466] sm:$0xf]
        %v1468 = vld [vmem:[%s1466 + $0x4] sm:$0xf]
        %v1469 = vld [vmem:[%s1466 + $0x8] sm:$0xf]
        %v1470 = vld [vmem:[%s1466 + $0xc] sm:$0xf]
        %v1471 = vld [vmem:[%s1466 + $0x10] sm:$0xf]
        %v1472 = vld [vmem:[%s1466 + $0x14] sm:$0xf]
        %v1473 = vld [vmem:[%s1466 + $0x18] sm:$0xf]
        %v1474 = vld [vmem:[%s1466 + $0x1c] sm:$0xf]
        %v1475 = vld [vmem:[%s1466 + $0x20] sm:$0xf]
        %v1476 = vld [vmem:[%s1466 + $0x24] sm:$0xf]
        %v1477 = vld [vmem:[%s1466 + $0x28] sm:$0xf]
        %v1478 = vld [vmem:[%s1466 + $0x2c] sm:$0xf]
        %v1479 = vld [vmem:[%s1466 + $0x30] sm:$0xf]
        %v1480 = vld [vmem:[%s1466 + $0x34] sm:$0xf]
        %v1481 = vld [vmem:[%s1466 + $0x38] sm:$0xf]
        %v1482 = vld [vmem:[%s1466 + $0x3c] sm:$0xf]
        %v1484 = vunpack.c.l.b16 %v1465
        %v1485 = vpack.c.b16 %v369, %v1484
        %vm1486 = vcmask 1046528
        %v1487 = vrot.slane %v1485, 1
        %v1488 = vrot.slane %v434, 1
        %v1489 = vsel %vm1486, %v1487, %v1488
        %v1490 = vrot.slane %v435, 1
        %v1491 = vsel %vm1486, %v1488, %v1490
        %v1492 = vrot.slane %v436, 1
        %v1493 = vsel %vm1486, %v1490, %v1492
        %v1494 = vrot.slane %v437, 1
        %v1495 = vsel %vm1486, %v1492, %v1494
        %v1496 = vrot.slane %v438, 1
        %v1497 = vsel %vm1486, %v1494, %v1496
        %v1498 = vrot.slane %v439, 1
        %v1499 = vsel %vm1486, %v1496, %v1498
        %v1500 = vrot.slane %v440, 1
        %v1501 = vsel %vm1486, %v1498, %v1500
        %v1502 = vrot.slane %v441, 1
        %v1503 = vsel %vm1486, %v1500, %v1502
        %v1504 = vrot.slane %v442, 1
        %v1505 = vsel %vm1486, %v1502, %v1504
        %v1506 = vrot.slane %v443, 1
        %v1507 = vsel %vm1486, %v1504, %v1506
        %v1508 = vrot.slane %v444, 1
        %v1509 = vsel %vm1486, %v1506, %v1508
        %v1510 = vrot.slane %v445, 1
        %v1511 = vsel %vm1486, %v1508, %v1510
        %v1512 = vrot.slane %v446, 1
        %v1513 = vsel %vm1486, %v1510, %v1512
        %v1514 = vrot.slane %v447, 1
        %v1515 = vsel %vm1486, %v1512, %v1514
        %v1516 = vrot.slane %v448, 1
        %v1517 = vsel %vm1486, %v1514, %v1516
        %v1518 = vrot.slane %v449, 1
        %v1519 = vsel %vm1486, %v1516, %v1518
        %v1520 = vrot.slane %v450, 1
        %v1521 = vsel %vm1486, %v1518, %v1520
        %v1522 = vrot.slane %v451, 1
        %v1523 = vsel %vm1486, %v1520, %v1522
        %v1524 = vrot.slane %v452, 1
        %v1525 = vsel %vm1486, %v1522, %v1524
        %v1526 = vrot.slane %v453, 1
        %v1527 = vsel %vm1486, %v1524, %v1526
        %v1528 = vrot.slane %v454, 1
        %v1529 = vsel %vm1486, %v1526, %v1528
        %v1530 = vrot.slane %v455, 1
        %v1531 = vsel %vm1486, %v1528, %v1530
        %v1532 = vrot.slane %v456, 1
        %v1533 = vsel %vm1486, %v1530, %v1532
        %v1534 = vrot.slane %v457, 1
        %v1535 = vsel %vm1486, %v1532, %v1534
        %v1536 = vrot.slane %v458, 1
        %v1537 = vsel %vm1486, %v1534, %v1536
        %v1538 = vrot.slane %v459, 1
        %v1539 = vsel %vm1486, %v1536, %v1538
        %v1540 = vrot.slane %v460, 1
        %v1541 = vsel %vm1486, %v1538, %v1540
        %v1542 = vrot.slane %v461, 1
        %v1543 = vsel %vm1486, %v1540, %v1542
        %v1544 = vrot.slane %v462, 1
        %v1545 = vsel %vm1486, %v1542, %v1544
        %v1546 = vrot.slane %v463, 1
        %v1547 = vsel %vm1486, %v1544, %v1546
        %v1548 = vrot.slane %v464, 1
        %v1549 = vsel %vm1486, %v1546, %v1548
        %v1550 = vrot.slane %v465, 1
        %v1551 = vsel %vm1486, %v1548, %v1550
        %v1600 = vunpack.c.l.b16 %v1467
        %v1601 = vunpack.c.l.b16 %v1468
        %v1602 = vunpack.c.l.b16 %v1469
        %v1603 = vunpack.c.l.b16 %v1470
        %v1604 = vunpack.c.l.b16 %v1471
        %v1605 = vunpack.c.l.b16 %v1472
        %v1606 = vunpack.c.l.b16 %v1473
        %v1607 = vunpack.c.l.b16 %v1474
        %v1608 = vunpack.c.l.b16 %v1475
        %v1609 = vunpack.c.l.b16 %v1476
        %v1610 = vunpack.c.l.b16 %v1477
        %v1611 = vunpack.c.l.b16 %v1478
        %v1612 = vunpack.c.l.b16 %v1479
        %v1613 = vunpack.c.l.b16 %v1480
        %v1614 = vunpack.c.l.b16 %v1481
        %v1615 = vunpack.c.l.b16 %v1482
        %v1616 = vpack.c.b16 %v1601, %v1600
        %v1617 = vpack.c.b16 %v1603, %v1602
        %v1618 = vpack.c.b16 %v1605, %v1604
        %v1619 = vpack.c.b16 %v1607, %v1606
        %v1620 = vpack.c.b16 %v1609, %v1608
        %v1621 = vpack.c.b16 %v1611, %v1610
        %v1622 = vpack.c.b16 %v1613, %v1612
        %v1623 = vpack.c.b16 %v1615, %v1614
        %1632 = vmatprep.subr.bf16.mxu0 0
        %1633 = vmatpush1.bf16.msra.mxu0 %v1616
        %1634 = vmatprep.subr.bf16.mxu0 0
        %1635 = vmatpush1.bf16.msra.mxu0 %v1617
        %1636 = vmatprep.subr.bf16.mxu0 0
        %1637 = vmatpush1.bf16.msra.mxu0 %v1618
        %1638 = vmatprep.subr.bf16.mxu0 0
        %1639 = vmatpush1.bf16.msra.mxu0 %v1619
        %1640 = vmatprep.subr.bf16.mxu0 0
        %1641 = vmatpush1.bf16.msra.mxu0 %v1620
        %1642 = vmatprep.subr.bf16.mxu0 0
        %1643 = vmatpush1.bf16.msra.mxu0 %v1621
        %1644 = vmatprep.subr.bf16.mxu0 0
        %1645 = vmatpush1.bf16.msra.mxu0 %v1622
        %1646 = vmatprep.subr.bf16.mxu0 0
        %1647 = vmatpush1.bf16.msra.mxu0 %v1623
        %1648 = vmatprep.subr.bf16.mxu0 0
        %1649 = vmatpush1.bf16.msra.mxu0 0
        %1650 = vmatprep.subr.bf16.mxu0 0
        %1651 = vmatpush1.bf16.msra.mxu0 0
        %1652 = vmatprep.subr.bf16.mxu0 0
        %1653 = vmatpush1.bf16.msra.mxu0 0
        %1654 = vmatprep.subr.bf16.mxu0 0
        %1655 = vmatpush1.bf16.msra.mxu0 0
        %1656 = vmatprep.subr.bf16.mxu0 0
        %1657 = vmatpush1.bf16.msra.mxu0 0
        %1658 = vmatprep.subr.bf16.mxu0 0
        %1659 = vmatpush1.bf16.msra.mxu0 0
        %1660 = vmatprep.subr.bf16.mxu0 0
        %1661 = vmatpush1.bf16.msra.mxu0 0
        %1662 = vmatprep.subr.bf16.mxu0 0
        %1663 = vmatpush1.bf16.msra.mxu0 0
        %1664 = vmatprep.mubr.bf16.mxu0 0
        %1665 = vmatmul.mubr.bf16.gmra.mrb[0].mxu0 %v1489
        %v1666 = vpop.f32.mrb[0].mxu0
        %v1667 = vadd.f32 0.0, %v1666
        %v1668 = vpop.f32.mrb[0].mxu0
        %v1669 = vpop.f32.mrb[0].mxu0
        %v1670 = vadd.f32 0.0, %v1669
        %v1671 = vpop.f32.mrb[0].mxu0
        %1672 = vmatprep.mubr.bf16.mxu0 0
        %1673 = vmatmul.mubr.bf16.gmra.mrb[0].mxu0 %v1491
        %v1674 = vpop.f32.mrb[0].mxu0
        %v1675 = vadd.f32 0.0, %v1674
        %v1676 = vpop.f32.mrb[0].mxu0
        %v1677 = vpop.f32.mrb[0].mxu0
        %v1678 = vadd.f32 0.0, %v1677
        %v1679 = vpop.f32.mrb[0].mxu0
        %1680 = vmatprep.mubr.bf16.mxu0 0
        %1681 = vmatmul.mubr.bf16.gmra.mrb[0].mxu0 %v1493
        %v1682 = vpop.f32.mrb[0].mxu0
        %v1683 = vadd.f32 0.0, %v1682
        %v1684 = vpop.f32.mrb[0].mxu0
        %v1685 = vpop.f32.mrb[0].mxu0
        %v1686 = vadd.f32 0.0, %v1685
        %v1687 = vpop.f32.mrb[0].mxu0
        %1688 = vmatprep.mubr.bf16.mxu0 0
        %1689 = vmatmul.mubr.bf16.gmra.mrb[0].mxu0 %v1495
        %v1690 = vpop.f32.mrb[0].mxu0
        %v1691 = vadd.f32 0.0, %v1690
        %v1692 = vpop.f32.mrb[0].mxu0
        %v1693 = vpop.f32.mrb[0].mxu0
        %v1694 = vadd.f32 0.0, %v1693
        %v1695 = vpop.f32.mrb[0].mxu0
        %1696 = vmatprep.mubr.bf16.mxu0 0
        %1697 = vmatmul.mubr.bf16.gmra.mrb[0].mxu0 %v1497
        %v1698 = vpop.f32.mrb[0].mxu0
        %v1699 = vadd.f32 0.0, %v1698
        %v1700 = vpop.f32.mrb[0].mxu0
        %v1701 = vpop.f32.mrb[0].mxu0
        %v1702 = vadd.f32 0.0, %v1701
        %v1703 = vpop.f32.mrb[0].mxu0
        %1704 = vmatprep.mubr.bf16.mxu0 0
        %1705 = vmatmul.mubr.bf16.gmra.mrb[0].mxu0 %v1499
        %v1706 = vpop.f32.mrb[0].mxu0
        %v1707 = vadd.f32 0.0, %v1706
        %v1708 = vpop.f32.mrb[0].mxu0
        %v1709 = vpop.f32.mrb[0].mxu0
        %v1710 = vadd.f32 0.0, %v1709
        %v1711 = vpop.f32.mrb[0].mxu0
        %1712 = vmatprep.mubr.bf16.mxu0 0
        %1713 = vmatmul.mubr.bf16.gmra.mrb[0].mxu0 %v1501
        %v1714 = vpop.f32.mrb[0].mxu0
        %v1715 = vadd.f32 0.0, %v1714
        %v1716 = vpop.f32.mrb[0].mxu0
        %v1717 = vpop.f32.mrb[0].mxu0
        %v1718 = vadd.f32 0.0, %v1717
        %v1719 = vpop.f32.mrb[0].mxu0
        %1720 = vmatprep.mubr.bf16.mxu0 0
        %1721 = vmatmul.mubr.bf16.gmra.mrb[0].mxu0 %v1503
        %v1722 = vpop.f32.mrb[0].mxu0
        %v1723 = vadd.f32 0.0, %v1722
        %v1724 = vpop.f32.mrb[0].mxu0
        %v1725 = vpop.f32.mrb[0].mxu0
        %v1726 = vadd.f32 0.0, %v1725
        %v1727 = vpop.f32.mrb[0].mxu0
        %1728 = vmatprep.mubr.bf16.mxu0 0
        %1729 = vmatmul.mubr.bf16.gmra.mrb[0].mxu0 %v1505
        %v1730 = vpop.f32.mrb[0].mxu0
        %v1731 = vadd.f32 0.0, %v1730
        %v1732 = vpop.f32.mrb[0].mxu0
        %v1733 = vpop.f32.mrb[0].mxu0
        %v1734 = vadd.f32 0.0, %v1733
        %v1735 = vpop.f32.mrb[0].mxu0
        %1736 = vmatprep.mubr.bf16.mxu0 0
        %1737 = vmatmul.mubr.bf16.gmra.mrb[0].mxu0 %v1507
        %v1738 = vpop.f32.mrb[0].mxu0
        %v1739 = vadd.f32 0.0, %v1738
        %v1740 = vpop.f32.mrb[0].mxu0
        %v1741 = vpop.f32.mrb[0].mxu0
        %v1742 = vadd.f32 0.0, %v1741
        %v1743 = vpop.f32.mrb[0].mxu0
        %1744 = vmatprep.mubr.bf16.mxu0 0
        %1745 = vmatmul.mubr.bf16.gmra.mrb[0].mxu0 %v1509
        %v1746 = vpop.f32.mrb[0].mxu0
        %v1747 = vadd.f32 0.0, %v1746
        %v1748 = vpop.f32.mrb[0].mxu0
        %v1749 = vpop.f32.mrb[0].mxu0
        %v1750 = vadd.f32 0.0, %v1749
        %v1751 = vpop.f32.mrb[0].mxu0
        %1752 = vmatprep.mubr.bf16.mxu0 0
        %1753 = vmatmul.mubr.bf16.gmra.mrb[0].mxu0 %v1511
        %v1754 = vpop.f32.mrb[0].mxu0
        %v1755 = vadd.f32 0.0, %v1754
        %v1756 = vpop.f32.mrb[0].mxu0
        %v1757 = vpop.f32.mrb[0].mxu0
        %v1758 = vadd.f32 0.0, %v1757
        %v1759 = vpop.f32.mrb[0].mxu0
        %1760 = vmatprep.mubr.bf16.mxu0 0
        %1761 = vmatmul.mubr.bf16.gmra.mrb[0].mxu0 %v1513
        %v1762 = vpop.f32.mrb[0].mxu0
        %v1763 = vadd.f32 0.0, %v1762
        %v1764 = vpop.f32.mrb[0].mxu0
        %v1765 = vpop.f32.mrb[0].mxu0
        %v1766 = vadd.f32 0.0, %v1765
        %v1767 = vpop.f32.mrb[0].mxu0
        %1768 = vmatprep.mubr.bf16.mxu0 0
        %1769 = vmatmul.mubr.bf16.gmra.mrb[0].mxu0 %v1515
        %v1770 = vpop.f32.mrb[0].mxu0
        %v1771 = vadd.f32 0.0, %v1770
        %v1772 = vpop.f32.mrb[0].mxu0
        %v1773 = vpop.f32.mrb[0].mxu0
        %v1774 = vadd.f32 0.0, %v1773
        %v1775 = vpop.f32.mrb[0].mxu0
        %1776 = vmatprep.mubr.bf16.mxu0 0
        %1777 = vmatmul.mubr.bf16.gmra.mrb[0].mxu0 %v1517
        %v1778 = vpop.f32.mrb[0].mxu0
        %v1779 = vadd.f32 0.0, %v1778
        %v1780 = vpop.f32.mrb[0].mxu0
        %v1781 = vpop.f32.mrb[0].mxu0
        %v1782 = vadd.f32 0.0, %v1781
        %v1783 = vpop.f32.mrb[0].mxu0
        %1784 = vmatprep.mubr.bf16.mxu0 0
        %1785 = vmatmul.mubr.bf16.gmra.mrb[0].mxu0 %v1519
        %v1786 = vpop.f32.mrb[0].mxu0
        %v1787 = vadd.f32 0.0, %v1786
        %v1788 = vpop.f32.mrb[0].mxu0
        %v1789 = vpop.f32.mrb[0].mxu0
        %v1790 = vadd.f32 0.0, %v1789
        %v1791 = vpop.f32.mrb[0].mxu0
        %1792 = vmatprep.mubr.bf16.mxu0 0
        %1793 = vmatmul.mubr.bf16.gmra.mrb[0].mxu0 %v1521
        %v1794 = vpop.f32.mrb[0].mxu0
        %v1795 = vadd.f32 0.0, %v1794
        %v1796 = vpop.f32.mrb[0].mxu0
        %v1797 = vpop.f32.mrb[0].mxu0
        %v1798 = vadd.f32 0.0, %v1797
        %v1799 = vpop.f32.mrb[0].mxu0
        %1800 = vmatprep.mubr.bf16.mxu0 0
        %1801 = vmatmul.mubr.bf16.gmra.mrb[0].mxu0 %v1523
        %v1802 = vpop.f32.mrb[0].mxu0
        %v1803 = vadd.f32 0.0, %v1802
        %v1804 = vpop.f32.mrb[0].mxu0
        %v1805 = vpop.f32.mrb[0].mxu0
        %v1806 = vadd.f32 0.0, %v1805
        %v1807 = vpop.f32.mrb[0].mxu0
        %1808 = vmatprep.mubr.bf16.mxu0 0
        %1809 = vmatmul.mubr.bf16.gmra.mrb[0].mxu0 %v1525
        %v1810 = vpop.f32.mrb[0].mxu0
        %v1811 = vadd.f32 0.0, %v1810
        %v1812 = vpop.f32.mrb[0].mxu0
        %v1813 = vpop.f32.mrb[0].mxu0
        %v1814 = vadd.f32 0.0, %v1813
        %v1815 = vpop.f32.mrb[0].mxu0
        %1816 = vmatprep.mubr.bf16.mxu0 0
        %1817 = vmatmul.mubr.bf16.gmra.mrb[0].mxu0 %v1527
        %v1818 = vpop.f32.mrb[0].mxu0
        %v1819 = vadd.f32 0.0, %v1818
        %v1820 = vpop.f32.mrb[0].mxu0
        %v1821 = vpop.f32.mrb[0].mxu0
        %v1822 = vadd.f32 0.0, %v1821
        %v1823 = vpop.f32.mrb[0].mxu0
        %1824 = vmatprep.mubr.bf16.mxu0 0
        %1825 = vmatmul.mubr.bf16.gmra.mrb[0].mxu0 %v1529
        %v1826 = vpop.f32.mrb[0].mxu0
        %v1827 = vadd.f32 0.0, %v1826
        %v1828 = vpop.f32.mrb[0].mxu0
        %v1829 = vpop.f32.mrb[0].mxu0
        %v1830 = vadd.f32 0.0, %v1829
        %v1831 = vpop.f32.mrb[0].mxu0
        %1832 = vmatprep.mubr.bf16.mxu0 0
        %1833 = vmatmul.mubr.bf16.gmra.mrb[0].mxu0 %v1531
        %v1834 = vpop.f32.mrb[0].mxu0
        %v1835 = vadd.f32 0.0, %v1834
        %v1836 = vpop.f32.mrb[0].mxu0
        %v1837 = vpop.f32.mrb[0].mxu0
        %v1838 = vadd.f32 0.0, %v1837
        %v1839 = vpop.f32.mrb[0].mxu0
        %1840 = vmatprep.mubr.bf16.mxu0 0
        %1841 = vmatmul.mubr.bf16.gmra.mrb[0].mxu0 %v1533
        %v1842 = vpop.f32.mrb[0].mxu0
        %v1843 = vadd.f32 0.0, %v1842
        %v1844 = vpop.f32.mrb[0].mxu0
        %v1845 = vpop.f32.mrb[0].mxu0
        %v1846 = vadd.f32 0.0, %v1845
        %v1847 = vpop.f32.mrb[0].mxu0
        %1848 = vmatprep.mubr.bf16.mxu0 0
        %1849 = vmatmul.mubr.bf16.gmra.mrb[0].mxu0 %v1535
        %v1850 = vpop.f32.mrb[0].mxu0
        %v1851 = vadd.f32 0.0, %v1850
        %v1852 = vpop.f32.mrb[0].mxu0
        %v1853 = vpop.f32.mrb[0].mxu0
        %v1854 = vadd.f32 0.0, %v1853
        %v1855 = vpop.f32.mrb[0].mxu0
        %1856 = vmatprep.mubr.bf16.mxu0 0
        %1857 = vmatmul.mubr.bf16.gmra.mrb[0].mxu0 %v1537
        %v1858 = vpop.f32.mrb[0].mxu0
        %v1859 = vadd.f32 0.0, %v1858
        %v1860 = vpop.f32.mrb[0].mxu0
        %v1861 = vpop.f32.mrb[0].mxu0
        %v1862 = vadd.f32 0.0, %v1861
        %v1863 = vpop.f32.mrb[0].mxu0
        %1864 = vmatprep.mubr.bf16.mxu0 0
        %1865 = vmatmul.mubr.bf16.gmra.mrb[0].mxu0 %v1539
        %v1866 = vpop.f32.mrb[0].mxu0
        %v1867 = vadd.f32 0.0, %v1866
        %v1868 = vpop.f32.mrb[0].mxu0
        %v1869 = vpop.f32.mrb[0].mxu0
        %v1870 = vadd.f32 0.0, %v1869
        %v1871 = vpop.f32.mrb[0].mxu0
        %1872 = vmatprep.mubr.bf16.mxu0 0
        %1873 = vmatmul.mubr.bf16.gmra.mrb[0].mxu0 %v1541
        %v1874 = vpop.f32.mrb[0].mxu0
        %v1875 = vadd.f32 0.0, %v1874
        %v1876 = vpop.f32.mrb[0].mxu0
        %v1877 = vpop.f32.mrb[0].mxu0
        %v1878 = vadd.f32 0.0, %v1877
        %v1879 = vpop.f32.mrb[0].mxu0
        %1880 = vmatprep.mubr.bf16.mxu0 0
        %1881 = vmatmul.mubr.bf16.gmra.mrb[0].mxu0 %v1543
        %v1882 = vpop.f32.mrb[0].mxu0
        %v1883 = vadd.f32 0.0, %v1882
        %v1884 = vpop.f32.mrb[0].mxu0
        %v1885 = vpop.f32.mrb[0].mxu0
        %v1886 = vadd.f32 0.0, %v1885
        %v1887 = vpop.f32.mrb[0].mxu0
        %1888 = vmatprep.mubr.bf16.mxu0 0
        %1889 = vmatmul.mubr.bf16.gmra.mrb[0].mxu0 %v1545
        %v1890 = vpop.f32.mrb[0].mxu0
        %v1891 = vadd.f32 0.0, %v1890
        %v1892 = vpop.f32.mrb[0].mxu0
        %v1893 = vpop.f32.mrb[0].mxu0
        %v1894 = vadd.f32 0.0, %v1893
        %v1895 = vpop.f32.mrb[0].mxu0
        %1896 = vmatprep.mubr.bf16.mxu0 0
        %1897 = vmatmul.mubr.bf16.gmra.mrb[0].mxu0 %v1547
        %v1898 = vpop.f32.mrb[0].mxu0
        %v1899 = vadd.f32 0.0, %v1898
        %v1900 = vpop.f32.mrb[0].mxu0
        %v1901 = vpop.f32.mrb[0].mxu0
        %v1902 = vadd.f32 0.0, %v1901
        %v1903 = vpop.f32.mrb[0].mxu0
        %1904 = vmatprep.mubr.bf16.mxu0 0
        %1905 = vmatmul.mubr.bf16.gmra.mrb[0].mxu0 %v1549
        %v1906 = vpop.f32.mrb[0].mxu0
        %v1907 = vadd.f32 0.0, %v1906
        %v1908 = vpop.f32.mrb[0].mxu0
        %v1909 = vpop.f32.mrb[0].mxu0
        %v1910 = vadd.f32 0.0, %v1909
        %v1911 = vpop.f32.mrb[0].mxu0
        %1912 = vmatprep.mubr.bf16.mxu0 0
        %1913 = vmatmul.mubr.bf16.gmra.mrb[0].mxu0 %v1551
        %v1914 = vpop.f32.mrb[0].mxu0
        %v1915 = vadd.f32 0.0, %v1914
        %v1916 = vpop.f32.mrb[0].mxu0
        %v1917 = vpop.f32.mrb[0].mxu0
        %v1918 = vadd.f32 0.0, %v1917
        %v1919 = vpop.f32.mrb[0].mxu0
        %1920 = vdwg.mxu0
        %v1921 = vadd.f32 %v1211, %v1667
        %v1922 = vadd.f32 %v1214, %v1670
        %v1923 = vadd.f32 %v1219, %v1675
        %v1924 = vadd.f32 %v1222, %v1678
        %v1925 = vadd.f32 %v1227, %v1683
        %v1926 = vadd.f32 %v1230, %v1686
        %v1927 = vadd.f32 %v1235, %v1691
        %v1928 = vadd.f32 %v1238, %v1694
        %v1929 = vadd.f32 %v1243, %v1699
        %v1930 = vadd.f32 %v1246, %v1702
        %v1931 = vadd.f32 %v1251, %v1707
        %v1932 = vadd.f32 %v1254, %v1710
        %v1933 = vadd.f32 %v1259, %v1715
        %v1934 = vadd.f32 %v1262, %v1718
        %v1935 = vadd.f32 %v1267, %v1723
        %v1936 = vadd.f32 %v1270, %v1726
        %v1937 = vadd.f32 %v1275, %v1731
        %v1938 = vadd.f32 %v1278, %v1734
        %v1939 = vadd.f32 %v1283, %v1739
        %v1940 = vadd.f32 %v1286, %v1742
        %v1941 = vadd.f32 %v1291, %v1747
        %v1942 = vadd.f32 %v1294, %v1750
        %v1943 = vadd.f32 %v1299, %v1755
        %v1944 = vadd.f32 %v1302, %v1758
        %v1945 = vadd.f32 %v1307, %v1763
        %v1946 = vadd.f32 %v1310, %v1766
        %v1947 = vadd.f32 %v1315, %v1771
        %v1948 = vadd.f32 %v1318, %v1774
        %v1949 = vadd.f32 %v1323, %v1779
        %v1950 = vadd.f32 %v1326, %v1782
        %v1951 = vadd.f32 %v1331, %v1787
        %v1952 = vadd.f32 %v1334, %v1790
        %v1953 = vadd.f32 %v1339, %v1795
        %v1954 = vadd.f32 %v1342, %v1798
        %v1955 = vadd.f32 %v1347, %v1803
        %v1956 = vadd.f32 %v1350, %v1806
        %v1957 = vadd.f32 %v1355, %v1811
        %v1958 = vadd.f32 %v1358, %v1814
        %v1959 = vadd.f32 %v1363, %v1819
        %v1960 = vadd.f32 %v1366, %v1822
        %v1961 = vadd.f32 %v1371, %v1827
        %v1962 = vadd.f32 %v1374, %v1830
        %v1963 = vadd.f32 %v1379, %v1835
        %v1964 = vadd.f32 %v1382, %v1838
        %v1965 = vadd.f32 %v1387, %v1843
        %v1966 = vadd.f32 %v1390, %v1846
        %v1967 = vadd.f32 %v1395, %v1851
        %v1968 = vadd.f32 %v1398, %v1854
        %v1969 = vadd.f32 %v1403, %v1859
        %v1970 = vadd.f32 %v1406, %v1862
        %v1971 = vadd.f32 %v1411, %v1867
        %v1972 = vadd.f32 %v1414, %v1870
        %v1973 = vadd.f32 %v1419, %v1875
        %v1974 = vadd.f32 %v1422, %v1878
        %v1975 = vadd.f32 %v1427, %v1883
        %v1976 = vadd.f32 %v1430, %v1886
        %v1977 = vadd.f32 %v1435, %v1891
        %v1978 = vadd.f32 %v1438, %v1894
        %v1979 = vadd.f32 %v1443, %v1899
        %v1980 = vadd.f32 %v1446, %v1902
        %v1981 = vadd.f32 %v1451, %v1907
        %v1982 = vadd.f32 %v1454, %v1910
        %v1983 = vadd.f32 %v1459, %v1915
        %v1984 = vadd.f32 %v1462, %v1918
        %v1985 = vld [vmem:[%s177 + $0x10] sm:$0xf]
        %v1986 = vld [vmem:[%s177 + $0x14] sm:$0xf]
        %v1987 = vld [vmem:[%s177 + $0x18] sm:$0xf]
        %v1988 = vld [vmem:[%s177 + $0x1c] sm:$0xf]
        %v1989 = vld [vmem:[%s177 + $0x20] sm:$0xf]
        %v1990 = vld [vmem:[%s177 + $0x24] sm:$0xf]
        %v1991 = vld [vmem:[%s177 + $0x28] sm:$0xf]
        %v1992 = vld [vmem:[%s177 + $0x2c] sm:$0xf]
        %v1993 = vld [vmem:[%s177 + $0x30] sm:$0xf]
        %v1994 = vld [vmem:[%s177 + $0x34] sm:$0xf]
        %v1995 = vld [vmem:[%s177 + $0x38] sm:$0xf]
        %v1996 = vld [vmem:[%s177 + $0x3c] sm:$0xf]
        %v1997 = vld [vmem:[%s177 + $0x40] sm:$0xf]
        %v1998 = vld [vmem:[%s177 + $0x44] sm:$0xf]
        %v1999 = vld [vmem:[%s177 + $0x48] sm:$0xf]
        %v2000 = vld [vmem:[%s177 + $0x4c] sm:$0xf]
        %v2001 = vld [vmem:[%s177 + $0x50] sm:$0xf]
        %v2002 = vld [vmem:[%s177 + $0x54] sm:$0xf]
        %v2003 = vld [vmem:[%s177 + $0x58] sm:$0xf]
        %v2004 = vld [vmem:[%s177 + $0x5c] sm:$0xf]
        %v2005 = vld [vmem:[%s177 + $0x60] sm:$0xf]
        %v2006 = vld [vmem:[%s177 + $0x64] sm:$0xf]
        %v2007 = vld [vmem:[%s177 + $0x68] sm:$0xf]
        %v2008 = vld [vmem:[%s177 + $0x6c] sm:$0xf]
        %v2009 = vld [vmem:[%s177 + $0x70] sm:$0xf]
        %v2010 = vld [vmem:[%s177 + $0x74] sm:$0xf]
        %v2011 = vld [vmem:[%s177 + $0x78] sm:$0xf]
        %v2012 = vld [vmem:[%s177 + $0x7c] sm:$0xf]
        %v2013 = vld [vmem:[%s177 + $0x80] sm:$0xf]
        %v2014 = vld [vmem:[%s177 + $0x84] sm:$0xf]
        %v2015 = vld [vmem:[%s177 + $0x88] sm:$0xf]
        %v2016 = vld [vmem:[%s177 + $0x8c] sm:$0xf]
        %v2017 = vld [vmem:[%s177 + $0x90] sm:$0xf]
        %v2018 = vld [vmem:[%s177 + $0x94] sm:$0xf]
        %v2019 = vld [vmem:[%s177 + $0x98] sm:$0xf]
        %v2020 = vld [vmem:[%s177 + $0x9c] sm:$0xf]
        %v2021 = vld [vmem:[%s177 + $0xa0] sm:$0xf]
        %v2022 = vld [vmem:[%s177 + $0xa4] sm:$0xf]
        %v2023 = vld [vmem:[%s177 + $0xa8] sm:$0xf]
        %v2024 = vld [vmem:[%s177 + $0xac] sm:$0xf]
        %v2025 = vld [vmem:[%s177 + $0xb0] sm:$0xf]
        %v2026 = vld [vmem:[%s177 + $0xb4] sm:$0xf]
        %v2027 = vld [vmem:[%s177 + $0xb8] sm:$0xf]
        %v2028 = vld [vmem:[%s177 + $0xbc] sm:$0xf]
        %v2029 = vld [vmem:[%s177 + $0xc0] sm:$0xf]
        %v2030 = vld [vmem:[%s177 + $0xc4] sm:$0xf]
        %v2031 = vld [vmem:[%s177 + $0xc8] sm:$0xf]
        %v2032 = vld [vmem:[%s177 + $0xcc] sm:$0xf]
        %v2033 = vld [vmem:[%s177 + $0xd0] sm:$0xf]
        %v2034 = vld [vmem:[%s177 + $0xd4] sm:$0xf]
        %v2035 = vld [vmem:[%s177 + $0xd8] sm:$0xf]
        %v2036 = vld [vmem:[%s177 + $0xdc] sm:$0xf]
        %v2037 = vld [vmem:[%s177 + $0xe0] sm:$0xf]
        %v2038 = vld [vmem:[%s177 + $0xe4] sm:$0xf]
        %v2039 = vld [vmem:[%s177 + $0xe8] sm:$0xf]
        %v2040 = vld [vmem:[%s177 + $0xec] sm:$0xf]
        %v2041 = vld [vmem:[%s177 + $0xf0] sm:$0xf]
        %v2042 = vld [vmem:[%s177 + $0xf4] sm:$0xf]
        %v2043 = vld [vmem:[%s177 + $0xf8] sm:$0xf]
        %v2044 = vld [vmem:[%s177 + $0xfc] sm:$0xf]
        %v2045 = vld [vmem:[%s177 + $0x100] sm:$0xf]
        %v2046 = vld [vmem:[%s177 + $0x104] sm:$0xf]
        %v2047 = vld [vmem:[%s177 + $0x108] sm:$0xf]
        %v2048 = vld [vmem:[%s177 + $0x10c] sm:$0xf]
        %s2049 = scalar_lea.vmem [#allocation5], 192
        %v2050 = vld [vmem:[%s2049] sm:$0xf]
        %v2051 = vld [vmem:[%s2049 + $0x4] sm:$0xf]
        %v2052 = vld [vmem:[%s2049 + $0x8] sm:$0xf]
        %v2053 = vld [vmem:[%s2049 + $0xc] sm:$0xf]
        %v2054 = vld [vmem:[%s2049 + $0x10] sm:$0xf]
        %v2055 = vld [vmem:[%s2049 + $0x14] sm:$0xf]
        %v2056 = vld [vmem:[%s2049 + $0x18] sm:$0xf]
        %v2057 = vld [vmem:[%s2049 + $0x1c] sm:$0xf]
        %v2058 = vld [vmem:[%s2049 + $0x20] sm:$0xf]
        %v2059 = vld [vmem:[%s2049 + $0x24] sm:$0xf]
        %v2060 = vld [vmem:[%s2049 + $0x28] sm:$0xf]
        %v2061 = vld [vmem:[%s2049 + $0x2c] sm:$0xf]
        %v2062 = vld [vmem:[%s2049 + $0x30] sm:$0xf]
        %v2063 = vld [vmem:[%s2049 + $0x34] sm:$0xf]
        %v2064 = vld [vmem:[%s2049 + $0x38] sm:$0xf]
        %v2065 = vld [vmem:[%s2049 + $0x3c] sm:$0xf]
        %v2130 = vunpack.c.l.b16 %v1985
        %v2131 = vunpack.c.l.b16 %v1986
        %v2132 = vunpack.c.l.b16 %v1987
        %v2133 = vunpack.c.l.b16 %v1988
        %v2134 = vunpack.c.l.b16 %v1989
        %v2135 = vunpack.c.l.b16 %v1990
        %v2136 = vunpack.c.l.b16 %v1991
        %v2137 = vunpack.c.l.b16 %v1992
        %v2138 = vunpack.c.l.b16 %v1993
        %v2139 = vunpack.c.l.b16 %v1994
        %v2140 = vunpack.c.l.b16 %v1995
        %v2141 = vunpack.c.l.b16 %v1996
        %v2142 = vunpack.c.l.b16 %v1997
        %v2143 = vunpack.c.l.b16 %v1998
        %v2144 = vunpack.c.l.b16 %v1999
        %v2145 = vunpack.c.l.b16 %v2000
        %v2146 = vunpack.c.l.b16 %v2001
        %v2147 = vunpack.c.l.b16 %v2002
        %v2148 = vunpack.c.l.b16 %v2003
        %v2149 = vunpack.c.l.b16 %v2004
        %v2150 = vunpack.c.l.b16 %v2005
        %v2151 = vunpack.c.l.b16 %v2006
        %v2152 = vunpack.c.l.b16 %v2007
        %v2153 = vunpack.c.l.b16 %v2008
        %v2154 = vunpack.c.l.b16 %v2009
        %v2155 = vunpack.c.l.b16 %v2010
        %v2156 = vunpack.c.l.b16 %v2011
        %v2157 = vunpack.c.l.b16 %v2012
        %v2158 = vunpack.c.l.b16 %v2013
        %v2159 = vunpack.c.l.b16 %v2014
        %v2160 = vunpack.c.l.b16 %v2015
        %v2161 = vunpack.c.l.b16 %v2016
        %v2162 = vunpack.c.l.b16 %v2017
        %v2163 = vunpack.c.l.b16 %v2018
        %v2164 = vunpack.c.l.b16 %v2019
        %v2165 = vunpack.c.l.b16 %v2020
        %v2166 = vunpack.c.l.b16 %v2021
        %v2167 = vunpack.c.l.b16 %v2022
        %v2168 = vunpack.c.l.b16 %v2023
        %v2169 = vunpack.c.l.b16 %v2024
        %v2170 = vunpack.c.l.b16 %v2025
        %v2171 = vunpack.c.l.b16 %v2026
        %v2172 = vunpack.c.l.b16 %v2027
        %v2173 = vunpack.c.l.b16 %v2028
        %v2174 = vunpack.c.l.b16 %v2029
        %v2175 = vunpack.c.l.b16 %v2030
        %v2176 = vunpack.c.l.b16 %v2031
        %v2177 = vunpack.c.l.b16 %v2032
        %v2178 = vunpack.c.l.b16 %v2033
        %v2179 = vunpack.c.l.b16 %v2034
        %v2180 = vunpack.c.l.b16 %v2035
        %v2181 = vunpack.c.l.b16 %v2036
        %v2182 = vunpack.c.l.b16 %v2037
        %v2183 = vunpack.c.l.b16 %v2038
        %v2184 = vunpack.c.l.b16 %v2039
        %v2185 = vunpack.c.l.b16 %v2040
        %v2186 = vunpack.c.l.b16 %v2041
        %v2187 = vunpack.c.l.b16 %v2042
        %v2188 = vunpack.c.l.b16 %v2043
        %v2189 = vunpack.c.l.b16 %v2044
        %v2190 = vunpack.c.l.b16 %v2045
        %v2191 = vunpack.c.l.b16 %v2046
        %v2192 = vunpack.c.l.b16 %v2047
        %v2193 = vunpack.c.l.b16 %v2048
        %v2194 = vpack.c.b16 %v2131, %v2130
        %v2195 = vpack.c.b16 %v2133, %v2132
        %v2196 = vpack.c.b16 %v2135, %v2134
        %v2197 = vpack.c.b16 %v2137, %v2136
        %v2198 = vpack.c.b16 %v2139, %v2138
        %v2199 = vpack.c.b16 %v2141, %v2140
        %v2200 = vpack.c.b16 %v2143, %v2142
        %v2201 = vpack.c.b16 %v2145, %v2144
        %v2202 = vpack.c.b16 %v2147, %v2146
        %v2203 = vpack.c.b16 %v2149, %v2148
        %v2204 = vpack.c.b16 %v2151, %v2150
        %v2205 = vpack.c.b16 %v2153, %v2152
        %v2206 = vpack.c.b16 %v2155, %v2154
        %v2207 = vpack.c.b16 %v2157, %v2156
        %v2208 = vpack.c.b16 %v2159, %v2158
        %v2209 = vpack.c.b16 %v2161, %v2160
        %v2210 = vpack.c.b16 %v2163, %v2162
        %v2211 = vpack.c.b16 %v2165, %v2164
        %v2212 = vpack.c.b16 %v2167, %v2166
        %v2213 = vpack.c.b16 %v2169, %v2168
        %v2214 = vpack.c.b16 %v2171, %v2170
        %v2215 = vpack.c.b16 %v2173, %v2172
        %v2216 = vpack.c.b16 %v2175, %v2174
        %v2217 = vpack.c.b16 %v2177, %v2176
        %v2218 = vpack.c.b16 %v2179, %v2178
        %v2219 = vpack.c.b16 %v2181, %v2180
        %v2220 = vpack.c.b16 %v2183, %v2182
        %v2221 = vpack.c.b16 %v2185, %v2184
        %v2222 = vpack.c.b16 %v2187, %v2186
        %v2223 = vpack.c.b16 %v2189, %v2188
        %v2224 = vpack.c.b16 %v2191, %v2190
        %v2225 = vpack.c.b16 %v2193, %v2192
        %v2274 = vunpack.c.l.b16 %v2050
        %v2275 = vunpack.c.l.b16 %v2051
        %v2276 = vunpack.c.l.b16 %v2052
        %v2277 = vunpack.c.l.b16 %v2053
        %v2278 = vunpack.c.l.b16 %v2054
        %v2279 = vunpack.c.l.b16 %v2055
        %v2280 = vunpack.c.l.b16 %v2056
        %v2281 = vunpack.c.l.b16 %v2057
        %v2282 = vunpack.c.l.b16 %v2058
        %v2283 = vunpack.c.l.b16 %v2059
        %v2284 = vunpack.c.l.b16 %v2060
        %v2285 = vunpack.c.l.b16 %v2061
        %v2286 = vunpack.c.l.b16 %v2062
        %v2287 = vunpack.c.l.b16 %v2063
        %v2288 = vunpack.c.l.b16 %v2064
        %v2289 = vunpack.c.l.b16 %v2065
        %v2290 = vpack.c.b16 %v2275, %v2274
        %v2291 = vpack.c.b16 %v2277, %v2276
        %v2292 = vpack.c.b16 %v2279, %v2278
        %v2293 = vpack.c.b16 %v2281, %v2280
        %v2294 = vpack.c.b16 %v2283, %v2282
        %v2295 = vpack.c.b16 %v2285, %v2284
        %v2296 = vpack.c.b16 %v2287, %v2286
        %v2297 = vpack.c.b16 %v2289, %v2288
        %2306 = vmatprep.subr.bf16.mxu0 0
        %2307 = vmatpush1.bf16.msra.mxu0 %v2290
        %2308 = vmatprep.subr.bf16.mxu0 0
        %2309 = vmatpush1.bf16.msra.mxu0 %v2291
        %2310 = vmatprep.subr.bf16.mxu0 0
        %2311 = vmatpush1.bf16.msra.mxu0 %v2292
        %2312 = vmatprep.subr.bf16.mxu0 0
        %2313 = vmatpush1.bf16.msra.mxu0 %v2293
        %2314 = vmatprep.subr.bf16.mxu0 0
        %2315 = vmatpush1.bf16.msra.mxu0 %v2294
        %2316 = vmatprep.subr.bf16.mxu0 0
        %2317 = vmatpush1.bf16.msra.mxu0 %v2295
        %2318 = vmatprep.subr.bf16.mxu0 0
        %2319 = vmatpush1.bf16.msra.mxu0 %v2296
        %2320 = vmatprep.subr.bf16.mxu0 0
        %2321 = vmatpush1.bf16.msra.mxu0 %v2297
        %2322 = vmatprep.subr.bf16.mxu0 0
        %2323 = vmatpush1.bf16.msra.mxu0 0
        %2324 = vmatprep.subr.bf16.mxu0 0
        %2325 = vmatpush1.bf16.msra.mxu0 0
        %2326 = vmatprep.subr.bf16.mxu0 0
        %2327 = vmatpush1.bf16.msra.mxu0 0
        %2328 = vmatprep.subr.bf16.mxu0 0
        %2329 = vmatpush1.bf16.msra.mxu0 0
        %2330 = vmatprep.subr.bf16.mxu0 0
        %2331 = vmatpush1.bf16.msra.mxu0 0
        %2332 = vmatprep.subr.bf16.mxu0 0
        %2333 = vmatpush1.bf16.msra.mxu0 0
        %2334 = vmatprep.subr.bf16.mxu0 0
        %2335 = vmatpush1.bf16.msra.mxu0 0
        %2336 = vmatprep.subr.bf16.mxu0 0
        %2337 = vmatpush1.bf16.msra.mxu0 0
        %2338 = vmatprep.mubr.bf16.mxu0 0
        %2339 = vmatmul.mubr.bf16.gmra.mrb[0].mxu0 %v2194
        %v2340 = vpop.f32.mrb[0].mxu0
        %v2341 = vadd.f32 0.0, %v2340
        %v2342 = vpop.f32.mrb[0].mxu0
        %v2343 = vpop.f32.mrb[0].mxu0
        %v2344 = vadd.f32 0.0, %v2343
        %v2345 = vpop.f32.mrb[0].mxu0
        %2346 = vmatprep.mubr.bf16.mxu0 0
        %2347 = vmatmul.mubr.bf16.gmra.mrb[0].mxu0 %v2195
        %v2348 = vpop.f32.mrb[0].mxu0
        %v2349 = vadd.f32 0.0, %v2348
        %v2350 = vpop.f32.mrb[0].mxu0
        %v2351 = vpop.f32.mrb[0].mxu0
        %v2352 = vadd.f32 0.0, %v2351
        %v2353 = vpop.f32.mrb[0].mxu0
        %2354 = vmatprep.mubr.bf16.mxu0 0
        %2355 = vmatmul.mubr.bf16.gmra.mrb[0].mxu0 %v2196
        %v2356 = vpop.f32.mrb[0].mxu0
        %v2357 = vadd.f32 0.0, %v2356
        %v2358 = vpop.f32.mrb[0].mxu0
        %v2359 = vpop.f32.mrb[0].mxu0
        %v2360 = vadd.f32 0.0, %v2359
        %v2361 = vpop.f32.mrb[0].mxu0
        %2362 = vmatprep.mubr.bf16.mxu0 0
        %2363 = vmatmul.mubr.bf16.gmra.mrb[0].mxu0 %v2197
        %v2364 = vpop.f32.mrb[0].mxu0
        %v2365 = vadd.f32 0.0, %v2364
        %v2366 = vpop.f32.mrb[0].mxu0
        %v2367 = vpop.f32.mrb[0].mxu0
        %v2368 = vadd.f32 0.0, %v2367
        %v2369 = vpop.f32.mrb[0].mxu0
        %2370 = vmatprep.mubr.bf16.mxu0 0
        %2371 = vmatmul.mubr.bf16.gmra.mrb[0].mxu0 %v2198
        %v2372 = vpop.f32.mrb[0].mxu0
        %v2373 = vadd.f32 0.0, %v2372
        %v2374 = vpop.f32.mrb[0].mxu0
        %v2375 = vpop.f32.mrb[0].mxu0
        %v2376 = vadd.f32 0.0, %v2375
        %v2377 = vpop.f32.mrb[0].mxu0
        %2378 = vmatprep.mubr.bf16.mxu0 0
        %2379 = vmatmul.mubr.bf16.gmra.mrb[0].mxu0 %v2199
        %v2380 = vpop.f32.mrb[0].mxu0
        %v2381 = vadd.f32 0.0, %v2380
        %v2382 = vpop.f32.mrb[0].mxu0
        %v2383 = vpop.f32.mrb[0].mxu0
        %v2384 = vadd.f32 0.0, %v2383
        %v2385 = vpop.f32.mrb[0].mxu0
        %2386 = vmatprep.mubr.bf16.mxu0 0
        %2387 = vmatmul.mubr.bf16.gmra.mrb[0].mxu0 %v2200
        %v2388 = vpop.f32.mrb[0].mxu0
        %v2389 = vadd.f32 0.0, %v2388
        %v2390 = vpop.f32.mrb[0].mxu0
        %v2391 = vpop.f32.mrb[0].mxu0
        %v2392 = vadd.f32 0.0, %v2391
        %v2393 = vpop.f32.mrb[0].mxu0
        %2394 = vmatprep.mubr.bf16.mxu0 0
        %2395 = vmatmul.mubr.bf16.gmra.mrb[0].mxu0 %v2201
        %v2396 = vpop.f32.mrb[0].mxu0
        %v2397 = vadd.f32 0.0, %v2396
        %v2398 = vpop.f32.mrb[0].mxu0
        %v2399 = vpop.f32.mrb[0].mxu0
        %v2400 = vadd.f32 0.0, %v2399
        %v2401 = vpop.f32.mrb[0].mxu0
        %2402 = vmatprep.mubr.bf16.mxu0 0
        %2403 = vmatmul.mubr.bf16.gmra.mrb[0].mxu0 %v2202
        %v2404 = vpop.f32.mrb[0].mxu0
        %v2405 = vadd.f32 0.0, %v2404
        %v2406 = vpop.f32.mrb[0].mxu0
        %v2407 = vpop.f32.mrb[0].mxu0
        %v2408 = vadd.f32 0.0, %v2407
        %v2409 = vpop.f32.mrb[0].mxu0
        %2410 = vmatprep.mubr.bf16.mxu0 0
        %2411 = vmatmul.mubr.bf16.gmra.mrb[0].mxu0 %v2203
        %v2412 = vpop.f32.mrb[0].mxu0
        %v2413 = vadd.f32 0.0, %v2412
        %v2414 = vpop.f32.mrb[0].mxu0
        %v2415 = vpop.f32.mrb[0].mxu0
        %v2416 = vadd.f32 0.0, %v2415
        %v2417 = vpop.f32.mrb[0].mxu0
        %2418 = vmatprep.mubr.bf16.mxu0 0
        %2419 = vmatmul.mubr.bf16.gmra.mrb[0].mxu0 %v2204
        %v2420 = vpop.f32.mrb[0].mxu0
        %v2421 = vadd.f32 0.0, %v2420
        %v2422 = vpop.f32.mrb[0].mxu0
        %v2423 = vpop.f32.mrb[0].mxu0
        %v2424 = vadd.f32 0.0, %v2423
        %v2425 = vpop.f32.mrb[0].mxu0
        %2426 = vmatprep.mubr.bf16.mxu0 0
        %2427 = vmatmul.mubr.bf16.gmra.mrb[0].mxu0 %v2205
        %v2428 = vpop.f32.mrb[0].mxu0
        %v2429 = vadd.f32 0.0, %v2428
        %v2430 = vpop.f32.mrb[0].mxu0
        %v2431 = vpop.f32.mrb[0].mxu0
        %v2432 = vadd.f32 0.0, %v2431
        %v2433 = vpop.f32.mrb[0].mxu0
        %2434 = vmatprep.mubr.bf16.mxu0 0
        %2435 = vmatmul.mubr.bf16.gmra.mrb[0].mxu0 %v2206
        %v2436 = vpop.f32.mrb[0].mxu0
        %v2437 = vadd.f32 0.0, %v2436
        %v2438 = vpop.f32.mrb[0].mxu0
        %v2439 = vpop.f32.mrb[0].mxu0
        %v2440 = vadd.f32 0.0, %v2439
        %v2441 = vpop.f32.mrb[0].mxu0
        %2442 = vmatprep.mubr.bf16.mxu0 0
        %2443 = vmatmul.mubr.bf16.gmra.mrb[0].mxu0 %v2207
        %v2444 = vpop.f32.mrb[0].mxu0
        %v2445 = vadd.f32 0.0, %v2444
        %v2446 = vpop.f32.mrb[0].mxu0
        %v2447 = vpop.f32.mrb[0].mxu0
        %v2448 = vadd.f32 0.0, %v2447
        %v2449 = vpop.f32.mrb[0].mxu0
        %2450 = vmatprep.mubr.bf16.mxu0 0
        %2451 = vmatmul.mubr.bf16.gmra.mrb[0].mxu0 %v2208
        %v2452 = vpop.f32.mrb[0].mxu0
        %v2453 = vadd.f32 0.0, %v2452
        %v2454 = vpop.f32.mrb[0].mxu0
        %v2455 = vpop.f32.mrb[0].mxu0
        %v2456 = vadd.f32 0.0, %v2455
        %v2457 = vpop.f32.mrb[0].mxu0
        %2458 = vmatprep.mubr.bf16.mxu0 0
        %2459 = vmatmul.mubr.bf16.gmra.mrb[0].mxu0 %v2209
        %v2460 = vpop.f32.mrb[0].mxu0
        %v2461 = vadd.f32 0.0, %v2460
        %v2462 = vpop.f32.mrb[0].mxu0
        %v2463 = vpop.f32.mrb[0].mxu0
        %v2464 = vadd.f32 0.0, %v2463
        %v2465 = vpop.f32.mrb[0].mxu0
        %2466 = vmatprep.mubr.bf16.mxu0 0
        %2467 = vmatmul.mubr.bf16.gmra.mrb[0].mxu0 %v2210
        %v2468 = vpop.f32.mrb[0].mxu0
        %v2469 = vadd.f32 0.0, %v2468
        %v2470 = vpop.f32.mrb[0].mxu0
        %v2471 = vpop.f32.mrb[0].mxu0
        %v2472 = vadd.f32 0.0, %v2471
        %v2473 = vpop.f32.mrb[0].mxu0
        %2474 = vmatprep.mubr.bf16.mxu0 0
        %2475 = vmatmul.mubr.bf16.gmra.mrb[0].mxu0 %v2211
        %v2476 = vpop.f32.mrb[0].mxu0
        %v2477 = vadd.f32 0.0, %v2476
        %v2478 = vpop.f32.mrb[0].mxu0
        %v2479 = vpop.f32.mrb[0].mxu0
        %v2480 = vadd.f32 0.0, %v2479
        %v2481 = vpop.f32.mrb[0].mxu0
        %2482 = vmatprep.mubr.bf16.mxu0 0
        %2483 = vmatmul.mubr.bf16.gmra.mrb[0].mxu0 %v2212
        %v2484 = vpop.f32.mrb[0].mxu0
        %v2485 = vadd.f32 0.0, %v2484
        %v2486 = vpop.f32.mrb[0].mxu0
        %v2487 = vpop.f32.mrb[0].mxu0
        %v2488 = vadd.f32 0.0, %v2487
        %v2489 = vpop.f32.mrb[0].mxu0
        %2490 = vmatprep.mubr.bf16.mxu0 0
        %2491 = vmatmul.mubr.bf16.gmra.mrb[0].mxu0 %v2213
        %v2492 = vpop.f32.mrb[0].mxu0
        %v2493 = vadd.f32 0.0, %v2492
        %v2494 = vpop.f32.mrb[0].mxu0
        %v2495 = vpop.f32.mrb[0].mxu0
        %v2496 = vadd.f32 0.0, %v2495
        %v2497 = vpop.f32.mrb[0].mxu0
        %2498 = vmatprep.mubr.bf16.mxu0 0
        %2499 = vmatmul.mubr.bf16.gmra.mrb[0].mxu0 %v2214
        %v2500 = vpop.f32.mrb[0].mxu0
        %v2501 = vadd.f32 0.0, %v2500
        %v2502 = vpop.f32.mrb[0].mxu0
        %v2503 = vpop.f32.mrb[0].mxu0
        %v2504 = vadd.f32 0.0, %v2503
        %v2505 = vpop.f32.mrb[0].mxu0
        %2506 = vmatprep.mubr.bf16.mxu0 0
        %2507 = vmatmul.mubr.bf16.gmra.mrb[0].mxu0 %v2215
        %v2508 = vpop.f32.mrb[0].mxu0
        %v2509 = vadd.f32 0.0, %v2508
        %v2510 = vpop.f32.mrb[0].mxu0
        %v2511 = vpop.f32.mrb[0].mxu0
        %v2512 = vadd.f32 0.0, %v2511
        %v2513 = vpop.f32.mrb[0].mxu0
        %2514 = vmatprep.mubr.bf16.mxu0 0
        %2515 = vmatmul.mubr.bf16.gmra.mrb[0].mxu0 %v2216
        %v2516 = vpop.f32.mrb[0].mxu0
        %v2517 = vadd.f32 0.0, %v2516
        %v2518 = vpop.f32.mrb[0].mxu0
        %v2519 = vpop.f32.mrb[0].mxu0
        %v2520 = vadd.f32 0.0, %v2519
        %v2521 = vpop.f32.mrb[0].mxu0
        %2522 = vmatprep.mubr.bf16.mxu0 0
        %2523 = vmatmul.mubr.bf16.gmra.mrb[0].mxu0 %v2217
        %v2524 = vpop.f32.mrb[0].mxu0
        %v2525 = vadd.f32 0.0, %v2524
        %v2526 = vpop.f32.mrb[0].mxu0
        %v2527 = vpop.f32.mrb[0].mxu0
        %v2528 = vadd.f32 0.0, %v2527
        %v2529 = vpop.f32.mrb[0].mxu0
        %2530 = vmatprep.mubr.bf16.mxu0 0
        %2531 = vmatmul.mubr.bf16.gmra.mrb[0].mxu0 %v2218
        %v2532 = vpop.f32.mrb[0].mxu0
        %v2533 = vadd.f32 0.0, %v2532
        %v2534 = vpop.f32.mrb[0].mxu0
        %v2535 = vpop.f32.mrb[0].mxu0
        %v2536 = vadd.f32 0.0, %v2535
        %v2537 = vpop.f32.mrb[0].mxu0
        %2538 = vmatprep.mubr.bf16.mxu0 0
        %2539 = vmatmul.mubr.bf16.gmra.mrb[0].mxu0 %v2219
        %v2540 = vpop.f32.mrb[0].mxu0
        %v2541 = vadd.f32 0.0, %v2540
        %v2542 = vpop.f32.mrb[0].mxu0
        %v2543 = vpop.f32.mrb[0].mxu0
        %v2544 = vadd.f32 0.0, %v2543
        %v2545 = vpop.f32.mrb[0].mxu0
        %2546 = vmatprep.mubr.bf16.mxu0 0
        %2547 = vmatmul.mubr.bf16.gmra.mrb[0].mxu0 %v2220
        %v2548 = vpop.f32.mrb[0].mxu0
        %v2549 = vadd.f32 0.0, %v2548
        %v2550 = vpop.f32.mrb[0].mxu0
        %v2551 = vpop.f32.mrb[0].mxu0
        %v2552 = vadd.f32 0.0, %v2551
        %v2553 = vpop.f32.mrb[0].mxu0
        %2554 = vmatprep.mubr.bf16.mxu0 0
        %2555 = vmatmul.mubr.bf16.gmra.mrb[0].mxu0 %v2221
        %v2556 = vpop.f32.mrb[0].mxu0
        %v2557 = vadd.f32 0.0, %v2556
        %v2558 = vpop.f32.mrb[0].mxu0
        %v2559 = vpop.f32.mrb[0].mxu0
        %v2560 = vadd.f32 0.0, %v2559
        %v2561 = vpop.f32.mrb[0].mxu0
        %2562 = vmatprep.mubr.bf16.mxu0 0
        %2563 = vmatmul.mubr.bf16.gmra.mrb[0].mxu0 %v2222
        %v2564 = vpop.f32.mrb[0].mxu0
        %v2565 = vadd.f32 0.0, %v2564
        %v2566 = vpop.f32.mrb[0].mxu0
        %v2567 = vpop.f32.mrb[0].mxu0
        %v2568 = vadd.f32 0.0, %v2567
        %v2569 = vpop.f32.mrb[0].mxu0
        %2570 = vmatprep.mubr.bf16.mxu0 0
        %2571 = vmatmul.mubr.bf16.gmra.mrb[0].mxu0 %v2223
        %v2572 = vpop.f32.mrb[0].mxu0
        %v2573 = vadd.f32 0.0, %v2572
        %v2574 = vpop.f32.mrb[0].mxu0
        %v2575 = vpop.f32.mrb[0].mxu0
        %v2576 = vadd.f32 0.0, %v2575
        %v2577 = vpop.f32.mrb[0].mxu0
        %2578 = vmatprep.mubr.bf16.mxu0 0
        %2579 = vmatmul.mubr.bf16.gmra.mrb[0].mxu0 %v2224
        %v2580 = vpop.f32.mrb[0].mxu0
        %v2581 = vadd.f32 0.0, %v2580
        %v2582 = vpop.f32.mrb[0].mxu0
        %v2583 = vpop.f32.mrb[0].mxu0
        %v2584 = vadd.f32 0.0, %v2583
        %v2585 = vpop.f32.mrb[0].mxu0
        %2586 = vmatprep.mubr.bf16.mxu0 0
        %2587 = vmatmul.mubr.bf16.gmra.mrb[0].mxu0 %v2225
        %v2588 = vpop.f32.mrb[0].mxu0
        %v2589 = vadd.f32 0.0, %v2588
        %v2590 = vpop.f32.mrb[0].mxu0
        %v2591 = vpop.f32.mrb[0].mxu0
        %v2592 = vadd.f32 0.0, %v2591
        %v2593 = vpop.f32.mrb[0].mxu0
        %2594 = vdwg.mxu0
        %v2595 = vadd.f32 %v1921, %v2341
        %v2596 = vadd.f32 %v1922, %v2344
        %v2597 = vadd.f32 %v1923, %v2349
        %v2598 = vadd.f32 %v1924, %v2352
        %v2599 = vadd.f32 %v1925, %v2357
        %v2600 = vadd.f32 %v1926, %v2360
        %v2601 = vadd.f32 %v1927, %v2365
        %v2602 = vadd.f32 %v1928, %v2368
        %v2603 = vadd.f32 %v1929, %v2373
        %v2604 = vadd.f32 %v1930, %v2376
        %v2605 = vadd.f32 %v1931, %v2381
        %v2606 = vadd.f32 %v1932, %v2384
        %v2607 = vadd.f32 %v1933, %v2389
        %v2608 = vadd.f32 %v1934, %v2392
        %v2609 = vadd.f32 %v1935, %v2397
        %v2610 = vadd.f32 %v1936, %v2400
        %v2611 = vadd.f32 %v1937, %v2405
        %v2612 = vadd.f32 %v1938, %v2408
        %v2613 = vadd.f32 %v1939, %v2413
        %v2614 = vadd.f32 %v1940, %v2416
        %v2615 = vadd.f32 %v1941, %v2421
        %v2616 = vadd.f32 %v1942, %v2424
        %v2617 = vadd.f32 %v1943, %v2429
        %v2618 = vadd.f32 %v1944, %v2432
        %v2619 = vadd.f32 %v1945, %v2437
        %v2620 = vadd.f32 %v1946, %v2440
        %v2621 = vadd.f32 %v1947, %v2445
        %v2622 = vadd.f32 %v1948, %v2448
        %v2623 = vadd.f32 %v1949, %v2453
        %v2624 = vadd.f32 %v1950, %v2456
        %v2625 = vadd.f32 %v1951, %v2461
        %v2626 = vadd.f32 %v1952, %v2464
        %v2627 = vadd.f32 %v1953, %v2469
        %v2628 = vadd.f32 %v1954, %v2472
        %v2629 = vadd.f32 %v1955, %v2477
        %v2630 = vadd.f32 %v1956, %v2480
        %v2631 = vadd.f32 %v1957, %v2485
        %v2632 = vadd.f32 %v1958, %v2488
        %v2633 = vadd.f32 %v1959, %v2493
        %v2634 = vadd.f32 %v1960, %v2496
        %v2635 = vadd.f32 %v1961, %v2501
        %v2636 = vadd.f32 %v1962, %v2504
        %v2637 = vadd.f32 %v1963, %v2509
        %v2638 = vadd.f32 %v1964, %v2512
        %v2639 = vadd.f32 %v1965, %v2517
        %v2640 = vadd.f32 %v1966, %v2520
        %v2641 = vadd.f32 %v1967, %v2525
        %v2642 = vadd.f32 %v1968, %v2528
        %v2643 = vadd.f32 %v1969, %v2533
        %v2644 = vadd.f32 %v1970, %v2536
        %v2645 = vadd.f32 %v1971, %v2541
        %v2646 = vadd.f32 %v1972, %v2544
        %v2647 = vadd.f32 %v1973, %v2549
        %v2648 = vadd.f32 %v1974, %v2552
        %v2649 = vadd.f32 %v1975, %v2557
        %v2650 = vadd.f32 %v1976, %v2560
        %v2651 = vadd.f32 %v1977, %v2565
        %v2652 = vadd.f32 %v1978, %v2568
        %v2653 = vadd.f32 %v1979, %v2573
        %v2654 = vadd.f32 %v1980, %v2576
        %v2655 = vadd.f32 %v1981, %v2581
        %v2656 = vadd.f32 %v1982, %v2584
        %v2657 = vadd.f32 %v1983, %v2589
        %v2658 = vadd.f32 %v1984, %v2592
        %v2659 = vld [vmem:[%s177 + $0x10] sm:$0xf]
        %v2660 = vld [vmem:[%s177 + $0x14] sm:$0xf]
        %v2661 = vld [vmem:[%s177 + $0x18] sm:$0xf]
        %v2662 = vld [vmem:[%s177 + $0x1c] sm:$0xf]
        %v2663 = vld [vmem:[%s177 + $0x20] sm:$0xf]
        %v2664 = vld [vmem:[%s177 + $0x24] sm:$0xf]
        %v2665 = vld [vmem:[%s177 + $0x28] sm:$0xf]
        %v2666 = vld [vmem:[%s177 + $0x2c] sm:$0xf]
        %v2667 = vld [vmem:[%s177 + $0x30] sm:$0xf]
        %v2668 = vld [vmem:[%s177 + $0x34] sm:$0xf]
        %v2669 = vld [vmem:[%s177 + $0x38] sm:$0xf]
        %v2670 = vld [vmem:[%s177 + $0x3c] sm:$0xf]
        %v2671 = vld [vmem:[%s177 + $0x40] sm:$0xf]
        %v2672 = vld [vmem:[%s177 + $0x44] sm:$0xf]
        %v2673 = vld [vmem:[%s177 + $0x48] sm:$0xf]
        %v2674 = vld [vmem:[%s177 + $0x4c] sm:$0xf]
        %v2675 = vld [vmem:[%s177 + $0x50] sm:$0xf]
        %v2676 = vld [vmem:[%s177 + $0x54] sm:$0xf]
        %v2677 = vld [vmem:[%s177 + $0x58] sm:$0xf]
        %v2678 = vld [vmem:[%s177 + $0x5c] sm:$0xf]
        %v2679 = vld [vmem:[%s177 + $0x60] sm:$0xf]
        %v2680 = vld [vmem:[%s177 + $0x64] sm:$0xf]
        %v2681 = vld [vmem:[%s177 + $0x68] sm:$0xf]
        %v2682 = vld [vmem:[%s177 + $0x6c] sm:$0xf]
        %v2683 = vld [vmem:[%s177 + $0x70] sm:$0xf]
        %v2684 = vld [vmem:[%s177 + $0x74] sm:$0xf]
        %v2685 = vld [vmem:[%s177 + $0x78] sm:$0xf]
        %v2686 = vld [vmem:[%s177 + $0x7c] sm:$0xf]
        %v2687 = vld [vmem:[%s177 + $0x80] sm:$0xf]
        %v2688 = vld [vmem:[%s177 + $0x84] sm:$0xf]
        %v2689 = vld [vmem:[%s177 + $0x88] sm:$0xf]
        %v2690 = vld [vmem:[%s177 + $0x8c] sm:$0xf]
        %v2691 = vld [vmem:[%s177 + $0x90] sm:$0xf]
        %v2692 = vld [vmem:[%s177 + $0x94] sm:$0xf]
        %v2693 = vld [vmem:[%s177 + $0x98] sm:$0xf]
        %v2694 = vld [vmem:[%s177 + $0x9c] sm:$0xf]
        %v2695 = vld [vmem:[%s177 + $0xa0] sm:$0xf]
        %v2696 = vld [vmem:[%s177 + $0xa4] sm:$0xf]
        %v2697 = vld [vmem:[%s177 + $0xa8] sm:$0xf]
        %v2698 = vld [vmem:[%s177 + $0xac] sm:$0xf]
        %v2699 = vld [vmem:[%s177 + $0xb0] sm:$0xf]
        %v2700 = vld [vmem:[%s177 + $0xb4] sm:$0xf]
        %v2701 = vld [vmem:[%s177 + $0xb8] sm:$0xf]
        %v2702 = vld [vmem:[%s177 + $0xbc] sm:$0xf]
        %v2703 = vld [vmem:[%s177 + $0xc0] sm:$0xf]
        %v2704 = vld [vmem:[%s177 + $0xc4] sm:$0xf]
        %v2705 = vld [vmem:[%s177 + $0xc8] sm:$0xf]
        %v2706 = vld [vmem:[%s177 + $0xcc] sm:$0xf]
        %v2707 = vld [vmem:[%s177 + $0xd0] sm:$0xf]
        %v2708 = vld [vmem:[%s177 + $0xd4] sm:$0xf]
        %v2709 = vld [vmem:[%s177 + $0xd8] sm:$0xf]
        %v2710 = vld [vmem:[%s177 + $0xdc] sm:$0xf]
        %v2711 = vld [vmem:[%s177 + $0xe0] sm:$0xf]
        %v2712 = vld [vmem:[%s177 + $0xe4] sm:$0xf]
        %v2713 = vld [vmem:[%s177 + $0xe8] sm:$0xf]
        %v2714 = vld [vmem:[%s177 + $0xec] sm:$0xf]
        %v2715 = vld [vmem:[%s177 + $0xf0] sm:$0xf]
        %v2716 = vld [vmem:[%s177 + $0xf4] sm:$0xf]
        %v2717 = vld [vmem:[%s177 + $0xf8] sm:$0xf]
        %v2718 = vld [vmem:[%s177 + $0xfc] sm:$0xf]
        %v2719 = vld [vmem:[%s177 + $0x100] sm:$0xf]
        %v2720 = vld [vmem:[%s177 + $0x104] sm:$0xf]
        %v2721 = vld [vmem:[%s177 + $0x108] sm:$0xf]
        %v2722 = vld [vmem:[%s177 + $0x10c] sm:$0xf]
        %v2723 = vld [vmem:[%s177 + $0x110] sm:$0x1]
        %s2724 = scalar_lea.vmem [#allocation5], 256
        %v2725 = vld [vmem:[%s2724] sm:$0xf]
        %v2726 = vld [vmem:[%s2724 + $0x4] sm:$0xf]
        %v2727 = vld [vmem:[%s2724 + $0x8] sm:$0xf]
        %v2728 = vld [vmem:[%s2724 + $0xc] sm:$0xf]
        %v2729 = vld [vmem:[%s2724 + $0x10] sm:$0xf]
        %v2730 = vld [vmem:[%s2724 + $0x14] sm:$0xf]
        %v2731 = vld [vmem:[%s2724 + $0x18] sm:$0xf]
        %v2732 = vld [vmem:[%s2724 + $0x1c] sm:$0xf]
        %v2733 = vld [vmem:[%s2724 + $0x20] sm:$0xf]
        %v2734 = vld [vmem:[%s2724 + $0x24] sm:$0xf]
        %v2735 = vld [vmem:[%s2724 + $0x28] sm:$0xf]
        %v2736 = vld [vmem:[%s2724 + $0x2c] sm:$0xf]
        %v2737 = vld [vmem:[%s2724 + $0x30] sm:$0xf]
        %v2738 = vld [vmem:[%s2724 + $0x34] sm:$0xf]
        %v2739 = vld [vmem:[%s2724 + $0x38] sm:$0xf]
        %v2740 = vld [vmem:[%s2724 + $0x3c] sm:$0xf]
        %v2806 = vunpack.c.l.b16 %v2659
        %v2807 = vunpack.c.l.b16 %v2660
        %v2808 = vunpack.c.l.b16 %v2661
        %v2809 = vunpack.c.l.b16 %v2662
        %v2810 = vunpack.c.l.b16 %v2663
        %v2811 = vunpack.c.l.b16 %v2664
        %v2812 = vunpack.c.l.b16 %v2665
        %v2813 = vunpack.c.l.b16 %v2666
        %v2814 = vunpack.c.l.b16 %v2667
        %v2815 = vunpack.c.l.b16 %v2668
        %v2816 = vunpack.c.l.b16 %v2669
        %v2817 = vunpack.c.l.b16 %v2670
        %v2818 = vunpack.c.l.b16 %v2671
        %v2819 = vunpack.c.l.b16 %v2672
        %v2820 = vunpack.c.l.b16 %v2673
        %v2821 = vunpack.c.l.b16 %v2674
        %v2822 = vunpack.c.l.b16 %v2675
        %v2823 = vunpack.c.l.b16 %v2676
        %v2824 = vunpack.c.l.b16 %v2677
        %v2825 = vunpack.c.l.b16 %v2678
        %v2826 = vunpack.c.l.b16 %v2679
        %v2827 = vunpack.c.l.b16 %v2680
        %v2828 = vunpack.c.l.b16 %v2681
        %v2829 = vunpack.c.l.b16 %v2682
        %v2830 = vunpack.c.l.b16 %v2683
        %v2831 = vunpack.c.l.b16 %v2684
        %v2832 = vunpack.c.l.b16 %v2685
        %v2833 = vunpack.c.l.b16 %v2686
        %v2834 = vunpack.c.l.b16 %v2687
        %v2835 = vunpack.c.l.b16 %v2688
        %v2836 = vunpack.c.l.b16 %v2689
        %v2837 = vunpack.c.l.b16 %v2690
        %v2838 = vunpack.c.l.b16 %v2691
        %v2839 = vunpack.c.l.b16 %v2692
        %v2840 = vunpack.c.l.b16 %v2693
        %v2841 = vunpack.c.l.b16 %v2694
        %v2842 = vunpack.c.l.b16 %v2695
        %v2843 = vunpack.c.l.b16 %v2696
        %v2844 = vunpack.c.l.b16 %v2697
        %v2845 = vunpack.c.l.b16 %v2698
        %v2846 = vunpack.c.l.b16 %v2699
        %v2847 = vunpack.c.l.b16 %v2700
        %v2848 = vunpack.c.l.b16 %v2701
        %v2849 = vunpack.c.l.b16 %v2702
        %v2850 = vunpack.c.l.b16 %v2703
        %v2851 = vunpack.c.l.b16 %v2704
        %v2852 = vunpack.c.l.b16 %v2705
        %v2853 = vunpack.c.l.b16 %v2706
        %v2854 = vunpack.c.l.b16 %v2707
        %v2855 = vunpack.c.l.b16 %v2708
        %v2856 = vunpack.c.l.b16 %v2709
        %v2857 = vunpack.c.l.b16 %v2710
        %v2858 = vunpack.c.l.b16 %v2711
        %v2859 = vunpack.c.l.b16 %v2712
        %v2860 = vunpack.c.l.b16 %v2713
        %v2861 = vunpack.c.l.b16 %v2714
        %v2862 = vunpack.c.l.b16 %v2715
        %v2863 = vunpack.c.l.b16 %v2716
        %v2864 = vunpack.c.l.b16 %v2717
        %v2865 = vunpack.c.l.b16 %v2718
        %v2866 = vunpack.c.l.b16 %v2719
        %v2867 = vunpack.c.l.b16 %v2720
        %v2868 = vunpack.c.l.b16 %v2721
        %v2869 = vunpack.c.l.b16 %v2722
        %v2870 = vunpack.c.l.b16 %v2723
        %v2871 = vpack.c.b16 %v2807, %v2806
        %v2872 = vpack.c.b16 %v2809, %v2808
        %v2873 = vpack.c.b16 %v2811, %v2810
        %v2874 = vpack.c.b16 %v2813, %v2812
        %v2875 = vpack.c.b16 %v2815, %v2814
        %v2876 = vpack.c.b16 %v2817, %v2816
        %v2877 = vpack.c.b16 %v2819, %v2818
        %v2878 = vpack.c.b16 %v2821, %v2820
        %v2879 = vpack.c.b16 %v2823, %v2822
        %v2880 = vpack.c.b16 %v2825, %v2824
        %v2881 = vpack.c.b16 %v2827, %v2826
        %v2882 = vpack.c.b16 %v2829, %v2828
        %v2883 = vpack.c.b16 %v2831, %v2830
        %v2884 = vpack.c.b16 %v2833, %v2832
        %v2885 = vpack.c.b16 %v2835, %v2834
        %v2886 = vpack.c.b16 %v2837, %v2836
        %v2887 = vpack.c.b16 %v2839, %v2838
        %v2888 = vpack.c.b16 %v2841, %v2840
        %v2889 = vpack.c.b16 %v2843, %v2842
        %v2890 = vpack.c.b16 %v2845, %v2844
        %v2891 = vpack.c.b16 %v2847, %v2846
        %v2892 = vpack.c.b16 %v2849, %v2848
        %v2893 = vpack.c.b16 %v2851, %v2850
        %v2894 = vpack.c.b16 %v2853, %v2852
        %v2895 = vpack.c.b16 %v2855, %v2854
        %v2896 = vpack.c.b16 %v2857, %v2856
        %v2897 = vpack.c.b16 %v2859, %v2858
        %v2898 = vpack.c.b16 %v2861, %v2860
        %v2899 = vpack.c.b16 %v2863, %v2862
        %v2900 = vpack.c.b16 %v2865, %v2864
        %v2901 = vpack.c.b16 %v2867, %v2866
        %v2902 = vpack.c.b16 %v2869, %v2868
        %v2903 = vpack.c.b16 %v2870, %v2870
        %v2905 = vshrl.u32 %v2871, 16
        %v2907 = vshll.u32 %v2871, 16
        %v2909 = vrot.slane %v2907, 1
        %v2910 = vor.u32 %v2905, %v2909
        %v2912 = vshll.u32 %v2872, 16
        %v2914 = vrot.slane %v2912, 1
        %v2915 = vsel %vm466, %v2910, %v2914
        %v2916 = vshrl.u32 %v2872, 16
        %v2918 = vor.u32 %v2916, %v2914
        %v2920 = vshll.u32 %v2873, 16
        %v2922 = vrot.slane %v2920, 1
        %v2923 = vsel %vm466, %v2918, %v2922
        %v2924 = vshrl.u32 %v2873, 16
        %v2926 = vor.u32 %v2924, %v2922
        %v2928 = vshll.u32 %v2874, 16
        %v2930 = vrot.slane %v2928, 1
        %v2931 = vsel %vm466, %v2926, %v2930
        %v2932 = vshrl.u32 %v2874, 16
        %v2934 = vor.u32 %v2932, %v2930
        %v2936 = vshll.u32 %v2875, 16
        %v2938 = vrot.slane %v2936, 1
        %v2939 = vsel %vm466, %v2934, %v2938
        %v2940 = vshrl.u32 %v2875, 16
        %v2942 = vor.u32 %v2940, %v2938
        %v2944 = vshll.u32 %v2876, 16
        %v2946 = vrot.slane %v2944, 1
        %v2947 = vsel %vm466, %v2942, %v2946
        %v2948 = vshrl.u32 %v2876, 16
        %v2950 = vor.u32 %v2948, %v2946
        %v2952 = vshll.u32 %v2877, 16
        %v2954 = vrot.slane %v2952, 1
        %v2955 = vsel %vm466, %v2950, %v2954
        %v2956 = vshrl.u32 %v2877, 16
        %v2958 = vor.u32 %v2956, %v2954
        %v2960 = vshll.u32 %v2878, 16
        %v2962 = vrot.slane %v2960, 1
        %v2963 = vsel %vm466, %v2958, %v2962
        %v2964 = vshrl.u32 %v2878, 16
        %v2966 = vor.u32 %v2964, %v2962
        %v2968 = vshll.u32 %v2879, 16
        %v2970 = vrot.slane %v2968, 1
        %v2971 = vsel %vm466, %v2966, %v2970
        %v2972 = vshrl.u32 %v2879, 16
        %v2974 = vor.u32 %v2972, %v2970
        %v2976 = vshll.u32 %v2880, 16
        %v2978 = vrot.slane %v2976, 1
        %v2979 = vsel %vm466, %v2974, %v2978
        %v2980 = vshrl.u32 %v2880, 16
        %v2982 = vor.u32 %v2980, %v2978
        %v2984 = vshll.u32 %v2881, 16
        %v2986 = vrot.slane %v2984, 1
        %v2987 = vsel %vm466, %v2982, %v2986
        %v2988 = vshrl.u32 %v2881, 16
        %v2990 = vor.u32 %v2988, %v2986
        %v2992 = vshll.u32 %v2882, 16
        %v2994 = vrot.slane %v2992, 1
        %v2995 = vsel %vm466, %v2990, %v2994
        %v2996 = vshrl.u32 %v2882, 16
        %v2998 = vor.u32 %v2996, %v2994
        %v3000 = vshll.u32 %v2883, 16
        %v3002 = vrot.slane %v3000, 1
        %v3003 = vsel %vm466, %v2998, %v3002
        %v3004 = vshrl.u32 %v2883, 16
        %v3006 = vor.u32 %v3004, %v3002
        %v3008 = vshll.u32 %v2884, 16
        %v3010 = vrot.slane %v3008, 1
        %v3011 = vsel %vm466, %v3006, %v3010
        %v3012 = vshrl.u32 %v2884, 16
        %v3014 = vor.u32 %v3012, %v3010
        %v3016 = vshll.u32 %v2885, 16
        %v3018 = vrot.slane %v3016, 1
        %v3019 = vsel %vm466, %v3014, %v3018
        %v3020 = vshrl.u32 %v2885, 16
        %v3022 = vor.u32 %v3020, %v3018
        %v3024 = vshll.u32 %v2886, 16
        %v3026 = vrot.slane %v3024, 1
        %v3027 = vsel %vm466, %v3022, %v3026
        %v3028 = vshrl.u32 %v2886, 16
        %v3030 = vor.u32 %v3028, %v3026
        %v3032 = vshll.u32 %v2887, 16
        %v3034 = vrot.slane %v3032, 1
        %v3035 = vsel %vm466, %v3030, %v3034
        %v3036 = vshrl.u32 %v2887, 16
        %v3038 = vor.u32 %v3036, %v3034
        %v3040 = vshll.u32 %v2888, 16
        %v3042 = vrot.slane %v3040, 1
        %v3043 = vsel %vm466, %v3038, %v3042
        %v3044 = vshrl.u32 %v2888, 16
        %v3046 = vor.u32 %v3044, %v3042
        %v3048 = vshll.u32 %v2889, 16
        %v3050 = vrot.slane %v3048, 1
        %v3051 = vsel %vm466, %v3046, %v3050
        %v3052 = vshrl.u32 %v2889, 16
        %v3054 = vor.u32 %v3052, %v3050
        %v3056 = vshll.u32 %v2890, 16
        %v3058 = vrot.slane %v3056, 1
        %v3059 = vsel %vm466, %v3054, %v3058
        %v3060 = vshrl.u32 %v2890, 16
        %v3062 = vor.u32 %v3060, %v3058
        %v3064 = vshll.u32 %v2891, 16
        %v3066 = vrot.slane %v3064, 1
        %v3067 = vsel %vm466, %v3062, %v3066
        %v3068 = vshrl.u32 %v2891, 16
        %v3070 = vor.u32 %v3068, %v3066
        %v3072 = vshll.u32 %v2892, 16
        %v3074 = vrot.slane %v3072, 1
        %v3075 = vsel %vm466, %v3070, %v3074
        %v3076 = vshrl.u32 %v2892, 16
        %v3078 = vor.u32 %v3076, %v3074
        %v3080 = vshll.u32 %v2893, 16
        %v3082 = vrot.slane %v3080, 1
        %v3083 = vsel %vm466, %v3078, %v3082
        %v3084 = vshrl.u32 %v2893, 16
        %v3086 = vor.u32 %v3084, %v3082
        %v3088 = vshll.u32 %v2894, 16
        %v3090 = vrot.slane %v3088, 1
        %v3091 = vsel %vm466, %v3086, %v3090
        %v3092 = vshrl.u32 %v2894, 16
        %v3094 = vor.u32 %v3092, %v3090
        %v3096 = vshll.u32 %v2895, 16
        %v3098 = vrot.slane %v3096, 1
        %v3099 = vsel %vm466, %v3094, %v3098
        %v3100 = vshrl.u32 %v2895, 16
        %v3102 = vor.u32 %v3100, %v3098
        %v3104 = vshll.u32 %v2896, 16
        %v3106 = vrot.slane %v3104, 1
        %v3107 = vsel %vm466, %v3102, %v3106
        %v3108 = vshrl.u32 %v2896, 16
        %v3110 = vor.u32 %v3108, %v3106
        %v3112 = vshll.u32 %v2897, 16
        %v3114 = vrot.slane %v3112, 1
        %v3115 = vsel %vm466, %v3110, %v3114
        %v3116 = vshrl.u32 %v2897, 16
        %v3118 = vor.u32 %v3116, %v3114
        %v3120 = vshll.u32 %v2898, 16
        %v3122 = vrot.slane %v3120, 1
        %v3123 = vsel %vm466, %v3118, %v3122
        %v3124 = vshrl.u32 %v2898, 16
        %v3126 = vor.u32 %v3124, %v3122
        %v3128 = vshll.u32 %v2899, 16
        %v3130 = vrot.slane %v3128, 1
        %v3131 = vsel %vm466, %v3126, %v3130
        %v3132 = vshrl.u32 %v2899, 16
        %v3134 = vor.u32 %v3132, %v3130
        %v3136 = vshll.u32 %v2900, 16
        %v3138 = vrot.slane %v3136, 1
        %v3139 = vsel %vm466, %v3134, %v3138
        %v3140 = vshrl.u32 %v2900, 16
        %v3142 = vor.u32 %v3140, %v3138
        %v3144 = vshll.u32 %v2901, 16
        %v3146 = vrot.slane %v3144, 1
        %v3147 = vsel %vm466, %v3142, %v3146
        %v3148 = vshrl.u32 %v2901, 16
        %v3150 = vor.u32 %v3148, %v3146
        %v3152 = vshll.u32 %v2902, 16
        %v3154 = vrot.slane %v3152, 1
        %v3155 = vsel %vm466, %v3150, %v3154
        %v3156 = vshrl.u32 %v2902, 16
        %v3158 = vor.u32 %v3156, %v3154
        %v3160 = vshll.u32 %v2903, 16
        %v3162 = vrot.slane %v3160, 1
        %v3163 = vsel %vm466, %v3158, %v3162
        %v3212 = vunpack.c.l.b16 %v2725
        %v3213 = vunpack.c.l.b16 %v2726
        %v3214 = vunpack.c.l.b16 %v2727
        %v3215 = vunpack.c.l.b16 %v2728
        %v3216 = vunpack.c.l.b16 %v2729
        %v3217 = vunpack.c.l.b16 %v2730
        %v3218 = vunpack.c.l.b16 %v2731
        %v3219 = vunpack.c.l.b16 %v2732
        %v3220 = vunpack.c.l.b16 %v2733
        %v3221 = vunpack.c.l.b16 %v2734
        %v3222 = vunpack.c.l.b16 %v2735
        %v3223 = vunpack.c.l.b16 %v2736
        %v3224 = vunpack.c.l.b16 %v2737
        %v3225 = vunpack.c.l.b16 %v2738
        %v3226 = vunpack.c.l.b16 %v2739
        %v3227 = vunpack.c.l.b16 %v2740
        %v3228 = vpack.c.b16 %v3213, %v3212
        %v3229 = vpack.c.b16 %v3215, %v3214
        %v3230 = vpack.c.b16 %v3217, %v3216
        %v3231 = vpack.c.b16 %v3219, %v3218
        %v3232 = vpack.c.b16 %v3221, %v3220
        %v3233 = vpack.c.b16 %v3223, %v3222
        %v3234 = vpack.c.b16 %v3225, %v3224
        %v3235 = vpack.c.b16 %v3227, %v3226
        %3244 = vmatprep.subr.bf16.mxu0 0
        %3245 = vmatpush1.bf16.msra.mxu0 %v3228
        %3246 = vmatprep.subr.bf16.mxu0 0
        %3247 = vmatpush1.bf16.msra.mxu0 %v3229
        %3248 = vmatprep.subr.bf16.mxu0 0
        %3249 = vmatpush1.bf16.msra.mxu0 %v3230
        %3250 = vmatprep.subr.bf16.mxu0 0
        %3251 = vmatpush1.bf16.msra.mxu0 %v3231
        %3252 = vmatprep.subr.bf16.mxu0 0
        %3253 = vmatpush1.bf16.msra.mxu0 %v3232
        %3254 = vmatprep.subr.bf16.mxu0 0
        %3255 = vmatpush1.bf16.msra.mxu0 %v3233
        %3256 = vmatprep.subr.bf16.mxu0 0
        %3257 = vmatpush1.bf16.msra.mxu0 %v3234
        %3258 = vmatprep.subr.bf16.mxu0 0
        %3259 = vmatpush1.bf16.msra.mxu0 %v3235
        %3260 = vmatprep.subr.bf16.mxu0 0
        %3261 = vmatpush1.bf16.msra.mxu0 0
        %3262 = vmatprep.subr.bf16.mxu0 0
        %3263 = vmatpush1.bf16.msra.mxu0 0
        %3264 = vmatprep.subr.bf16.mxu0 0
        %3265 = vmatpush1.bf16.msra.mxu0 0
        %3266 = vmatprep.subr.bf16.mxu0 0
        %3267 = vmatpush1.bf16.msra.mxu0 0
        %3268 = vmatprep.subr.bf16.mxu0 0
        %3269 = vmatpush1.bf16.msra.mxu0 0
        %3270 = vmatprep.subr.bf16.mxu0 0
        %3271 = vmatpush1.bf16.msra.mxu0 0
        %3272 = vmatprep.subr.bf16.mxu0 0
        %3273 = vmatpush1.bf16.msra.mxu0 0
        %3274 = vmatprep.subr.bf16.mxu0 0
        %3275 = vmatpush1.bf16.msra.mxu0 0
        %3276 = vmatprep.mubr.bf16.mxu0 0
        %3277 = vmatmul.mubr.bf16.gmra.mrb[0].mxu0 %v2915
        %v3278 = vpop.f32.mrb[0].mxu0
        %v3279 = vadd.f32 0.0, %v3278
        %v3280 = vpop.f32.mrb[0].mxu0
        %v3281 = vpop.f32.mrb[0].mxu0
        %v3282 = vadd.f32 0.0, %v3281
        %v3283 = vpop.f32.mrb[0].mxu0
        %3284 = vmatprep.mubr.bf16.mxu0 0
        %3285 = vmatmul.mubr.bf16.gmra.mrb[0].mxu0 %v2923
        %v3286 = vpop.f32.mrb[0].mxu0
        %v3287 = vadd.f32 0.0, %v3286
        %v3288 = vpop.f32.mrb[0].mxu0
        %v3289 = vpop.f32.mrb[0].mxu0
        %v3290 = vadd.f32 0.0, %v3289
        %v3291 = vpop.f32.mrb[0].mxu0
        %3292 = vmatprep.mubr.bf16.mxu0 0
        %3293 = vmatmul.mubr.bf16.gmra.mrb[0].mxu0 %v2931
        %v3294 = vpop.f32.mrb[0].mxu0
        %v3295 = vadd.f32 0.0, %v3294
        %v3296 = vpop.f32.mrb[0].mxu0
        %v3297 = vpop.f32.mrb[0].mxu0
        %v3298 = vadd.f32 0.0, %v3297
        %v3299 = vpop.f32.mrb[0].mxu0
        %3300 = vmatprep.mubr.bf16.mxu0 0
        %3301 = vmatmul.mubr.bf16.gmra.mrb[0].mxu0 %v2939
        %v3302 = vpop.f32.mrb[0].mxu0
        %v3303 = vadd.f32 0.0, %v3302
        %v3304 = vpop.f32.mrb[0].mxu0
        %v3305 = vpop.f32.mrb[0].mxu0
        %v3306 = vadd.f32 0.0, %v3305
        %v3307 = vpop.f32.mrb[0].mxu0
        %3308 = vmatprep.mubr.bf16.mxu0 0
        %3309 = vmatmul.mubr.bf16.gmra.mrb[0].mxu0 %v2947
        %v3310 = vpop.f32.mrb[0].mxu0
        %v3311 = vadd.f32 0.0, %v3310
        %v3312 = vpop.f32.mrb[0].mxu0
        %v3313 = vpop.f32.mrb[0].mxu0
        %v3314 = vadd.f32 0.0, %v3313
        %v3315 = vpop.f32.mrb[0].mxu0
        %3316 = vmatprep.mubr.bf16.mxu0 0
        %3317 = vmatmul.mubr.bf16.gmra.mrb[0].mxu0 %v2955
        %v3318 = vpop.f32.mrb[0].mxu0
        %v3319 = vadd.f32 0.0, %v3318
        %v3320 = vpop.f32.mrb[0].mxu0
        %v3321 = vpop.f32.mrb[0].mxu0
        %v3322 = vadd.f32 0.0, %v3321
        %v3323 = vpop.f32.mrb[0].mxu0
        %3324 = vmatprep.mubr.bf16.mxu0 0
        %3325 = vmatmul.mubr.bf16.gmra.mrb[0].mxu0 %v2963
        %v3326 = vpop.f32.mrb[0].mxu0
        %v3327 = vadd.f32 0.0, %v3326
        %v3328 = vpop.f32.mrb[0].mxu0
        %v3329 = vpop.f32.mrb[0].mxu0
        %v3330 = vadd.f32 0.0, %v3329
        %v3331 = vpop.f32.mrb[0].mxu0
        %3332 = vmatprep.mubr.bf16.mxu0 0
        %3333 = vmatmul.mubr.bf16.gmra.mrb[0].mxu0 %v2971
        %v3334 = vpop.f32.mrb[0].mxu0
        %v3335 = vadd.f32 0.0, %v3334
        %v3336 = vpop.f32.mrb[0].mxu0
        %v3337 = vpop.f32.mrb[0].mxu0
        %v3338 = vadd.f32 0.0, %v3337
        %v3339 = vpop.f32.mrb[0].mxu0
        %3340 = vmatprep.mubr.bf16.mxu0 0
        %3341 = vmatmul.mubr.bf16.gmra.mrb[0].mxu0 %v2979
        %v3342 = vpop.f32.mrb[0].mxu0
        %v3343 = vadd.f32 0.0, %v3342
        %v3344 = vpop.f32.mrb[0].mxu0
        %v3345 = vpop.f32.mrb[0].mxu0
        %v3346 = vadd.f32 0.0, %v3345
        %v3347 = vpop.f32.mrb[0].mxu0
        %3348 = vmatprep.mubr.bf16.mxu0 0
        %3349 = vmatmul.mubr.bf16.gmra.mrb[0].mxu0 %v2987
        %v3350 = vpop.f32.mrb[0].mxu0
        %v3351 = vadd.f32 0.0, %v3350
        %v3352 = vpop.f32.mrb[0].mxu0
        %v3353 = vpop.f32.mrb[0].mxu0
        %v3354 = vadd.f32 0.0, %v3353
        %v3355 = vpop.f32.mrb[0].mxu0
        %3356 = vmatprep.mubr.bf16.mxu0 0
        %3357 = vmatmul.mubr.bf16.gmra.mrb[0].mxu0 %v2995
        %v3358 = vpop.f32.mrb[0].mxu0
        %v3359 = vadd.f32 0.0, %v3358
        %v3360 = vpop.f32.mrb[0].mxu0
        %v3361 = vpop.f32.mrb[0].mxu0
        %v3362 = vadd.f32 0.0, %v3361
        %v3363 = vpop.f32.mrb[0].mxu0
        %3364 = vmatprep.mubr.bf16.mxu0 0
        %3365 = vmatmul.mubr.bf16.gmra.mrb[0].mxu0 %v3003
        %v3366 = vpop.f32.mrb[0].mxu0
        %v3367 = vadd.f32 0.0, %v3366
        %v3368 = vpop.f32.mrb[0].mxu0
        %v3369 = vpop.f32.mrb[0].mxu0
        %v3370 = vadd.f32 0.0, %v3369
        %v3371 = vpop.f32.mrb[0].mxu0
        %3372 = vmatprep.mubr.bf16.mxu0 0
        %3373 = vmatmul.mubr.bf16.gmra.mrb[0].mxu0 %v3011
        %v3374 = vpop.f32.mrb[0].mxu0
        %v3375 = vadd.f32 0.0, %v3374
        %v3376 = vpop.f32.mrb[0].mxu0
        %v3377 = vpop.f32.mrb[0].mxu0
        %v3378 = vadd.f32 0.0, %v3377
        %v3379 = vpop.f32.mrb[0].mxu0
        %3380 = vmatprep.mubr.bf16.mxu0 0
        %3381 = vmatmul.mubr.bf16.gmra.mrb[0].mxu0 %v3019
        %v3382 = vpop.f32.mrb[0].mxu0
        %v3383 = vadd.f32 0.0, %v3382
        %v3384 = vpop.f32.mrb[0].mxu0
        %v3385 = vpop.f32.mrb[0].mxu0
        %v3386 = vadd.f32 0.0, %v3385
        %v3387 = vpop.f32.mrb[0].mxu0
        %3388 = vmatprep.mubr.bf16.mxu0 0
        %3389 = vmatmul.mubr.bf16.gmra.mrb[0].mxu0 %v3027
        %v3390 = vpop.f32.mrb[0].mxu0
        %v3391 = vadd.f32 0.0, %v3390
        %v3392 = vpop.f32.mrb[0].mxu0
        %v3393 = vpop.f32.mrb[0].mxu0
        %v3394 = vadd.f32 0.0, %v3393
        %v3395 = vpop.f32.mrb[0].mxu0
        %3396 = vmatprep.mubr.bf16.mxu0 0
        %3397 = vmatmul.mubr.bf16.gmra.mrb[0].mxu0 %v3035
        %v3398 = vpop.f32.mrb[0].mxu0
        %v3399 = vadd.f32 0.0, %v3398
        %v3400 = vpop.f32.mrb[0].mxu0
        %v3401 = vpop.f32.mrb[0].mxu0
        %v3402 = vadd.f32 0.0, %v3401
        %v3403 = vpop.f32.mrb[0].mxu0
        %3404 = vmatprep.mubr.bf16.mxu0 0
        %3405 = vmatmul.mubr.bf16.gmra.mrb[0].mxu0 %v3043
        %v3406 = vpop.f32.mrb[0].mxu0
        %v3407 = vadd.f32 0.0, %v3406
        %v3408 = vpop.f32.mrb[0].mxu0
        %v3409 = vpop.f32.mrb[0].mxu0
        %v3410 = vadd.f32 0.0, %v3409
        %v3411 = vpop.f32.mrb[0].mxu0
        %3412 = vmatprep.mubr.bf16.mxu0 0
        %3413 = vmatmul.mubr.bf16.gmra.mrb[0].mxu0 %v3051
        %v3414 = vpop.f32.mrb[0].mxu0
        %v3415 = vadd.f32 0.0, %v3414
        %v3416 = vpop.f32.mrb[0].mxu0
        %v3417 = vpop.f32.mrb[0].mxu0
        %v3418 = vadd.f32 0.0, %v3417
        %v3419 = vpop.f32.mrb[0].mxu0
        %3420 = vmatprep.mubr.bf16.mxu0 0
        %3421 = vmatmul.mubr.bf16.gmra.mrb[0].mxu0 %v3059
        %v3422 = vpop.f32.mrb[0].mxu0
        %v3423 = vadd.f32 0.0, %v3422
        %v3424 = vpop.f32.mrb[0].mxu0
        %v3425 = vpop.f32.mrb[0].mxu0
        %v3426 = vadd.f32 0.0, %v3425
        %v3427 = vpop.f32.mrb[0].mxu0
        %3428 = vmatprep.mubr.bf16.mxu0 0
        %3429 = vmatmul.mubr.bf16.gmra.mrb[0].mxu0 %v3067
        %v3430 = vpop.f32.mrb[0].mxu0
        %v3431 = vadd.f32 0.0, %v3430
        %v3432 = vpop.f32.mrb[0].mxu0
        %v3433 = vpop.f32.mrb[0].mxu0
        %v3434 = vadd.f32 0.0, %v3433
        %v3435 = vpop.f32.mrb[0].mxu0
        %3436 = vmatprep.mubr.bf16.mxu0 0
        %3437 = vmatmul.mubr.bf16.gmra.mrb[0].mxu0 %v3075
        %v3438 = vpop.f32.mrb[0].mxu0
        %v3439 = vadd.f32 0.0, %v3438
        %v3440 = vpop.f32.mrb[0].mxu0
        %v3441 = vpop.f32.mrb[0].mxu0
        %v3442 = vadd.f32 0.0, %v3441
        %v3443 = vpop.f32.mrb[0].mxu0
        %3444 = vmatprep.mubr.bf16.mxu0 0
        %3445 = vmatmul.mubr.bf16.gmra.mrb[0].mxu0 %v3083
        %v3446 = vpop.f32.mrb[0].mxu0
        %v3447 = vadd.f32 0.0, %v3446
        %v3448 = vpop.f32.mrb[0].mxu0
        %v3449 = vpop.f32.mrb[0].mxu0
        %v3450 = vadd.f32 0.0, %v3449
        %v3451 = vpop.f32.mrb[0].mxu0
        %3452 = vmatprep.mubr.bf16.mxu0 0
        %3453 = vmatmul.mubr.bf16.gmra.mrb[0].mxu0 %v3091
        %v3454 = vpop.f32.mrb[0].mxu0
        %v3455 = vadd.f32 0.0, %v3454
        %v3456 = vpop.f32.mrb[0].mxu0
        %v3457 = vpop.f32.mrb[0].mxu0
        %v3458 = vadd.f32 0.0, %v3457
        %v3459 = vpop.f32.mrb[0].mxu0
        %3460 = vmatprep.mubr.bf16.mxu0 0
        %3461 = vmatmul.mubr.bf16.gmra.mrb[0].mxu0 %v3099
        %v3462 = vpop.f32.mrb[0].mxu0
        %v3463 = vadd.f32 0.0, %v3462
        %v3464 = vpop.f32.mrb[0].mxu0
        %v3465 = vpop.f32.mrb[0].mxu0
        %v3466 = vadd.f32 0.0, %v3465
        %v3467 = vpop.f32.mrb[0].mxu0
        %3468 = vmatprep.mubr.bf16.mxu0 0
        %3469 = vmatmul.mubr.bf16.gmra.mrb[0].mxu0 %v3107
        %v3470 = vpop.f32.mrb[0].mxu0
        %v3471 = vadd.f32 0.0, %v3470
        %v3472 = vpop.f32.mrb[0].mxu0
        %v3473 = vpop.f32.mrb[0].mxu0
        %v3474 = vadd.f32 0.0, %v3473
        %v3475 = vpop.f32.mrb[0].mxu0
        %3476 = vmatprep.mubr.bf16.mxu0 0
        %3477 = vmatmul.mubr.bf16.gmra.mrb[0].mxu0 %v3115
        %v3478 = vpop.f32.mrb[0].mxu0
        %v3479 = vadd.f32 0.0, %v3478
        %v3480 = vpop.f32.mrb[0].mxu0
        %v3481 = vpop.f32.mrb[0].mxu0
        %v3482 = vadd.f32 0.0, %v3481
        %v3483 = vpop.f32.mrb[0].mxu0
        %3484 = vmatprep.mubr.bf16.mxu0 0
        %3485 = vmatmul.mubr.bf16.gmra.mrb[0].mxu0 %v3123
        %v3486 = vpop.f32.mrb[0].mxu0
        %v3487 = vadd.f32 0.0, %v3486
        %v3488 = vpop.f32.mrb[0].mxu0
        %v3489 = vpop.f32.mrb[0].mxu0
        %v3490 = vadd.f32 0.0, %v3489
        %v3491 = vpop.f32.mrb[0].mxu0
        %3492 = vmatprep.mubr.bf16.mxu0 0
        %3493 = vmatmul.mubr.bf16.gmra.mrb[0].mxu0 %v3131
        %v3494 = vpop.f32.mrb[0].mxu0
        %v3495 = vadd.f32 0.0, %v3494
        %v3496 = vpop.f32.mrb[0].mxu0
        %v3497 = vpop.f32.mrb[0].mxu0
        %v3498 = vadd.f32 0.0, %v3497
        %v3499 = vpop.f32.mrb[0].mxu0
        %3500 = vmatprep.mubr.bf16.mxu0 0
        %3501 = vmatmul.mubr.bf16.gmra.mrb[0].mxu0 %v3139
        %v3502 = vpop.f32.mrb[0].mxu0
        %v3503 = vadd.f32 0.0, %v3502
        %v3504 = vpop.f32.mrb[0].mxu0
        %v3505 = vpop.f32.mrb[0].mxu0
        %v3506 = vadd.f32 0.0, %v3505
        %v3507 = vpop.f32.mrb[0].mxu0
        %3508 = vmatprep.mubr.bf16.mxu0 0
        %3509 = vmatmul.mubr.bf16.gmra.mrb[0].mxu0 %v3147
        %v3510 = vpop.f32.mrb[0].mxu0
        %v3511 = vadd.f32 0.0, %v3510
        %v3512 = vpop.f32.mrb[0].mxu0
        %v3513 = vpop.f32.mrb[0].mxu0
        %v3514 = vadd.f32 0.0, %v3513
        %v3515 = vpop.f32.mrb[0].mxu0
        %3516 = vmatprep.mubr.bf16.mxu0 0
        %3517 = vmatmul.mubr.bf16.gmra.mrb[0].mxu0 %v3155
        %v3518 = vpop.f32.mrb[0].mxu0
        %v3519 = vadd.f32 0.0, %v3518
        %v3520 = vpop.f32.mrb[0].mxu0
        %v3521 = vpop.f32.mrb[0].mxu0
        %v3522 = vadd.f32 0.0, %v3521
        %v3523 = vpop.f32.mrb[0].mxu0
        %3524 = vmatprep.mubr.bf16.mxu0 0
        %3525 = vmatmul.mubr.bf16.gmra.mrb[0].mxu0 %v3163
        %v3526 = vpop.f32.mrb[0].mxu0
        %v3527 = vadd.f32 0.0, %v3526
        %v3528 = vpop.f32.mrb[0].mxu0
        %v3529 = vpop.f32.mrb[0].mxu0
        %v3530 = vadd.f32 0.0, %v3529
        %v3531 = vpop.f32.mrb[0].mxu0
        %3532 = vdwg.mxu0
        %v3533 = vadd.f32 %v2595, %v3279
        %v3534 = vadd.f32 %v2596, %v3282
        %v3535 = vadd.f32 %v2597, %v3287
        %v3536 = vadd.f32 %v2598, %v3290
        %v3537 = vadd.f32 %v2599, %v3295
        %v3538 = vadd.f32 %v2600, %v3298
        %v3539 = vadd.f32 %v2601, %v3303
        %v3540 = vadd.f32 %v2602, %v3306
        %v3541 = vadd.f32 %v2603, %v3311
        %v3542 = vadd.f32 %v2604, %v3314
        %v3543 = vadd.f32 %v2605, %v3319
        %v3544 = vadd.f32 %v2606, %v3322
        %v3545 = vadd.f32 %v2607, %v3327
        %v3546 = vadd.f32 %v2608, %v3330
        %v3547 = vadd.f32 %v2609, %v3335
        %v3548 = vadd.f32 %v2610, %v3338
        %v3549 = vadd.f32 %v2611, %v3343
        %v3550 = vadd.f32 %v2612, %v3346
        %v3551 = vadd.f32 %v2613, %v3351
        %v3552 = vadd.f32 %v2614, %v3354
        %v3553 = vadd.f32 %v2615, %v3359
        %v3554 = vadd.f32 %v2616, %v3362
        %v3555 = vadd.f32 %v2617, %v3367
        %v3556 = vadd.f32 %v2618, %v3370
        %v3557 = vadd.f32 %v2619, %v3375
        %v3558 = vadd.f32 %v2620, %v3378
        %v3559 = vadd.f32 %v2621, %v3383
        %v3560 = vadd.f32 %v2622, %v3386
        %v3561 = vadd.f32 %v2623, %v3391
        %v3562 = vadd.f32 %v2624, %v3394
        %v3563 = vadd.f32 %v2625, %v3399
        %v3564 = vadd.f32 %v2626, %v3402
        %v3565 = vadd.f32 %v2627, %v3407
        %v3566 = vadd.f32 %v2628, %v3410
        %v3567 = vadd.f32 %v2629, %v3415
        %v3568 = vadd.f32 %v2630, %v3418
        %v3569 = vadd.f32 %v2631, %v3423
        %v3570 = vadd.f32 %v2632, %v3426
        %v3571 = vadd.f32 %v2633, %v3431
        %v3572 = vadd.f32 %v2634, %v3434
        %v3573 = vadd.f32 %v2635, %v3439
        %v3574 = vadd.f32 %v2636, %v3442
        %v3575 = vadd.f32 %v2637, %v3447
        %v3576 = vadd.f32 %v2638, %v3450
        %v3577 = vadd.f32 %v2639, %v3455
        %v3578 = vadd.f32 %v2640, %v3458
        %v3579 = vadd.f32 %v2641, %v3463
        %v3580 = vadd.f32 %v2642, %v3466
        %v3581 = vadd.f32 %v2643, %v3471
        %v3582 = vadd.f32 %v2644, %v3474
        %v3583 = vadd.f32 %v2645, %v3479
        %v3584 = vadd.f32 %v2646, %v3482
        %v3585 = vadd.f32 %v2647, %v3487
        %v3586 = vadd.f32 %v2648, %v3490
        %v3587 = vadd.f32 %v2649, %v3495
        %v3588 = vadd.f32 %v2650, %v3498
        %v3589 = vadd.f32 %v2651, %v3503
        %v3590 = vadd.f32 %v2652, %v3506
        %v3591 = vadd.f32 %v2653, %v3511
        %v3592 = vadd.f32 %v2654, %v3514
        %v3593 = vadd.f32 %v2655, %v3519
        %v3594 = vadd.f32 %v2656, %v3522
        %v3595 = vadd.f32 %v2657, %v3527
        %v3596 = vadd.f32 %v2658, %v3530
        %v3597 = vld [vmem:[%s177 + $0x10] sm:$0xe]
        %s3598 = scalar_lea.vmem [#allocation5], 320
        %v3599 = vld [vmem:[%s3598] sm:$0xf]
        %v3600 = vld [vmem:[%s3598 + $0x4] sm:$0xf]
        %v3601 = vld [vmem:[%s3598 + $0x8] sm:$0xf]
        %v3602 = vld [vmem:[%s3598 + $0xc] sm:$0xf]
        %v3603 = vld [vmem:[%s3598 + $0x10] sm:$0xf]
        %v3604 = vld [vmem:[%s3598 + $0x14] sm:$0xf]
        %v3605 = vld [vmem:[%s3598 + $0x18] sm:$0xf]
        %v3606 = vld [vmem:[%s3598 + $0x1c] sm:$0xf]
        %v3607 = vld [vmem:[%s3598 + $0x20] sm:$0xf]
        %v3608 = vld [vmem:[%s3598 + $0x24] sm:$0xf]
        %v3609 = vld [vmem:[%s3598 + $0x28] sm:$0xf]
        %v3610 = vld [vmem:[%s3598 + $0x2c] sm:$0xf]
        %v3611 = vld [vmem:[%s3598 + $0x30] sm:$0xf]
        %v3612 = vld [vmem:[%s3598 + $0x34] sm:$0xf]
        %v3613 = vld [vmem:[%s3598 + $0x38] sm:$0xf]
        %v3614 = vld [vmem:[%s3598 + $0x3c] sm:$0xf]
        %v3616 = vunpack.c.l.b16 %v3597
        %v3617 = vpack.c.b16 %v2807, %v3616
        %v3618 = vrot.slane %v3617, 1
        %v3619 = vrot.slane %v2872, 1
        %v3620 = vsel %vm1486, %v3618, %v3619
        %v3621 = vrot.slane %v2873, 1
        %v3622 = vsel %vm1486, %v3619, %v3621
        %v3623 = vrot.slane %v2874, 1
        %v3624 = vsel %vm1486, %v3621, %v3623
        %v3625 = vrot.slane %v2875, 1
        %v3626 = vsel %vm1486, %v3623, %v3625
        %v3627 = vrot.slane %v2876, 1
        %v3628 = vsel %vm1486, %v3625, %v3627
        %v3629 = vrot.slane %v2877, 1
        %v3630 = vsel %vm1486, %v3627, %v3629
        %v3631 = vrot.slane %v2878, 1
        %v3632 = vsel %vm1486, %v3629, %v3631
        %v3633 = vrot.slane %v2879, 1
        %v3634 = vsel %vm1486, %v3631, %v3633
        %v3635 = vrot.slane %v2880, 1
        %v3636 = vsel %vm1486, %v3633, %v3635
        %v3637 = vrot.slane %v2881, 1
        %v3638 = vsel %vm1486, %v3635, %v3637
        %v3639 = vrot.slane %v2882, 1
        %v3640 = vsel %vm1486, %v3637, %v3639
        %v3641 = vrot.slane %v2883, 1
        %v3642 = vsel %vm1486, %v3639, %v3641
        %v3643 = vrot.slane %v2884, 1
        %v3644 = vsel %vm1486, %v3641, %v3643
        %v3645 = vrot.slane %v2885, 1
        %v3646 = vsel %vm1486, %v3643, %v3645
        %v3647 = vrot.slane %v2886, 1
        %v3648 = vsel %vm1486, %v3645, %v3647
        %v3649 = vrot.slane %v2887, 1
        %v3650 = vsel %vm1486, %v3647, %v3649
        %v3651 = vrot.slane %v2888, 1
        %v3652 = vsel %vm1486, %v3649, %v3651
        %v3653 = vrot.slane %v2889, 1
        %v3654 = vsel %vm1486, %v3651, %v3653
        %v3655 = vrot.slane %v2890, 1
        %v3656 = vsel %vm1486, %v3653, %v3655
        %v3657 = vrot.slane %v2891, 1
        %v3658 = vsel %vm1486, %v3655, %v3657
        %v3659 = vrot.slane %v2892, 1
        %v3660 = vsel %vm1486, %v3657, %v3659
        %v3661 = vrot.slane %v2893, 1
        %v3662 = vsel %vm1486, %v3659, %v3661
        %v3663 = vrot.slane %v2894, 1
        %v3664 = vsel %vm1486, %v3661, %v3663
        %v3665 = vrot.slane %v2895, 1
        %v3666 = vsel %vm1486, %v3663, %v3665
        %v3667 = vrot.slane %v2896, 1
        %v3668 = vsel %vm1486, %v3665, %v3667
        %v3669 = vrot.slane %v2897, 1
        %v3670 = vsel %vm1486, %v3667, %v3669
        %v3671 = vrot.slane %v2898, 1
        %v3672 = vsel %vm1486, %v3669, %v3671
        %v3673 = vrot.slane %v2899, 1
        %v3674 = vsel %vm1486, %v3671, %v3673
        %v3675 = vrot.slane %v2900, 1
        %v3676 = vsel %vm1486, %v3673, %v3675
        %v3677 = vrot.slane %v2901, 1
        %v3678 = vsel %vm1486, %v3675, %v3677
        %v3679 = vrot.slane %v2902, 1
        %v3680 = vsel %vm1486, %v3677, %v3679
        %v3681 = vrot.slane %v2903, 1
        %v3682 = vsel %vm1486, %v3679, %v3681
        %v3731 = vunpack.c.l.b16 %v3599
        %v3732 = vunpack.c.l.b16 %v3600
        %v3733 = vunpack.c.l.b16 %v3601
        %v3734 = vunpack.c.l.b16 %v3602
        %v3735 = vunpack.c.l.b16 %v3603
        %v3736 = vunpack.c.l.b16 %v3604
        %v3737 = vunpack.c.l.b16 %v3605
        %v3738 = vunpack.c.l.b16 %v3606
        %v3739 = vunpack.c.l.b16 %v3607
        %v3740 = vunpack.c.l.b16 %v3608
        %v3741 = vunpack.c.l.b16 %v3609
        %v3742 = vunpack.c.l.b16 %v3610
        %v3743 = vunpack.c.l.b16 %v3611
        %v3744 = vunpack.c.l.b16 %v3612
        %v3745 = vunpack.c.l.b16 %v3613
        %v3746 = vunpack.c.l.b16 %v3614
        %v3747 = vpack.c.b16 %v3732, %v3731
        %v3748 = vpack.c.b16 %v3734, %v3733
        %v3749 = vpack.c.b16 %v3736, %v3735
        %v3750 = vpack.c.b16 %v3738, %v3737
        %v3751 = vpack.c.b16 %v3740, %v3739
        %v3752 = vpack.c.b16 %v3742, %v3741
        %v3753 = vpack.c.b16 %v3744, %v3743
        %v3754 = vpack.c.b16 %v3746, %v3745
        %3763 = vmatprep.subr.bf16.mxu0 0
        %3764 = vmatpush1.bf16.msra.mxu0 %v3747
        %3765 = vmatprep.subr.bf16.mxu0 0
        %3766 = vmatpush1.bf16.msra.mxu0 %v3748
        %3767 = vmatprep.subr.bf16.mxu0 0
        %3768 = vmatpush1.bf16.msra.mxu0 %v3749
        %3769 = vmatprep.subr.bf16.mxu0 0
        %3770 = vmatpush1.bf16.msra.mxu0 %v3750
        %3771 = vmatprep.subr.bf16.mxu0 0
        %3772 = vmatpush1.bf16.msra.mxu0 %v3751
        %3773 = vmatprep.subr.bf16.mxu0 0
        %3774 = vmatpush1.bf16.msra.mxu0 %v3752
        %3775 = vmatprep.subr.bf16.mxu0 0
        %3776 = vmatpush1.bf16.msra.mxu0 %v3753
        %3777 = vmatprep.subr.bf16.mxu0 0
        %3778 = vmatpush1.bf16.msra.mxu0 %v3754
        %3779 = vmatprep.subr.bf16.mxu0 0
        %3780 = vmatpush1.bf16.msra.mxu0 0
        %3781 = vmatprep.subr.bf16.mxu0 0
        %3782 = vmatpush1.bf16.msra.mxu0 0
        %3783 = vmatprep.subr.bf16.mxu0 0
        %3784 = vmatpush1.bf16.msra.mxu0 0
        %3785 = vmatprep.subr.bf16.mxu0 0
        %3786 = vmatpush1.bf16.msra.mxu0 0
        %3787 = vmatprep.subr.bf16.mxu0 0
        %3788 = vmatpush1.bf16.msra.mxu0 0
        %3789 = vmatprep.subr.bf16.mxu0 0
        %3790 = vmatpush1.bf16.msra.mxu0 0
        %3791 = vmatprep.subr.bf16.mxu0 0
        %3792 = vmatpush1.bf16.msra.mxu0 0
        %3793 = vmatprep.subr.bf16.mxu0 0
        %3794 = vmatpush1.bf16.msra.mxu0 0
        %3795 = vmatprep.mubr.bf16.mxu0 0
        %3796 = vmatmul.mubr.bf16.gmra.mrb[0].mxu0 %v3620
        %v3797 = vpop.f32.mrb[0].mxu0
        %v3798 = vadd.f32 0.0, %v3797
        %v3799 = vpop.f32.mrb[0].mxu0
        %v3800 = vpop.f32.mrb[0].mxu0
        %v3801 = vadd.f32 0.0, %v3800
        %v3802 = vpop.f32.mrb[0].mxu0
        %3803 = vmatprep.mubr.bf16.mxu0 0
        %3804 = vmatmul.mubr.bf16.gmra.mrb[0].mxu0 %v3622
        %v3805 = vpop.f32.mrb[0].mxu0
        %v3806 = vadd.f32 0.0, %v3805
        %v3807 = vpop.f32.mrb[0].mxu0
        %v3808 = vpop.f32.mrb[0].mxu0
        %v3809 = vadd.f32 0.0, %v3808
        %v3810 = vpop.f32.mrb[0].mxu0
        %3811 = vmatprep.mubr.bf16.mxu0 0
        %3812 = vmatmul.mubr.bf16.gmra.mrb[0].mxu0 %v3624
        %v3813 = vpop.f32.mrb[0].mxu0
        %v3814 = vadd.f32 0.0, %v3813
        %v3815 = vpop.f32.mrb[0].mxu0
        %v3816 = vpop.f32.mrb[0].mxu0
        %v3817 = vadd.f32 0.0, %v3816
        %v3818 = vpop.f32.mrb[0].mxu0
        %3819 = vmatprep.mubr.bf16.mxu0 0
        %3820 = vmatmul.mubr.bf16.gmra.mrb[0].mxu0 %v3626
        %v3821 = vpop.f32.mrb[0].mxu0
        %v3822 = vadd.f32 0.0, %v3821
        %v3823 = vpop.f32.mrb[0].mxu0
        %v3824 = vpop.f32.mrb[0].mxu0
        %v3825 = vadd.f32 0.0, %v3824
        %v3826 = vpop.f32.mrb[0].mxu0
        %3827 = vmatprep.mubr.bf16.mxu0 0
        %3828 = vmatmul.mubr.bf16.gmra.mrb[0].mxu0 %v3628
        %v3829 = vpop.f32.mrb[0].mxu0
        %v3830 = vadd.f32 0.0, %v3829
        %v3831 = vpop.f32.mrb[0].mxu0
        %v3832 = vpop.f32.mrb[0].mxu0
        %v3833 = vadd.f32 0.0, %v3832
        %v3834 = vpop.f32.mrb[0].mxu0
        %3835 = vmatprep.mubr.bf16.mxu0 0
        %3836 = vmatmul.mubr.bf16.gmra.mrb[0].mxu0 %v3630
        %v3837 = vpop.f32.mrb[0].mxu0
        %v3838 = vadd.f32 0.0, %v3837
        %v3839 = vpop.f32.mrb[0].mxu0
        %v3840 = vpop.f32.mrb[0].mxu0
        %v3841 = vadd.f32 0.0, %v3840
        %v3842 = vpop.f32.mrb[0].mxu0
        %3843 = vmatprep.mubr.bf16.mxu0 0
        %3844 = vmatmul.mubr.bf16.gmra.mrb[0].mxu0 %v3632
        %v3845 = vpop.f32.mrb[0].mxu0
        %v3846 = vadd.f32 0.0, %v3845
        %v3847 = vpop.f32.mrb[0].mxu0
        %v3848 = vpop.f32.mrb[0].mxu0
        %v3849 = vadd.f32 0.0, %v3848
        %v3850 = vpop.f32.mrb[0].mxu0
        %3851 = vmatprep.mubr.bf16.mxu0 0
        %3852 = vmatmul.mubr.bf16.gmra.mrb[0].mxu0 %v3634
        %v3853 = vpop.f32.mrb[0].mxu0
        %v3854 = vadd.f32 0.0, %v3853
        %v3855 = vpop.f32.mrb[0].mxu0
        %v3856 = vpop.f32.mrb[0].mxu0
        %v3857 = vadd.f32 0.0, %v3856
        %v3858 = vpop.f32.mrb[0].mxu0
        %3859 = vmatprep.mubr.bf16.mxu0 0
        %3860 = vmatmul.mubr.bf16.gmra.mrb[0].mxu0 %v3636
        %v3861 = vpop.f32.mrb[0].mxu0
        %v3862 = vadd.f32 0.0, %v3861
        %v3863 = vpop.f32.mrb[0].mxu0
        %v3864 = vpop.f32.mrb[0].mxu0
        %v3865 = vadd.f32 0.0, %v3864
        %v3866 = vpop.f32.mrb[0].mxu0
        %3867 = vmatprep.mubr.bf16.mxu0 0
        %3868 = vmatmul.mubr.bf16.gmra.mrb[0].mxu0 %v3638
        %v3869 = vpop.f32.mrb[0].mxu0
        %v3870 = vadd.f32 0.0, %v3869
        %v3871 = vpop.f32.mrb[0].mxu0
        %v3872 = vpop.f32.mrb[0].mxu0
        %v3873 = vadd.f32 0.0, %v3872
        %v3874 = vpop.f32.mrb[0].mxu0
        %3875 = vmatprep.mubr.bf16.mxu0 0
        %3876 = vmatmul.mubr.bf16.gmra.mrb[0].mxu0 %v3640
        %v3877 = vpop.f32.mrb[0].mxu0
        %v3878 = vadd.f32 0.0, %v3877
        %v3879 = vpop.f32.mrb[0].mxu0
        %v3880 = vpop.f32.mrb[0].mxu0
        %v3881 = vadd.f32 0.0, %v3880
        %v3882 = vpop.f32.mrb[0].mxu0
        %3883 = vmatprep.mubr.bf16.mxu0 0
        %3884 = vmatmul.mubr.bf16.gmra.mrb[0].mxu0 %v3642
        %v3885 = vpop.f32.mrb[0].mxu0
        %v3886 = vadd.f32 0.0, %v3885
        %v3887 = vpop.f32.mrb[0].mxu0
        %v3888 = vpop.f32.mrb[0].mxu0
        %v3889 = vadd.f32 0.0, %v3888
        %v3890 = vpop.f32.mrb[0].mxu0
        %3891 = vmatprep.mubr.bf16.mxu0 0
        %3892 = vmatmul.mubr.bf16.gmra.mrb[0].mxu0 %v3644
        %v3893 = vpop.f32.mrb[0].mxu0
        %v3894 = vadd.f32 0.0, %v3893
        %v3895 = vpop.f32.mrb[0].mxu0
        %v3896 = vpop.f32.mrb[0].mxu0
        %v3897 = vadd.f32 0.0, %v3896
        %v3898 = vpop.f32.mrb[0].mxu0
        %3899 = vmatprep.mubr.bf16.mxu0 0
        %3900 = vmatmul.mubr.bf16.gmra.mrb[0].mxu0 %v3646
        %v3901 = vpop.f32.mrb[0].mxu0
        %v3902 = vadd.f32 0.0, %v3901
        %v3903 = vpop.f32.mrb[0].mxu0
        %v3904 = vpop.f32.mrb[0].mxu0
        %v3905 = vadd.f32 0.0, %v3904
        %v3906 = vpop.f32.mrb[0].mxu0
        %3907 = vmatprep.mubr.bf16.mxu0 0
        %3908 = vmatmul.mubr.bf16.gmra.mrb[0].mxu0 %v3648
        %v3909 = vpop.f32.mrb[0].mxu0
        %v3910 = vadd.f32 0.0, %v3909
        %v3911 = vpop.f32.mrb[0].mxu0
        %v3912 = vpop.f32.mrb[0].mxu0
        %v3913 = vadd.f32 0.0, %v3912
        %v3914 = vpop.f32.mrb[0].mxu0
        %3915 = vmatprep.mubr.bf16.mxu0 0
        %3916 = vmatmul.mubr.bf16.gmra.mrb[0].mxu0 %v3650
        %v3917 = vpop.f32.mrb[0].mxu0
        %v3918 = vadd.f32 0.0, %v3917
        %v3919 = vpop.f32.mrb[0].mxu0
        %v3920 = vpop.f32.mrb[0].mxu0
        %v3921 = vadd.f32 0.0, %v3920
        %v3922 = vpop.f32.mrb[0].mxu0
        %3923 = vmatprep.mubr.bf16.mxu0 0
        %3924 = vmatmul.mubr.bf16.gmra.mrb[0].mxu0 %v3652
        %v3925 = vpop.f32.mrb[0].mxu0
        %v3926 = vadd.f32 0.0, %v3925
        %v3927 = vpop.f32.mrb[0].mxu0
        %v3928 = vpop.f32.mrb[0].mxu0
        %v3929 = vadd.f32 0.0, %v3928
        %v3930 = vpop.f32.mrb[0].mxu0
        %3931 = vmatprep.mubr.bf16.mxu0 0
        %3932 = vmatmul.mubr.bf16.gmra.mrb[0].mxu0 %v3654
        %v3933 = vpop.f32.mrb[0].mxu0
        %v3934 = vadd.f32 0.0, %v3933
        %v3935 = vpop.f32.mrb[0].mxu0
        %v3936 = vpop.f32.mrb[0].mxu0
        %v3937 = vadd.f32 0.0, %v3936
        %v3938 = vpop.f32.mrb[0].mxu0
        %3939 = vmatprep.mubr.bf16.mxu0 0
        %3940 = vmatmul.mubr.bf16.gmra.mrb[0].mxu0 %v3656
        %v3941 = vpop.f32.mrb[0].mxu0
        %v3942 = vadd.f32 0.0, %v3941
        %v3943 = vpop.f32.mrb[0].mxu0
        %v3944 = vpop.f32.mrb[0].mxu0
        %v3945 = vadd.f32 0.0, %v3944
        %v3946 = vpop.f32.mrb[0].mxu0
        %3947 = vmatprep.mubr.bf16.mxu0 0
        %3948 = vmatmul.mubr.bf16.gmra.mrb[0].mxu0 %v3658
        %v3949 = vpop.f32.mrb[0].mxu0
        %v3950 = vadd.f32 0.0, %v3949
        %v3951 = vpop.f32.mrb[0].mxu0
        %v3952 = vpop.f32.mrb[0].mxu0
        %v3953 = vadd.f32 0.0, %v3952
        %v3954 = vpop.f32.mrb[0].mxu0
        %3955 = vmatprep.mubr.bf16.mxu0 0
        %3956 = vmatmul.mubr.bf16.gmra.mrb[0].mxu0 %v3660
        %v3957 = vpop.f32.mrb[0].mxu0
        %v3958 = vadd.f32 0.0, %v3957
        %v3959 = vpop.f32.mrb[0].mxu0
        %v3960 = vpop.f32.mrb[0].mxu0
        %v3961 = vadd.f32 0.0, %v3960
        %v3962 = vpop.f32.mrb[0].mxu0
        %3963 = vmatprep.mubr.bf16.mxu0 0
        %3964 = vmatmul.mubr.bf16.gmra.mrb[0].mxu0 %v3662
        %v3965 = vpop.f32.mrb[0].mxu0
        %v3966 = vadd.f32 0.0, %v3965
        %v3967 = vpop.f32.mrb[0].mxu0
        %v3968 = vpop.f32.mrb[0].mxu0
        %v3969 = vadd.f32 0.0, %v3968
        %v3970 = vpop.f32.mrb[0].mxu0
        %3971 = vmatprep.mubr.bf16.mxu0 0
        %3972 = vmatmul.mubr.bf16.gmra.mrb[0].mxu0 %v3664
        %v3973 = vpop.f32.mrb[0].mxu0
        %v3974 = vadd.f32 0.0, %v3973
        %v3975 = vpop.f32.mrb[0].mxu0
        %v3976 = vpop.f32.mrb[0].mxu0
        %v3977 = vadd.f32 0.0, %v3976
        %v3978 = vpop.f32.mrb[0].mxu0
        %3979 = vmatprep.mubr.bf16.mxu0 0
        %3980 = vmatmul.mubr.bf16.gmra.mrb[0].mxu0 %v3666
        %v3981 = vpop.f32.mrb[0].mxu0
        %v3982 = vadd.f32 0.0, %v3981
        %v3983 = vpop.f32.mrb[0].mxu0
        %v3984 = vpop.f32.mrb[0].mxu0
        %v3985 = vadd.f32 0.0, %v3984
        %v3986 = vpop.f32.mrb[0].mxu0
        %3987 = vmatprep.mubr.bf16.mxu0 0
        %3988 = vmatmul.mubr.bf16.gmra.mrb[0].mxu0 %v3668
        %v3989 = vpop.f32.mrb[0].mxu0
        %v3990 = vadd.f32 0.0, %v3989
        %v3991 = vpop.f32.mrb[0].mxu0
        %v3992 = vpop.f32.mrb[0].mxu0
        %v3993 = vadd.f32 0.0, %v3992
        %v3994 = vpop.f32.mrb[0].mxu0
        %3995 = vmatprep.mubr.bf16.mxu0 0
        %3996 = vmatmul.mubr.bf16.gmra.mrb[0].mxu0 %v3670
        %v3997 = vpop.f32.mrb[0].mxu0
        %v3998 = vadd.f32 0.0, %v3997
        %v3999 = vpop.f32.mrb[0].mxu0
        %v4000 = vpop.f32.mrb[0].mxu0
        %v4001 = vadd.f32 0.0, %v4000
        %v4002 = vpop.f32.mrb[0].mxu0
        %4003 = vmatprep.mubr.bf16.mxu0 0
        %4004 = vmatmul.mubr.bf16.gmra.mrb[0].mxu0 %v3672
        %v4005 = vpop.f32.mrb[0].mxu0
        %v4006 = vadd.f32 0.0, %v4005
        %v4007 = vpop.f32.mrb[0].mxu0
        %v4008 = vpop.f32.mrb[0].mxu0
        %v4009 = vadd.f32 0.0, %v4008
        %v4010 = vpop.f32.mrb[0].mxu0
        %4011 = vmatprep.mubr.bf16.mxu0 0
        %4012 = vmatmul.mubr.bf16.gmra.mrb[0].mxu0 %v3674
        %v4013 = vpop.f32.mrb[0].mxu0
        %v4014 = vadd.f32 0.0, %v4013
        %v4015 = vpop.f32.mrb[0].mxu0
        %v4016 = vpop.f32.mrb[0].mxu0
        %v4017 = vadd.f32 0.0, %v4016
        %v4018 = vpop.f32.mrb[0].mxu0
        %4019 = vmatprep.mubr.bf16.mxu0 0
        %4020 = vmatmul.mubr.bf16.gmra.mrb[0].mxu0 %v3676
        %v4021 = vpop.f32.mrb[0].mxu0
        %v4022 = vadd.f32 0.0, %v4021
        %v4023 = vpop.f32.mrb[0].mxu0
        %v4024 = vpop.f32.mrb[0].mxu0
        %v4025 = vadd.f32 0.0, %v4024
        %v4026 = vpop.f32.mrb[0].mxu0
        %4027 = vmatprep.mubr.bf16.mxu0 0
        %4028 = vmatmul.mubr.bf16.gmra.mrb[0].mxu0 %v3678
        %v4029 = vpop.f32.mrb[0].mxu0
        %v4030 = vadd.f32 0.0, %v4029
        %v4031 = vpop.f32.mrb[0].mxu0
        %v4032 = vpop.f32.mrb[0].mxu0
        %v4033 = vadd.f32 0.0, %v4032
        %v4034 = vpop.f32.mrb[0].mxu0
        %4035 = vmatprep.mubr.bf16.mxu0 0
        %4036 = vmatmul.mubr.bf16.gmra.mrb[0].mxu0 %v3680
        %v4037 = vpop.f32.mrb[0].mxu0
        %v4038 = vadd.f32 0.0, %v4037
        %v4039 = vpop.f32.mrb[0].mxu0
        %v4040 = vpop.f32.mrb[0].mxu0
        %v4041 = vadd.f32 0.0, %v4040
        %v4042 = vpop.f32.mrb[0].mxu0
        %4043 = vmatprep.mubr.bf16.mxu0 0
        %4044 = vmatmul.mubr.bf16.gmra.mrb[0].mxu0 %v3682
        %v4045 = vpop.f32.mrb[0].mxu0
        %v4046 = vadd.f32 0.0, %v4045
        %v4047 = vpop.f32.mrb[0].mxu0
        %v4048 = vpop.f32.mrb[0].mxu0
        %v4049 = vadd.f32 0.0, %v4048
        %v4050 = vpop.f32.mrb[0].mxu0
        %4051 = vdwg.mxu0
        %v4052 = vadd.f32 %v3533, %v3798
        %v4053 = vadd.f32 %v3534, %v3801
        %v4054 = vadd.f32 %v3535, %v3806
        %v4055 = vadd.f32 %v3536, %v3809
        %v4056 = vadd.f32 %v3537, %v3814
        %v4057 = vadd.f32 %v3538, %v3817
        %v4058 = vadd.f32 %v3539, %v3822
        %v4059 = vadd.f32 %v3540, %v3825
        %v4060 = vadd.f32 %v3541, %v3830
        %v4061 = vadd.f32 %v3542, %v3833
        %v4062 = vadd.f32 %v3543, %v3838
        %v4063 = vadd.f32 %v3544, %v3841
        %v4064 = vadd.f32 %v3545, %v3846
        %v4065 = vadd.f32 %v3546, %v3849
        %v4066 = vadd.f32 %v3547, %v3854
        %v4067 = vadd.f32 %v3548, %v3857
        %v4068 = vadd.f32 %v3549, %v3862
        %v4069 = vadd.f32 %v3550, %v3865
        %v4070 = vadd.f32 %v3551, %v3870
        %v4071 = vadd.f32 %v3552, %v3873
        %v4072 = vadd.f32 %v3553, %v3878
        %v4073 = vadd.f32 %v3554, %v3881
        %v4074 = vadd.f32 %v3555, %v3886
        %v4075 = vadd.f32 %v3556, %v3889
        %v4076 = vadd.f32 %v3557, %v3894
        %v4077 = vadd.f32 %v3558, %v3897
        %v4078 = vadd.f32 %v3559, %v3902
        %v4079 = vadd.f32 %v3560, %v3905
        %v4080 = vadd.f32 %v3561, %v3910
        %v4081 = vadd.f32 %v3562, %v3913
        %v4082 = vadd.f32 %v3563, %v3918
        %v4083 = vadd.f32 %v3564, %v3921
        %v4084 = vadd.f32 %v3565, %v3926
        %v4085 = vadd.f32 %v3566, %v3929
        %v4086 = vadd.f32 %v3567, %v3934
        %v4087 = vadd.f32 %v3568, %v3937
        %v4088 = vadd.f32 %v3569, %v3942
        %v4089 = vadd.f32 %v3570, %v3945
        %v4090 = vadd.f32 %v3571, %v3950
        %v4091 = vadd.f32 %v3572, %v3953
        %v4092 = vadd.f32 %v3573, %v3958
        %v4093 = vadd.f32 %v3574, %v3961
        %v4094 = vadd.f32 %v3575, %v3966
        %v4095 = vadd.f32 %v3576, %v3969
        %v4096 = vadd.f32 %v3577, %v3974
        %v4097 = vadd.f32 %v3578, %v3977
        %v4098 = vadd.f32 %v3579, %v3982
        %v4099 = vadd.f32 %v3580, %v3985
        %v4100 = vadd.f32 %v3581, %v3990
        %v4101 = vadd.f32 %v3582, %v3993
        %v4102 = vadd.f32 %v3583, %v3998
        %v4103 = vadd.f32 %v3584, %v4001
        %v4104 = vadd.f32 %v3585, %v4006
        %v4105 = vadd.f32 %v3586, %v4009
        %v4106 = vadd.f32 %v3587, %v4014
        %v4107 = vadd.f32 %v3588, %v4017
        %v4108 = vadd.f32 %v3589, %v4022
        %v4109 = vadd.f32 %v3590, %v4025
        %v4110 = vadd.f32 %v3591, %v4030
        %v4111 = vadd.f32 %v3592, %v4033
        %v4112 = vadd.f32 %v3593, %v4038
        %v4113 = vadd.f32 %v3594, %v4041
        %v4114 = vadd.f32 %v3595, %v4046
        %v4115 = vadd.f32 %v3596, %v4049
        %v4116 = vld [vmem:[%s177 + $0x20] sm:$0xf]
        %v4117 = vld [vmem:[%s177 + $0x24] sm:$0xf]
        %v4118 = vld [vmem:[%s177 + $0x28] sm:$0xf]
        %v4119 = vld [vmem:[%s177 + $0x2c] sm:$0xf]
        %v4120 = vld [vmem:[%s177 + $0x30] sm:$0xf]
        %v4121 = vld [vmem:[%s177 + $0x34] sm:$0xf]
        %v4122 = vld [vmem:[%s177 + $0x38] sm:$0xf]
        %v4123 = vld [vmem:[%s177 + $0x3c] sm:$0xf]
        %v4124 = vld [vmem:[%s177 + $0x40] sm:$0xf]
        %v4125 = vld [vmem:[%s177 + $0x44] sm:$0xf]
        %v4126 = vld [vmem:[%s177 + $0x48] sm:$0xf]
        %v4127 = vld [vmem:[%s177 + $0x4c] sm:$0xf]
        %v4128 = vld [vmem:[%s177 + $0x50] sm:$0xf]
        %v4129 = vld [vmem:[%s177 + $0x54] sm:$0xf]
        %v4130 = vld [vmem:[%s177 + $0x58] sm:$0xf]
        %v4131 = vld [vmem:[%s177 + $0x5c] sm:$0xf]
        %v4132 = vld [vmem:[%s177 + $0x60] sm:$0xf]
        %v4133 = vld [vmem:[%s177 + $0x64] sm:$0xf]
        %v4134 = vld [vmem:[%s177 + $0x68] sm:$0xf]
        %v4135 = vld [vmem:[%s177 + $0x6c] sm:$0xf]
        %v4136 = vld [vmem:[%s177 + $0x70] sm:$0xf]
        %v4137 = vld [vmem:[%s177 + $0x74] sm:$0xf]
        %v4138 = vld [vmem:[%s177 + $0x78] sm:$0xf]
        %v4139 = vld [vmem:[%s177 + $0x7c] sm:$0xf]
        %v4140 = vld [vmem:[%s177 + $0x80] sm:$0xf]
        %v4141 = vld [vmem:[%s177 + $0x84] sm:$0xf]
        %v4142 = vld [vmem:[%s177 + $0x88] sm:$0xf]
        %v4143 = vld [vmem:[%s177 + $0x8c] sm:$0xf]
        %v4144 = vld [vmem:[%s177 + $0x90] sm:$0xf]
        %v4145 = vld [vmem:[%s177 + $0x94] sm:$0xf]
        %v4146 = vld [vmem:[%s177 + $0x98] sm:$0xf]
        %v4147 = vld [vmem:[%s177 + $0x9c] sm:$0xf]
        %v4148 = vld [vmem:[%s177 + $0xa0] sm:$0xf]
        %v4149 = vld [vmem:[%s177 + $0xa4] sm:$0xf]
        %v4150 = vld [vmem:[%s177 + $0xa8] sm:$0xf]
        %v4151 = vld [vmem:[%s177 + $0xac] sm:$0xf]
        %v4152 = vld [vmem:[%s177 + $0xb0] sm:$0xf]
        %v4153 = vld [vmem:[%s177 + $0xb4] sm:$0xf]
        %v4154 = vld [vmem:[%s177 + $0xb8] sm:$0xf]
        %v4155 = vld [vmem:[%s177 + $0xbc] sm:$0xf]
        %v4156 = vld [vmem:[%s177 + $0xc0] sm:$0xf]
        %v4157 = vld [vmem:[%s177 + $0xc4] sm:$0xf]
        %v4158 = vld [vmem:[%s177 + $0xc8] sm:$0xf]
        %v4159 = vld [vmem:[%s177 + $0xcc] sm:$0xf]
        %v4160 = vld [vmem:[%s177 + $0xd0] sm:$0xf]
        %v4161 = vld [vmem:[%s177 + $0xd4] sm:$0xf]
        %v4162 = vld [vmem:[%s177 + $0xd8] sm:$0xf]
        %v4163 = vld [vmem:[%s177 + $0xdc] sm:$0xf]
        %v4164 = vld [vmem:[%s177 + $0xe0] sm:$0xf]
        %v4165 = vld [vmem:[%s177 + $0xe4] sm:$0xf]
        %v4166 = vld [vmem:[%s177 + $0xe8] sm:$0xf]
        %v4167 = vld [vmem:[%s177 + $0xec] sm:$0xf]
        %v4168 = vld [vmem:[%s177 + $0xf0] sm:$0xf]
        %v4169 = vld [vmem:[%s177 + $0xf4] sm:$0xf]
        %v4170 = vld [vmem:[%s177 + $0xf8] sm:$0xf]
        %v4171 = vld [vmem:[%s177 + $0xfc] sm:$0xf]
        %v4172 = vld [vmem:[%s177 + $0x100] sm:$0xf]
        %v4173 = vld [vmem:[%s177 + $0x104] sm:$0xf]
        %v4174 = vld [vmem:[%s177 + $0x108] sm:$0xf]
        %v4175 = vld [vmem:[%s177 + $0x10c] sm:$0xf]
        %v4176 = vld [vmem:[%s177 + $0x110] sm:$0xf]
        %v4177 = vld [vmem:[%s177 + $0x114] sm:$0xf]
        %v4178 = vld [vmem:[%s177 + $0x118] sm:$0xf]
        %v4179 = vld [vmem:[%s177 + $0x11c] sm:$0xf]
        %s4180 = scalar_lea.vmem [#allocation5], 384
        %v4181 = vld [vmem:[%s4180] sm:$0xf]
        %v4182 = vld [vmem:[%s4180 + $0x4] sm:$0xf]
        %v4183 = vld [vmem:[%s4180 + $0x8] sm:$0xf]
        %v4184 = vld [vmem:[%s4180 + $0xc] sm:$0xf]
        %v4185 = vld [vmem:[%s4180 + $0x10] sm:$0xf]
        %v4186 = vld [vmem:[%s4180 + $0x14] sm:$0xf]
        %v4187 = vld [vmem:[%s4180 + $0x18] sm:$0xf]
        %v4188 = vld [vmem:[%s4180 + $0x1c] sm:$0xf]
        %v4189 = vld [vmem:[%s4180 + $0x20] sm:$0xf]
        %v4190 = vld [vmem:[%s4180 + $0x24] sm:$0xf]
        %v4191 = vld [vmem:[%s4180 + $0x28] sm:$0xf]
        %v4192 = vld [vmem:[%s4180 + $0x2c] sm:$0xf]
        %v4193 = vld [vmem:[%s4180 + $0x30] sm:$0xf]
        %v4194 = vld [vmem:[%s4180 + $0x34] sm:$0xf]
        %v4195 = vld [vmem:[%s4180 + $0x38] sm:$0xf]
        %v4196 = vld [vmem:[%s4180 + $0x3c] sm:$0xf]
        %v4261 = vunpack.c.l.b16 %v4116
        %v4262 = vunpack.c.l.b16 %v4117
        %v4263 = vunpack.c.l.b16 %v4118
        %v4264 = vunpack.c.l.b16 %v4119
        %v4265 = vunpack.c.l.b16 %v4120
        %v4266 = vunpack.c.l.b16 %v4121
        %v4267 = vunpack.c.l.b16 %v4122
        %v4268 = vunpack.c.l.b16 %v4123
        %v4269 = vunpack.c.l.b16 %v4124
        %v4270 = vunpack.c.l.b16 %v4125
        %v4271 = vunpack.c.l.b16 %v4126
        %v4272 = vunpack.c.l.b16 %v4127
        %v4273 = vunpack.c.l.b16 %v4128
        %v4274 = vunpack.c.l.b16 %v4129
        %v4275 = vunpack.c.l.b16 %v4130
        %v4276 = vunpack.c.l.b16 %v4131
        %v4277 = vunpack.c.l.b16 %v4132
        %v4278 = vunpack.c.l.b16 %v4133
        %v4279 = vunpack.c.l.b16 %v4134
        %v4280 = vunpack.c.l.b16 %v4135
        %v4281 = vunpack.c.l.b16 %v4136
        %v4282 = vunpack.c.l.b16 %v4137
        %v4283 = vunpack.c.l.b16 %v4138
        %v4284 = vunpack.c.l.b16 %v4139
        %v4285 = vunpack.c.l.b16 %v4140
        %v4286 = vunpack.c.l.b16 %v4141
        %v4287 = vunpack.c.l.b16 %v4142
        %v4288 = vunpack.c.l.b16 %v4143
        %v4289 = vunpack.c.l.b16 %v4144
        %v4290 = vunpack.c.l.b16 %v4145
        %v4291 = vunpack.c.l.b16 %v4146
        %v4292 = vunpack.c.l.b16 %v4147
        %v4293 = vunpack.c.l.b16 %v4148
        %v4294 = vunpack.c.l.b16 %v4149
        %v4295 = vunpack.c.l.b16 %v4150
        %v4296 = vunpack.c.l.b16 %v4151
        %v4297 = vunpack.c.l.b16 %v4152
        %v4298 = vunpack.c.l.b16 %v4153
        %v4299 = vunpack.c.l.b16 %v4154
        %v4300 = vunpack.c.l.b16 %v4155
        %v4301 = vunpack.c.l.b16 %v4156
        %v4302 = vunpack.c.l.b16 %v4157
        %v4303 = vunpack.c.l.b16 %v4158
        %v4304 = vunpack.c.l.b16 %v4159
        %v4305 = vunpack.c.l.b16 %v4160
        %v4306 = vunpack.c.l.b16 %v4161
        %v4307 = vunpack.c.l.b16 %v4162
        %v4308 = vunpack.c.l.b16 %v4163
        %v4309 = vunpack.c.l.b16 %v4164
        %v4310 = vunpack.c.l.b16 %v4165
        %v4311 = vunpack.c.l.b16 %v4166
        %v4312 = vunpack.c.l.b16 %v4167
        %v4313 = vunpack.c.l.b16 %v4168
        %v4314 = vunpack.c.l.b16 %v4169
        %v4315 = vunpack.c.l.b16 %v4170
        %v4316 = vunpack.c.l.b16 %v4171
        %v4317 = vunpack.c.l.b16 %v4172
        %v4318 = vunpack.c.l.b16 %v4173
        %v4319 = vunpack.c.l.b16 %v4174
        %v4320 = vunpack.c.l.b16 %v4175
        %v4321 = vunpack.c.l.b16 %v4176
        %v4322 = vunpack.c.l.b16 %v4177
        %v4323 = vunpack.c.l.b16 %v4178
        %v4324 = vunpack.c.l.b16 %v4179
        %v4325 = vpack.c.b16 %v4262, %v4261
        %v4326 = vpack.c.b16 %v4264, %v4263
        %v4327 = vpack.c.b16 %v4266, %v4265
        %v4328 = vpack.c.b16 %v4268, %v4267
        %v4329 = vpack.c.b16 %v4270, %v4269
        %v4330 = vpack.c.b16 %v4272, %v4271
        %v4331 = vpack.c.b16 %v4274, %v4273
        %v4332 = vpack.c.b16 %v4276, %v4275
        %v4333 = vpack.c.b16 %v4278, %v4277
        %v4334 = vpack.c.b16 %v4280, %v4279
        %v4335 = vpack.c.b16 %v4282, %v4281
        %v4336 = vpack.c.b16 %v4284, %v4283
        %v4337 = vpack.c.b16 %v4286, %v4285
        %v4338 = vpack.c.b16 %v4288, %v4287
        %v4339 = vpack.c.b16 %v4290, %v4289
        %v4340 = vpack.c.b16 %v4292, %v4291
        %v4341 = vpack.c.b16 %v4294, %v4293
        %v4342 = vpack.c.b16 %v4296, %v4295
        %v4343 = vpack.c.b16 %v4298, %v4297
        %v4344 = vpack.c.b16 %v4300, %v4299
        %v4345 = vpack.c.b16 %v4302, %v4301
        %v4346 = vpack.c.b16 %v4304, %v4303
        %v4347 = vpack.c.b16 %v4306, %v4305
        %v4348 = vpack.c.b16 %v4308, %v4307
        %v4349 = vpack.c.b16 %v4310, %v4309
        %v4350 = vpack.c.b16 %v4312, %v4311
        %v4351 = vpack.c.b16 %v4314, %v4313
        %v4352 = vpack.c.b16 %v4316, %v4315
        %v4353 = vpack.c.b16 %v4318, %v4317
        %v4354 = vpack.c.b16 %v4320, %v4319
        %v4355 = vpack.c.b16 %v4322, %v4321
        %v4356 = vpack.c.b16 %v4324, %v4323
        %v4405 = vunpack.c.l.b16 %v4181
        %v4406 = vunpack.c.l.b16 %v4182
        %v4407 = vunpack.c.l.b16 %v4183
        %v4408 = vunpack.c.l.b16 %v4184
        %v4409 = vunpack.c.l.b16 %v4185
        %v4410 = vunpack.c.l.b16 %v4186
        %v4411 = vunpack.c.l.b16 %v4187
        %v4412 = vunpack.c.l.b16 %v4188
        %v4413 = vunpack.c.l.b16 %v4189
        %v4414 = vunpack.c.l.b16 %v4190
        %v4415 = vunpack.c.l.b16 %v4191
        %v4416 = vunpack.c.l.b16 %v4192
        %v4417 = vunpack.c.l.b16 %v4193
        %v4418 = vunpack.c.l.b16 %v4194
        %v4419 = vunpack.c.l.b16 %v4195
        %v4420 = vunpack.c.l.b16 %v4196
        %v4421 = vpack.c.b16 %v4406, %v4405
        %v4422 = vpack.c.b16 %v4408, %v4407
        %v4423 = vpack.c.b16 %v4410, %v4409
        %v4424 = vpack.c.b16 %v4412, %v4411
        %v4425 = vpack.c.b16 %v4414, %v4413
        %v4426 = vpack.c.b16 %v4416, %v4415
        %v4427 = vpack.c.b16 %v4418, %v4417
        %v4428 = vpack.c.b16 %v4420, %v4419
        %4437 = vmatprep.subr.bf16.mxu0 0
        %4438 = vmatpush1.bf16.msra.mxu0 %v4421
        %4439 = vmatprep.subr.bf16.mxu0 0
        %4440 = vmatpush1.bf16.msra.mxu0 %v4422
        %4441 = vmatprep.subr.bf16.mxu0 0
        %4442 = vmatpush1.bf16.msra.mxu0 %v4423
        %4443 = vmatprep.subr.bf16.mxu0 0
        %4444 = vmatpush1.bf16.msra.mxu0 %v4424
        %4445 = vmatprep.subr.bf16.mxu0 0
        %4446 = vmatpush1.bf16.msra.mxu0 %v4425
        %4447 = vmatprep.subr.bf16.mxu0 0
        %4448 = vmatpush1.bf16.msra.mxu0 %v4426
        %4449 = vmatprep.subr.bf16.mxu0 0
        %4450 = vmatpush1.bf16.msra.mxu0 %v4427
        %4451 = vmatprep.subr.bf16.mxu0 0
        %4452 = vmatpush1.bf16.msra.mxu0 %v4428
        %4453 = vmatprep.subr.bf16.mxu0 0
        %4454 = vmatpush1.bf16.msra.mxu0 0
        %4455 = vmatprep.subr.bf16.mxu0 0
        %4456 = vmatpush1.bf16.msra.mxu0 0
        %4457 = vmatprep.subr.bf16.mxu0 0
        %4458 = vmatpush1.bf16.msra.mxu0 0
        %4459 = vmatprep.subr.bf16.mxu0 0
        %4460 = vmatpush1.bf16.msra.mxu0 0
        %4461 = vmatprep.subr.bf16.mxu0 0
        %4462 = vmatpush1.bf16.msra.mxu0 0
        %4463 = vmatprep.subr.bf16.mxu0 0
        %4464 = vmatpush1.bf16.msra.mxu0 0
        %4465 = vmatprep.subr.bf16.mxu0 0
        %4466 = vmatpush1.bf16.msra.mxu0 0
        %4467 = vmatprep.subr.bf16.mxu0 0
        %4468 = vmatpush1.bf16.msra.mxu0 0
        %4469 = vmatprep.mubr.bf16.mxu0 0
        %4470 = vmatmul.mubr.bf16.gmra.mrb[0].mxu0 %v4325
        %v4471 = vpop.f32.mrb[0].mxu0
        %v4472 = vadd.f32 0.0, %v4471
        %v4473 = vpop.f32.mrb[0].mxu0
        %v4474 = vpop.f32.mrb[0].mxu0
        %v4475 = vadd.f32 0.0, %v4474
        %v4476 = vpop.f32.mrb[0].mxu0
        %4477 = vmatprep.mubr.bf16.mxu0 0
        %4478 = vmatmul.mubr.bf16.gmra.mrb[0].mxu0 %v4326
        %v4479 = vpop.f32.mrb[0].mxu0
        %v4480 = vadd.f32 0.0, %v4479
        %v4481 = vpop.f32.mrb[0].mxu0
        %v4482 = vpop.f32.mrb[0].mxu0
        %v4483 = vadd.f32 0.0, %v4482
        %v4484 = vpop.f32.mrb[0].mxu0
        %4485 = vmatprep.mubr.bf16.mxu0 0
        %4486 = vmatmul.mubr.bf16.gmra.mrb[0].mxu0 %v4327
        %v4487 = vpop.f32.mrb[0].mxu0
        %v4488 = vadd.f32 0.0, %v4487
        %v4489 = vpop.f32.mrb[0].mxu0
        %v4490 = vpop.f32.mrb[0].mxu0
        %v4491 = vadd.f32 0.0, %v4490
        %v4492 = vpop.f32.mrb[0].mxu0
        %4493 = vmatprep.mubr.bf16.mxu0 0
        %4494 = vmatmul.mubr.bf16.gmra.mrb[0].mxu0 %v4328
        %v4495 = vpop.f32.mrb[0].mxu0
        %v4496 = vadd.f32 0.0, %v4495
        %v4497 = vpop.f32.mrb[0].mxu0
        %v4498 = vpop.f32.mrb[0].mxu0
        %v4499 = vadd.f32 0.0, %v4498
        %v4500 = vpop.f32.mrb[0].mxu0
        %4501 = vmatprep.mubr.bf16.mxu0 0
        %4502 = vmatmul.mubr.bf16.gmra.mrb[0].mxu0 %v4329
        %v4503 = vpop.f32.mrb[0].mxu0
        %v4504 = vadd.f32 0.0, %v4503
        %v4505 = vpop.f32.mrb[0].mxu0
        %v4506 = vpop.f32.mrb[0].mxu0
        %v4507 = vadd.f32 0.0, %v4506
        %v4508 = vpop.f32.mrb[0].mxu0
        %4509 = vmatprep.mubr.bf16.mxu0 0
        %4510 = vmatmul.mubr.bf16.gmra.mrb[0].mxu0 %v4330
        %v4511 = vpop.f32.mrb[0].mxu0
        %v4512 = vadd.f32 0.0, %v4511
        %v4513 = vpop.f32.mrb[0].mxu0
        %v4514 = vpop.f32.mrb[0].mxu0
        %v4515 = vadd.f32 0.0, %v4514
        %v4516 = vpop.f32.mrb[0].mxu0
        %4517 = vmatprep.mubr.bf16.mxu0 0
        %4518 = vmatmul.mubr.bf16.gmra.mrb[0].mxu0 %v4331
        %v4519 = vpop.f32.mrb[0].mxu0
        %v4520 = vadd.f32 0.0, %v4519
        %v4521 = vpop.f32.mrb[0].mxu0
        %v4522 = vpop.f32.mrb[0].mxu0
        %v4523 = vadd.f32 0.0, %v4522
        %v4524 = vpop.f32.mrb[0].mxu0
        %4525 = vmatprep.mubr.bf16.mxu0 0
        %4526 = vmatmul.mubr.bf16.gmra.mrb[0].mxu0 %v4332
        %v4527 = vpop.f32.mrb[0].mxu0
        %v4528 = vadd.f32 0.0, %v4527
        %v4529 = vpop.f32.mrb[0].mxu0
        %v4530 = vpop.f32.mrb[0].mxu0
        %v4531 = vadd.f32 0.0, %v4530
        %v4532 = vpop.f32.mrb[0].mxu0
        %4533 = vmatprep.mubr.bf16.mxu0 0
        %4534 = vmatmul.mubr.bf16.gmra.mrb[0].mxu0 %v4333
        %v4535 = vpop.f32.mrb[0].mxu0
        %v4536 = vadd.f32 0.0, %v4535
        %v4537 = vpop.f32.mrb[0].mxu0
        %v4538 = vpop.f32.mrb[0].mxu0
        %v4539 = vadd.f32 0.0, %v4538
        %v4540 = vpop.f32.mrb[0].mxu0
        %4541 = vmatprep.mubr.bf16.mxu0 0
        %4542 = vmatmul.mubr.bf16.gmra.mrb[0].mxu0 %v4334
        %v4543 = vpop.f32.mrb[0].mxu0
        %v4544 = vadd.f32 0.0, %v4543
        %v4545 = vpop.f32.mrb[0].mxu0
        %v4546 = vpop.f32.mrb[0].mxu0
        %v4547 = vadd.f32 0.0, %v4546
        %v4548 = vpop.f32.mrb[0].mxu0
        %4549 = vmatprep.mubr.bf16.mxu0 0
        %4550 = vmatmul.mubr.bf16.gmra.mrb[0].mxu0 %v4335
        %v4551 = vpop.f32.mrb[0].mxu0
        %v4552 = vadd.f32 0.0, %v4551
        %v4553 = vpop.f32.mrb[0].mxu0
        %v4554 = vpop.f32.mrb[0].mxu0
        %v4555 = vadd.f32 0.0, %v4554
        %v4556 = vpop.f32.mrb[0].mxu0
        %4557 = vmatprep.mubr.bf16.mxu0 0
        %4558 = vmatmul.mubr.bf16.gmra.mrb[0].mxu0 %v4336
        %v4559 = vpop.f32.mrb[0].mxu0
        %v4560 = vadd.f32 0.0, %v4559
        %v4561 = vpop.f32.mrb[0].mxu0
        %v4562 = vpop.f32.mrb[0].mxu0
        %v4563 = vadd.f32 0.0, %v4562
        %v4564 = vpop.f32.mrb[0].mxu0
        %4565 = vmatprep.mubr.bf16.mxu0 0
        %4566 = vmatmul.mubr.bf16.gmra.mrb[0].mxu0 %v4337
        %v4567 = vpop.f32.mrb[0].mxu0
        %v4568 = vadd.f32 0.0, %v4567
        %v4569 = vpop.f32.mrb[0].mxu0
        %v4570 = vpop.f32.mrb[0].mxu0
        %v4571 = vadd.f32 0.0, %v4570
        %v4572 = vpop.f32.mrb[0].mxu0
        %4573 = vmatprep.mubr.bf16.mxu0 0
        %4574 = vmatmul.mubr.bf16.gmra.mrb[0].mxu0 %v4338
        %v4575 = vpop.f32.mrb[0].mxu0
        %v4576 = vadd.f32 0.0, %v4575
        %v4577 = vpop.f32.mrb[0].mxu0
        %v4578 = vpop.f32.mrb[0].mxu0
        %v4579 = vadd.f32 0.0, %v4578
        %v4580 = vpop.f32.mrb[0].mxu0
        %4581 = vmatprep.mubr.bf16.mxu0 0
        %4582 = vmatmul.mubr.bf16.gmra.mrb[0].mxu0 %v4339
        %v4583 = vpop.f32.mrb[0].mxu0
        %v4584 = vadd.f32 0.0, %v4583
        %v4585 = vpop.f32.mrb[0].mxu0
        %v4586 = vpop.f32.mrb[0].mxu0
        %v4587 = vadd.f32 0.0, %v4586
        %v4588 = vpop.f32.mrb[0].mxu0
        %4589 = vmatprep.mubr.bf16.mxu0 0
        %4590 = vmatmul.mubr.bf16.gmra.mrb[0].mxu0 %v4340
        %v4591 = vpop.f32.mrb[0].mxu0
        %v4592 = vadd.f32 0.0, %v4591
        %v4593 = vpop.f32.mrb[0].mxu0
        %v4594 = vpop.f32.mrb[0].mxu0
        %v4595 = vadd.f32 0.0, %v4594
        %v4596 = vpop.f32.mrb[0].mxu0
        %4597 = vmatprep.mubr.bf16.mxu0 0
        %4598 = vmatmul.mubr.bf16.gmra.mrb[0].mxu0 %v4341
        %v4599 = vpop.f32.mrb[0].mxu0
        %v4600 = vadd.f32 0.0, %v4599
        %v4601 = vpop.f32.mrb[0].mxu0
        %v4602 = vpop.f32.mrb[0].mxu0
        %v4603 = vadd.f32 0.0, %v4602
        %v4604 = vpop.f32.mrb[0].mxu0
        %4605 = vmatprep.mubr.bf16.mxu0 0
        %4606 = vmatmul.mubr.bf16.gmra.mrb[0].mxu0 %v4342
        %v4607 = vpop.f32.mrb[0].mxu0
        %v4608 = vadd.f32 0.0, %v4607
        %v4609 = vpop.f32.mrb[0].mxu0
        %v4610 = vpop.f32.mrb[0].mxu0
        %v4611 = vadd.f32 0.0, %v4610
        %v4612 = vpop.f32.mrb[0].mxu0
        %4613 = vmatprep.mubr.bf16.mxu0 0
        %4614 = vmatmul.mubr.bf16.gmra.mrb[0].mxu0 %v4343
        %v4615 = vpop.f32.mrb[0].mxu0
        %v4616 = vadd.f32 0.0, %v4615
        %v4617 = vpop.f32.mrb[0].mxu0
        %v4618 = vpop.f32.mrb[0].mxu0
        %v4619 = vadd.f32 0.0, %v4618
        %v4620 = vpop.f32.mrb[0].mxu0
        %4621 = vmatprep.mubr.bf16.mxu0 0
        %4622 = vmatmul.mubr.bf16.gmra.mrb[0].mxu0 %v4344
        %v4623 = vpop.f32.mrb[0].mxu0
        %v4624 = vadd.f32 0.0, %v4623
        %v4625 = vpop.f32.mrb[0].mxu0
        %v4626 = vpop.f32.mrb[0].mxu0
        %v4627 = vadd.f32 0.0, %v4626
        %v4628 = vpop.f32.mrb[0].mxu0
        %4629 = vmatprep.mubr.bf16.mxu0 0
        %4630 = vmatmul.mubr.bf16.gmra.mrb[0].mxu0 %v4345
        %v4631 = vpop.f32.mrb[0].mxu0
        %v4632 = vadd.f32 0.0, %v4631
        %v4633 = vpop.f32.mrb[0].mxu0
        %v4634 = vpop.f32.mrb[0].mxu0
        %v4635 = vadd.f32 0.0, %v4634
        %v4636 = vpop.f32.mrb[0].mxu0
        %4637 = vmatprep.mubr.bf16.mxu0 0
        %4638 = vmatmul.mubr.bf16.gmra.mrb[0].mxu0 %v4346
        %v4639 = vpop.f32.mrb[0].mxu0
        %v4640 = vadd.f32 0.0, %v4639
        %v4641 = vpop.f32.mrb[0].mxu0
        %v4642 = vpop.f32.mrb[0].mxu0
        %v4643 = vadd.f32 0.0, %v4642
        %v4644 = vpop.f32.mrb[0].mxu0
        %4645 = vmatprep.mubr.bf16.mxu0 0
        %4646 = vmatmul.mubr.bf16.gmra.mrb[0].mxu0 %v4347
        %v4647 = vpop.f32.mrb[0].mxu0
        %v4648 = vadd.f32 0.0, %v4647
        %v4649 = vpop.f32.mrb[0].mxu0
        %v4650 = vpop.f32.mrb[0].mxu0
        %v4651 = vadd.f32 0.0, %v4650
        %v4652 = vpop.f32.mrb[0].mxu0
        %4653 = vmatprep.mubr.bf16.mxu0 0
        %4654 = vmatmul.mubr.bf16.gmra.mrb[0].mxu0 %v4348
        %v4655 = vpop.f32.mrb[0].mxu0
        %v4656 = vadd.f32 0.0, %v4655
        %v4657 = vpop.f32.mrb[0].mxu0
        %v4658 = vpop.f32.mrb[0].mxu0
        %v4659 = vadd.f32 0.0, %v4658
        %v4660 = vpop.f32.mrb[0].mxu0
        %4661 = vmatprep.mubr.bf16.mxu0 0
        %4662 = vmatmul.mubr.bf16.gmra.mrb[0].mxu0 %v4349
        %v4663 = vpop.f32.mrb[0].mxu0
        %v4664 = vadd.f32 0.0, %v4663
        %v4665 = vpop.f32.mrb[0].mxu0
        %v4666 = vpop.f32.mrb[0].mxu0
        %v4667 = vadd.f32 0.0, %v4666
        %v4668 = vpop.f32.mrb[0].mxu0
        %4669 = vmatprep.mubr.bf16.mxu0 0
        %4670 = vmatmul.mubr.bf16.gmra.mrb[0].mxu0 %v4350
        %v4671 = vpop.f32.mrb[0].mxu0
        %v4672 = vadd.f32 0.0, %v4671
        %v4673 = vpop.f32.mrb[0].mxu0
        %v4674 = vpop.f32.mrb[0].mxu0
        %v4675 = vadd.f32 0.0, %v4674
        %v4676 = vpop.f32.mrb[0].mxu0
        %4677 = vmatprep.mubr.bf16.mxu0 0
        %4678 = vmatmul.mubr.bf16.gmra.mrb[0].mxu0 %v4351
        %v4679 = vpop.f32.mrb[0].mxu0
        %v4680 = vadd.f32 0.0, %v4679
        %v4681 = vpop.f32.mrb[0].mxu0
        %v4682 = vpop.f32.mrb[0].mxu0
        %v4683 = vadd.f32 0.0, %v4682
        %v4684 = vpop.f32.mrb[0].mxu0
        %4685 = vmatprep.mubr.bf16.mxu0 0
        %4686 = vmatmul.mubr.bf16.gmra.mrb[0].mxu0 %v4352
        %v4687 = vpop.f32.mrb[0].mxu0
        %v4688 = vadd.f32 0.0, %v4687
        %v4689 = vpop.f32.mrb[0].mxu0
        %v4690 = vpop.f32.mrb[0].mxu0
        %v4691 = vadd.f32 0.0, %v4690
        %v4692 = vpop.f32.mrb[0].mxu0
        %4693 = vmatprep.mubr.bf16.mxu0 0
        %4694 = vmatmul.mubr.bf16.gmra.mrb[0].mxu0 %v4353
        %v4695 = vpop.f32.mrb[0].mxu0
        %v4696 = vadd.f32 0.0, %v4695
        %v4697 = vpop.f32.mrb[0].mxu0
        %v4698 = vpop.f32.mrb[0].mxu0
        %v4699 = vadd.f32 0.0, %v4698
        %v4700 = vpop.f32.mrb[0].mxu0
        %4701 = vmatprep.mubr.bf16.mxu0 0
        %4702 = vmatmul.mubr.bf16.gmra.mrb[0].mxu0 %v4354
        %v4703 = vpop.f32.mrb[0].mxu0
        %v4704 = vadd.f32 0.0, %v4703
        %v4705 = vpop.f32.mrb[0].mxu0
        %v4706 = vpop.f32.mrb[0].mxu0
        %v4707 = vadd.f32 0.0, %v4706
        %v4708 = vpop.f32.mrb[0].mxu0
        %4709 = vmatprep.mubr.bf16.mxu0 0
        %4710 = vmatmul.mubr.bf16.gmra.mrb[0].mxu0 %v4355
        %v4711 = vpop.f32.mrb[0].mxu0
        %v4712 = vadd.f32 0.0, %v4711
        %v4713 = vpop.f32.mrb[0].mxu0
        %v4714 = vpop.f32.mrb[0].mxu0
        %v4715 = vadd.f32 0.0, %v4714
        %v4716 = vpop.f32.mrb[0].mxu0
        %4717 = vmatprep.mubr.bf16.mxu0 0
        %4718 = vmatmul.mubr.bf16.gmra.mrb[0].mxu0 %v4356
        %v4719 = vpop.f32.mrb[0].mxu0
        %v4720 = vadd.f32 0.0, %v4719
        %v4721 = vpop.f32.mrb[0].mxu0
        %v4722 = vpop.f32.mrb[0].mxu0
        %v4723 = vadd.f32 0.0, %v4722
        %v4724 = vpop.f32.mrb[0].mxu0
        %4725 = vdwg.mxu0
        %v4726 = vadd.f32 %v4052, %v4472
        %v4727 = vadd.f32 %v4053, %v4475
        %v4728 = vadd.f32 %v4054, %v4480
        %v4729 = vadd.f32 %v4055, %v4483
        %v4730 = vadd.f32 %v4056, %v4488
        %v4731 = vadd.f32 %v4057, %v4491
        %v4732 = vadd.f32 %v4058, %v4496
        %v4733 = vadd.f32 %v4059, %v4499
        %v4734 = vadd.f32 %v4060, %v4504
        %v4735 = vadd.f32 %v4061, %v4507
        %v4736 = vadd.f32 %v4062, %v4512
        %v4737 = vadd.f32 %v4063, %v4515
        %v4738 = vadd.f32 %v4064, %v4520
        %v4739 = vadd.f32 %v4065, %v4523
        %v4740 = vadd.f32 %v4066, %v4528
        %v4741 = vadd.f32 %v4067, %v4531
        %v4742 = vadd.f32 %v4068, %v4536
        %v4743 = vadd.f32 %v4069, %v4539
        %v4744 = vadd.f32 %v4070, %v4544
        %v4745 = vadd.f32 %v4071, %v4547
        %v4746 = vadd.f32 %v4072, %v4552
        %v4747 = vadd.f32 %v4073, %v4555
        %v4748 = vadd.f32 %v4074, %v4560
        %v4749 = vadd.f32 %v4075, %v4563
        %v4750 = vadd.f32 %v4076, %v4568
        %v4751 = vadd.f32 %v4077, %v4571
        %v4752 = vadd.f32 %v4078, %v4576
        %v4753 = vadd.f32 %v4079, %v4579
        %v4754 = vadd.f32 %v4080, %v4584
        %v4755 = vadd.f32 %v4081, %v4587
        %v4756 = vadd.f32 %v4082, %v4592
        %v4757 = vadd.f32 %v4083, %v4595
        %v4758 = vadd.f32 %v4084, %v4600
        %v4759 = vadd.f32 %v4085, %v4603
        %v4760 = vadd.f32 %v4086, %v4608
        %v4761 = vadd.f32 %v4087, %v4611
        %v4762 = vadd.f32 %v4088, %v4616
        %v4763 = vadd.f32 %v4089, %v4619
        %v4764 = vadd.f32 %v4090, %v4624
        %v4765 = vadd.f32 %v4091, %v4627
        %v4766 = vadd.f32 %v4092, %v4632
        %v4767 = vadd.f32 %v4093, %v4635
        %v4768 = vadd.f32 %v4094, %v4640
        %v4769 = vadd.f32 %v4095, %v4643
        %v4770 = vadd.f32 %v4096, %v4648
        %v4771 = vadd.f32 %v4097, %v4651
        %v4772 = vadd.f32 %v4098, %v4656
        %v4773 = vadd.f32 %v4099, %v4659
        %v4774 = vadd.f32 %v4100, %v4664
        %v4775 = vadd.f32 %v4101, %v4667
        %v4776 = vadd.f32 %v4102, %v4672
        %v4777 = vadd.f32 %v4103, %v4675
        %v4778 = vadd.f32 %v4104, %v4680
        %v4779 = vadd.f32 %v4105, %v4683
        %v4780 = vadd.f32 %v4106, %v4688
        %v4781 = vadd.f32 %v4107, %v4691
        %v4782 = vadd.f32 %v4108, %v4696
        %v4783 = vadd.f32 %v4109, %v4699
        %v4784 = vadd.f32 %v4110, %v4704
        %v4785 = vadd.f32 %v4111, %v4707
        %v4786 = vadd.f32 %v4112, %v4712
        %v4787 = vadd.f32 %v4113, %v4715
        %v4788 = vadd.f32 %v4114, %v4720
        %v4789 = vadd.f32 %v4115, %v4723
        %v4790 = vld [vmem:[%s177 + $0x20] sm:$0xf]
        %v4791 = vld [vmem:[%s177 + $0x24] sm:$0xf]
        %v4792 = vld [vmem:[%s177 + $0x28] sm:$0xf]
        %v4793 = vld [vmem:[%s177 + $0x2c] sm:$0xf]
        %v4794 = vld [vmem:[%s177 + $0x30] sm:$0xf]
        %v4795 = vld [vmem:[%s177 + $0x34] sm:$0xf]
        %v4796 = vld [vmem:[%s177 + $0x38] sm:$0xf]
        %v4797 = vld [vmem:[%s177 + $0x3c] sm:$0xf]
        %v4798 = vld [vmem:[%s177 + $0x40] sm:$0xf]
        %v4799 = vld [vmem:[%s177 + $0x44] sm:$0xf]
        %v4800 = vld [vmem:[%s177 + $0x48] sm:$0xf]
        %v4801 = vld [vmem:[%s177 + $0x4c] sm:$0xf]
        %v4802 = vld [vmem:[%s177 + $0x50] sm:$0xf]
        %v4803 = vld [vmem:[%s177 + $0x54] sm:$0xf]
        %v4804 = vld [vmem:[%s177 + $0x58] sm:$0xf]
        %v4805 = vld [vmem:[%s177 + $0x5c] sm:$0xf]
        %v4806 = vld [vmem:[%s177 + $0x60] sm:$0xf]
        %v4807 = vld [vmem:[%s177 + $0x64] sm:$0xf]
        %v4808 = vld [vmem:[%s177 + $0x68] sm:$0xf]
        %v4809 = vld [vmem:[%s177 + $0x6c] sm:$0xf]
        %v4810 = vld [vmem:[%s177 + $0x70] sm:$0xf]
        %v4811 = vld [vmem:[%s177 + $0x74] sm:$0xf]
        %v4812 = vld [vmem:[%s177 + $0x78] sm:$0xf]
        %v4813 = vld [vmem:[%s177 + $0x7c] sm:$0xf]
        %v4814 = vld [vmem:[%s177 + $0x80] sm:$0xf]
        %v4815 = vld [vmem:[%s177 + $0x84] sm:$0xf]
        %v4816 = vld [vmem:[%s177 + $0x88] sm:$0xf]
        %v4817 = vld [vmem:[%s177 + $0x8c] sm:$0xf]
        %v4818 = vld [vmem:[%s177 + $0x90] sm:$0xf]
        %v4819 = vld [vmem:[%s177 + $0x94] sm:$0xf]
        %v4820 = vld [vmem:[%s177 + $0x98] sm:$0xf]
        %v4821 = vld [vmem:[%s177 + $0x9c] sm:$0xf]
        %v4822 = vld [vmem:[%s177 + $0xa0] sm:$0xf]
        %v4823 = vld [vmem:[%s177 + $0xa4] sm:$0xf]
        %v4824 = vld [vmem:[%s177 + $0xa8] sm:$0xf]
        %v4825 = vld [vmem:[%s177 + $0xac] sm:$0xf]
        %v4826 = vld [vmem:[%s177 + $0xb0] sm:$0xf]
        %v4827 = vld [vmem:[%s177 + $0xb4] sm:$0xf]
        %v4828 = vld [vmem:[%s177 + $0xb8] sm:$0xf]
        %v4829 = vld [vmem:[%s177 + $0xbc] sm:$0xf]
        %v4830 = vld [vmem:[%s177 + $0xc0] sm:$0xf]
        %v4831 = vld [vmem:[%s177 + $0xc4] sm:$0xf]
        %v4832 = vld [vmem:[%s177 + $0xc8] sm:$0xf]
        %v4833 = vld [vmem:[%s177 + $0xcc] sm:$0xf]
        %v4834 = vld [vmem:[%s177 + $0xd0] sm:$0xf]
        %v4835 = vld [vmem:[%s177 + $0xd4] sm:$0xf]
        %v4836 = vld [vmem:[%s177 + $0xd8] sm:$0xf]
        %v4837 = vld [vmem:[%s177 + $0xdc] sm:$0xf]
        %v4838 = vld [vmem:[%s177 + $0xe0] sm:$0xf]
        %v4839 = vld [vmem:[%s177 + $0xe4] sm:$0xf]
        %v4840 = vld [vmem:[%s177 + $0xe8] sm:$0xf]
        %v4841 = vld [vmem:[%s177 + $0xec] sm:$0xf]
        %v4842 = vld [vmem:[%s177 + $0xf0] sm:$0xf]
        %v4843 = vld [vmem:[%s177 + $0xf4] sm:$0xf]
        %v4844 = vld [vmem:[%s177 + $0xf8] sm:$0xf]
        %v4845 = vld [vmem:[%s177 + $0xfc] sm:$0xf]
        %v4846 = vld [vmem:[%s177 + $0x100] sm:$0xf]
        %v4847 = vld [vmem:[%s177 + $0x104] sm:$0xf]
        %v4848 = vld [vmem:[%s177 + $0x108] sm:$0xf]
        %v4849 = vld [vmem:[%s177 + $0x10c] sm:$0xf]
        %v4850 = vld [vmem:[%s177 + $0x110] sm:$0xf]
        %v4851 = vld [vmem:[%s177 + $0x114] sm:$0xf]
        %v4852 = vld [vmem:[%s177 + $0x118] sm:$0xf]
        %v4853 = vld [vmem:[%s177 + $0x11c] sm:$0xf]
        %v4854 = vld [vmem:[%s177 + $0x120] sm:$0x1]
        %s4855 = scalar_lea.vmem [#allocation5], 448
        %v4856 = vld [vmem:[%s4855] sm:$0xf]
        %v4857 = vld [vmem:[%s4855 + $0x4] sm:$0xf]
        %v4858 = vld [vmem:[%s4855 + $0x8] sm:$0xf]
        %v4859 = vld [vmem:[%s4855 + $0xc] sm:$0xf]
        %v4860 = vld [vmem:[%s4855 + $0x10] sm:$0xf]
        %v4861 = vld [vmem:[%s4855 + $0x14] sm:$0xf]
        %v4862 = vld [vmem:[%s4855 + $0x18] sm:$0xf]
        %v4863 = vld [vmem:[%s4855 + $0x1c] sm:$0xf]
        %v4864 = vld [vmem:[%s4855 + $0x20] sm:$0xf]
        %v4865 = vld [vmem:[%s4855 + $0x24] sm:$0xf]
        %v4866 = vld [vmem:[%s4855 + $0x28] sm:$0xf]
        %v4867 = vld [vmem:[%s4855 + $0x2c] sm:$0xf]
        %v4868 = vld [vmem:[%s4855 + $0x30] sm:$0xf]
        %v4869 = vld [vmem:[%s4855 + $0x34] sm:$0xf]
        %v4870 = vld [vmem:[%s4855 + $0x38] sm:$0xf]
        %v4871 = vld [vmem:[%s4855 + $0x3c] sm:$0xf]
        %v4937 = vunpack.c.l.b16 %v4790
        %v4938 = vunpack.c.l.b16 %v4791
        %v4939 = vunpack.c.l.b16 %v4792
        %v4940 = vunpack.c.l.b16 %v4793
        %v4941 = vunpack.c.l.b16 %v4794
        %v4942 = vunpack.c.l.b16 %v4795
        %v4943 = vunpack.c.l.b16 %v4796
        %v4944 = vunpack.c.l.b16 %v4797
        %v4945 = vunpack.c.l.b16 %v4798
        %v4946 = vunpack.c.l.b16 %v4799
        %v4947 = vunpack.c.l.b16 %v4800
        %v4948 = vunpack.c.l.b16 %v4801
        %v4949 = vunpack.c.l.b16 %v4802
        %v4950 = vunpack.c.l.b16 %v4803
        %v4951 = vunpack.c.l.b16 %v4804
        %v4952 = vunpack.c.l.b16 %v4805
        %v4953 = vunpack.c.l.b16 %v4806
        %v4954 = vunpack.c.l.b16 %v4807
        %v4955 = vunpack.c.l.b16 %v4808
        %v4956 = vunpack.c.l.b16 %v4809
        %v4957 = vunpack.c.l.b16 %v4810
        %v4958 = vunpack.c.l.b16 %v4811
        %v4959 = vunpack.c.l.b16 %v4812
        %v4960 = vunpack.c.l.b16 %v4813
        %v4961 = vunpack.c.l.b16 %v4814
        %v4962 = vunpack.c.l.b16 %v4815
        %v4963 = vunpack.c.l.b16 %v4816
        %v4964 = vunpack.c.l.b16 %v4817
        %v4965 = vunpack.c.l.b16 %v4818
        %v4966 = vunpack.c.l.b16 %v4819
        %v4967 = vunpack.c.l.b16 %v4820
        %v4968 = vunpack.c.l.b16 %v4821
        %v4969 = vunpack.c.l.b16 %v4822
        %v4970 = vunpack.c.l.b16 %v4823
        %v4971 = vunpack.c.l.b16 %v4824
        %v4972 = vunpack.c.l.b16 %v4825
        %v4973 = vunpack.c.l.b16 %v4826
        %v4974 = vunpack.c.l.b16 %v4827
        %v4975 = vunpack.c.l.b16 %v4828
        %v4976 = vunpack.c.l.b16 %v4829
        %v4977 = vunpack.c.l.b16 %v4830
        %v4978 = vunpack.c.l.b16 %v4831
        %v4979 = vunpack.c.l.b16 %v4832
        %v4980 = vunpack.c.l.b16 %v4833
        %v4981 = vunpack.c.l.b16 %v4834
        %v4982 = vunpack.c.l.b16 %v4835
        %v4983 = vunpack.c.l.b16 %v4836
        %v4984 = vunpack.c.l.b16 %v4837
        %v4985 = vunpack.c.l.b16 %v4838
        %v4986 = vunpack.c.l.b16 %v4839
        %v4987 = vunpack.c.l.b16 %v4840
        %v4988 = vunpack.c.l.b16 %v4841
        %v4989 = vunpack.c.l.b16 %v4842
        %v4990 = vunpack.c.l.b16 %v4843
        %v4991 = vunpack.c.l.b16 %v4844
        %v4992 = vunpack.c.l.b16 %v4845
        %v4993 = vunpack.c.l.b16 %v4846
        %v4994 = vunpack.c.l.b16 %v4847
        %v4995 = vunpack.c.l.b16 %v4848
        %v4996 = vunpack.c.l.b16 %v4849
        %v4997 = vunpack.c.l.b16 %v4850
        %v4998 = vunpack.c.l.b16 %v4851
        %v4999 = vunpack.c.l.b16 %v4852
        %v5000 = vunpack.c.l.b16 %v4853
        %v5001 = vunpack.c.l.b16 %v4854
        %v5002 = vpack.c.b16 %v4938, %v4937
        %v5003 = vpack.c.b16 %v4940, %v4939
        %v5004 = vpack.c.b16 %v4942, %v4941
        %v5005 = vpack.c.b16 %v4944, %v4943
        %v5006 = vpack.c.b16 %v4946, %v4945
        %v5007 = vpack.c.b16 %v4948, %v4947
        %v5008 = vpack.c.b16 %v4950, %v4949
        %v5009 = vpack.c.b16 %v4952, %v4951
        %v5010 = vpack.c.b16 %v4954, %v4953
        %v5011 = vpack.c.b16 %v4956, %v4955
        %v5012 = vpack.c.b16 %v4958, %v4957
        %v5013 = vpack.c.b16 %v4960, %v4959
        %v5014 = vpack.c.b16 %v4962, %v4961
        %v5015 = vpack.c.b16 %v4964, %v4963
        %v5016 = vpack.c.b16 %v4966, %v4965
        %v5017 = vpack.c.b16 %v4968, %v4967
        %v5018 = vpack.c.b16 %v4970, %v4969
        %v5019 = vpack.c.b16 %v4972, %v4971
        %v5020 = vpack.c.b16 %v4974, %v4973
        %v5021 = vpack.c.b16 %v4976, %v4975
        %v5022 = vpack.c.b16 %v4978, %v4977
        %v5023 = vpack.c.b16 %v4980, %v4979
        %v5024 = vpack.c.b16 %v4982, %v4981
        %v5025 = vpack.c.b16 %v4984, %v4983
        %v5026 = vpack.c.b16 %v4986, %v4985
        %v5027 = vpack.c.b16 %v4988, %v4987
        %v5028 = vpack.c.b16 %v4990, %v4989
        %v5029 = vpack.c.b16 %v4992, %v4991
        %v5030 = vpack.c.b16 %v4994, %v4993
        %v5031 = vpack.c.b16 %v4996, %v4995
        %v5032 = vpack.c.b16 %v4998, %v4997
        %v5033 = vpack.c.b16 %v5000, %v4999
        %v5034 = vpack.c.b16 %v5001, %v5001
        %v5036 = vshrl.u32 %v5002, 16
        %v5038 = vshll.u32 %v5002, 16
        %v5040 = vrot.slane %v5038, 1
        %v5041 = vor.u32 %v5036, %v5040
        %v5043 = vshll.u32 %v5003, 16
        %v5045 = vrot.slane %v5043, 1
        %v5046 = vsel %vm466, %v5041, %v5045
        %v5047 = vshrl.u32 %v5003, 16
        %v5049 = vor.u32 %v5047, %v5045
        %v5051 = vshll.u32 %v5004, 16
        %v5053 = vrot.slane %v5051, 1
        %v5054 = vsel %vm466, %v5049, %v5053
        %v5055 = vshrl.u32 %v5004, 16
        %v5057 = vor.u32 %v5055, %v5053
        %v5059 = vshll.u32 %v5005, 16
        %v5061 = vrot.slane %v5059, 1
        %v5062 = vsel %vm466, %v5057, %v5061
        %v5063 = vshrl.u32 %v5005, 16
        %v5065 = vor.u32 %v5063, %v5061
        %v5067 = vshll.u32 %v5006, 16
        %v5069 = vrot.slane %v5067, 1
        %v5070 = vsel %vm466, %v5065, %v5069
        %v5071 = vshrl.u32 %v5006, 16
        %v5073 = vor.u32 %v5071, %v5069
        %v5075 = vshll.u32 %v5007, 16
        %v5077 = vrot.slane %v5075, 1
        %v5078 = vsel %vm466, %v5073, %v5077
        %v5079 = vshrl.u32 %v5007, 16
        %v5081 = vor.u32 %v5079, %v5077
        %v5083 = vshll.u32 %v5008, 16
        %v5085 = vrot.slane %v5083, 1
        %v5086 = vsel %vm466, %v5081, %v5085
        %v5087 = vshrl.u32 %v5008, 16
        %v5089 = vor.u32 %v5087, %v5085
        %v5091 = vshll.u32 %v5009, 16
        %v5093 = vrot.slane %v5091, 1
        %v5094 = vsel %vm466, %v5089, %v5093
        %v5095 = vshrl.u32 %v5009, 16
        %v5097 = vor.u32 %v5095, %v5093
        %v5099 = vshll.u32 %v5010, 16
        %v5101 = vrot.slane %v5099, 1
        %v5102 = vsel %vm466, %v5097, %v5101
        %v5103 = vshrl.u32 %v5010, 16
        %v5105 = vor.u32 %v5103, %v5101
        %v5107 = vshll.u32 %v5011, 16
        %v5109 = vrot.slane %v5107, 1
        %v5110 = vsel %vm466, %v5105, %v5109
        %v5111 = vshrl.u32 %v5011, 16
        %v5113 = vor.u32 %v5111, %v5109
        %v5115 = vshll.u32 %v5012, 16
        %v5117 = vrot.slane %v5115, 1
        %v5118 = vsel %vm466, %v5113, %v5117
        %v5119 = vshrl.u32 %v5012, 16
        %v5121 = vor.u32 %v5119, %v5117
        %v5123 = vshll.u32 %v5013, 16
        %v5125 = vrot.slane %v5123, 1
        %v5126 = vsel %vm466, %v5121, %v5125
        %v5127 = vshrl.u32 %v5013, 16
        %v5129 = vor.u32 %v5127, %v5125
        %v5131 = vshll.u32 %v5014, 16
        %v5133 = vrot.slane %v5131, 1
        %v5134 = vsel %vm466, %v5129, %v5133
        %v5135 = vshrl.u32 %v5014, 16
        %v5137 = vor.u32 %v5135, %v5133
        %v5139 = vshll.u32 %v5015, 16
        %v5141 = vrot.slane %v5139, 1
        %v5142 = vsel %vm466, %v5137, %v5141
        %v5143 = vshrl.u32 %v5015, 16
        %v5145 = vor.u32 %v5143, %v5141
        %v5147 = vshll.u32 %v5016, 16
        %v5149 = vrot.slane %v5147, 1
        %v5150 = vsel %vm466, %v5145, %v5149
        %v5151 = vshrl.u32 %v5016, 16
        %v5153 = vor.u32 %v5151, %v5149
        %v5155 = vshll.u32 %v5017, 16
        %v5157 = vrot.slane %v5155, 1
        %v5158 = vsel %vm466, %v5153, %v5157
        %v5159 = vshrl.u32 %v5017, 16
        %v5161 = vor.u32 %v5159, %v5157
        %v5163 = vshll.u32 %v5018, 16
        %v5165 = vrot.slane %v5163, 1
        %v5166 = vsel %vm466, %v5161, %v5165
        %v5167 = vshrl.u32 %v5018, 16
        %v5169 = vor.u32 %v5167, %v5165
        %v5171 = vshll.u32 %v5019, 16
        %v5173 = vrot.slane %v5171, 1
        %v5174 = vsel %vm466, %v5169, %v5173
        %v5175 = vshrl.u32 %v5019, 16
        %v5177 = vor.u32 %v5175, %v5173
        %v5179 = vshll.u32 %v5020, 16
        %v5181 = vrot.slane %v5179, 1
        %v5182 = vsel %vm466, %v5177, %v5181
        %v5183 = vshrl.u32 %v5020, 16
        %v5185 = vor.u32 %v5183, %v5181
        %v5187 = vshll.u32 %v5021, 16
        %v5189 = vrot.slane %v5187, 1
        %v5190 = vsel %vm466, %v5185, %v5189
        %v5191 = vshrl.u32 %v5021, 16
        %v5193 = vor.u32 %v5191, %v5189
        %v5195 = vshll.u32 %v5022, 16
        %v5197 = vrot.slane %v5195, 1
        %v5198 = vsel %vm466, %v5193, %v5197
        %v5199 = vshrl.u32 %v5022, 16
        %v5201 = vor.u32 %v5199, %v5197
        %v5203 = vshll.u32 %v5023, 16
        %v5205 = vrot.slane %v5203, 1
        %v5206 = vsel %vm466, %v5201, %v5205
        %v5207 = vshrl.u32 %v5023, 16
        %v5209 = vor.u32 %v5207, %v5205
        %v5211 = vshll.u32 %v5024, 16
        %v5213 = vrot.slane %v5211, 1
        %v5214 = vsel %vm466, %v5209, %v5213
        %v5215 = vshrl.u32 %v5024, 16
        %v5217 = vor.u32 %v5215, %v5213
        %v5219 = vshll.u32 %v5025, 16
        %v5221 = vrot.slane %v5219, 1
        %v5222 = vsel %vm466, %v5217, %v5221
        %v5223 = vshrl.u32 %v5025, 16
        %v5225 = vor.u32 %v5223, %v5221
        %v5227 = vshll.u32 %v5026, 16
        %v5229 = vrot.slane %v5227, 1
        %v5230 = vsel %vm466, %v5225, %v5229
        %v5231 = vshrl.u32 %v5026, 16
        %v5233 = vor.u32 %v5231, %v5229
        %v5235 = vshll.u32 %v5027, 16
        %v5237 = vrot.slane %v5235, 1
        %v5238 = vsel %vm466, %v5233, %v5237
        %v5239 = vshrl.u32 %v5027, 16
        %v5241 = vor.u32 %v5239, %v5237
        %v5243 = vshll.u32 %v5028, 16
        %v5245 = vrot.slane %v5243, 1
        %v5246 = vsel %vm466, %v5241, %v5245
        %v5247 = vshrl.u32 %v5028, 16
        %v5249 = vor.u32 %v5247, %v5245
        %v5251 = vshll.u32 %v5029, 16
        %v5253 = vrot.slane %v5251, 1
        %v5254 = vsel %vm466, %v5249, %v5253
        %v5255 = vshrl.u32 %v5029, 16
        %v5257 = vor.u32 %v5255, %v5253
        %v5259 = vshll.u32 %v5030, 16
        %v5261 = vrot.slane %v5259, 1
        %v5262 = vsel %vm466, %v5257, %v5261
        %v5263 = vshrl.u32 %v5030, 16
        %v5265 = vor.u32 %v5263, %v5261
        %v5267 = vshll.u32 %v5031, 16
        %v5269 = vrot.slane %v5267, 1
        %v5270 = vsel %vm466, %v5265, %v5269
        %v5271 = vshrl.u32 %v5031, 16
        %v5273 = vor.u32 %v5271, %v5269
        %v5275 = vshll.u32 %v5032, 16
        %v5277 = vrot.slane %v5275, 1
        %v5278 = vsel %vm466, %v5273, %v5277
        %v5279 = vshrl.u32 %v5032, 16
        %v5281 = vor.u32 %v5279, %v5277
        %v5283 = vshll.u32 %v5033, 16
        %v5285 = vrot.slane %v5283, 1
        %v5286 = vsel %vm466, %v5281, %v5285
        %v5287 = vshrl.u32 %v5033, 16
        %v5289 = vor.u32 %v5287, %v5285
        %v5291 = vshll.u32 %v5034, 16
        %v5293 = vrot.slane %v5291, 1
        %v5294 = vsel %vm466, %v5289, %v5293
        %v5343 = vunpack.c.l.b16 %v4856
        %v5344 = vunpack.c.l.b16 %v4857
        %v5345 = vunpack.c.l.b16 %v4858
        %v5346 = vunpack.c.l.b16 %v4859
        %v5347 = vunpack.c.l.b16 %v4860
        %v5348 = vunpack.c.l.b16 %v4861
        %v5349 = vunpack.c.l.b16 %v4862
        %v5350 = vunpack.c.l.b16 %v4863
        %v5351 = vunpack.c.l.b16 %v4864
        %v5352 = vunpack.c.l.b16 %v4865
        %v5353 = vunpack.c.l.b16 %v4866
        %v5354 = vunpack.c.l.b16 %v4867
        %v5355 = vunpack.c.l.b16 %v4868
        %v5356 = vunpack.c.l.b16 %v4869
        %v5357 = vunpack.c.l.b16 %v4870
        %v5358 = vunpack.c.l.b16 %v4871
        %v5359 = vpack.c.b16 %v5344, %v5343
        %v5360 = vpack.c.b16 %v5346, %v5345
        %v5361 = vpack.c.b16 %v5348, %v5347
        %v5362 = vpack.c.b16 %v5350, %v5349
        %v5363 = vpack.c.b16 %v5352, %v5351
        %v5364 = vpack.c.b16 %v5354, %v5353
        %v5365 = vpack.c.b16 %v5356, %v5355
        %v5366 = vpack.c.b16 %v5358, %v5357
        %5375 = vmatprep.subr.bf16.mxu0 0
        %5376 = vmatpush1.bf16.msra.mxu0 %v5359
        %5377 = vmatprep.subr.bf16.mxu0 0
        %5378 = vmatpush1.bf16.msra.mxu0 %v5360
        %5379 = vmatprep.subr.bf16.mxu0 0
        %5380 = vmatpush1.bf16.msra.mxu0 %v5361
        %5381 = vmatprep.subr.bf16.mxu0 0
        %5382 = vmatpush1.bf16.msra.mxu0 %v5362
        %5383 = vmatprep.subr.bf16.mxu0 0
        %5384 = vmatpush1.bf16.msra.mxu0 %v5363
        %5385 = vmatprep.subr.bf16.mxu0 0
        %5386 = vmatpush1.bf16.msra.mxu0 %v5364
        %5387 = vmatprep.subr.bf16.mxu0 0
        %5388 = vmatpush1.bf16.msra.mxu0 %v5365
        %5389 = vmatprep.subr.bf16.mxu0 0
        %5390 = vmatpush1.bf16.msra.mxu0 %v5366
        %5391 = vmatprep.subr.bf16.mxu0 0
        %5392 = vmatpush1.bf16.msra.mxu0 0
        %5393 = vmatprep.subr.bf16.mxu0 0
        %5394 = vmatpush1.bf16.msra.mxu0 0
        %5395 = vmatprep.subr.bf16.mxu0 0
        %5396 = vmatpush1.bf16.msra.mxu0 0
        %5397 = vmatprep.subr.bf16.mxu0 0
        %5398 = vmatpush1.bf16.msra.mxu0 0
        %5399 = vmatprep.subr.bf16.mxu0 0
        %5400 = vmatpush1.bf16.msra.mxu0 0
        %5401 = vmatprep.subr.bf16.mxu0 0
        %5402 = vmatpush1.bf16.msra.mxu0 0
        %5403 = vmatprep.subr.bf16.mxu0 0
        %5404 = vmatpush1.bf16.msra.mxu0 0
        %5405 = vmatprep.subr.bf16.mxu0 0
        %5406 = vmatpush1.bf16.msra.mxu0 0
        %5407 = vmatprep.mubr.bf16.mxu0 0
        %5408 = vmatmul.mubr.bf16.gmra.mrb[0].mxu0 %v5046
        %v5409 = vpop.f32.mrb[0].mxu0
        %v5410 = vadd.f32 0.0, %v5409
        %v5411 = vpop.f32.mrb[0].mxu0
        %v5412 = vpop.f32.mrb[0].mxu0
        %v5413 = vadd.f32 0.0, %v5412
        %v5414 = vpop.f32.mrb[0].mxu0
        %5415 = vmatprep.mubr.bf16.mxu0 0
        %5416 = vmatmul.mubr.bf16.gmra.mrb[0].mxu0 %v5054
        %v5417 = vpop.f32.mrb[0].mxu0
        %v5418 = vadd.f32 0.0, %v5417
        %v5419 = vpop.f32.mrb[0].mxu0
        %v5420 = vpop.f32.mrb[0].mxu0
        %v5421 = vadd.f32 0.0, %v5420
        %v5422 = vpop.f32.mrb[0].mxu0
        %5423 = vmatprep.mubr.bf16.mxu0 0
        %5424 = vmatmul.mubr.bf16.gmra.mrb[0].mxu0 %v5062
        %v5425 = vpop.f32.mrb[0].mxu0
        %v5426 = vadd.f32 0.0, %v5425
        %v5427 = vpop.f32.mrb[0].mxu0
        %v5428 = vpop.f32.mrb[0].mxu0
        %v5429 = vadd.f32 0.0, %v5428
        %v5430 = vpop.f32.mrb[0].mxu0
        %5431 = vmatprep.mubr.bf16.mxu0 0
        %5432 = vmatmul.mubr.bf16.gmra.mrb[0].mxu0 %v5070
        %v5433 = vpop.f32.mrb[0].mxu0
        %v5434 = vadd.f32 0.0, %v5433
        %v5435 = vpop.f32.mrb[0].mxu0
        %v5436 = vpop.f32.mrb[0].mxu0
        %v5437 = vadd.f32 0.0, %v5436
        %v5438 = vpop.f32.mrb[0].mxu0
        %5439 = vmatprep.mubr.bf16.mxu0 0
        %5440 = vmatmul.mubr.bf16.gmra.mrb[0].mxu0 %v5078
        %v5441 = vpop.f32.mrb[0].mxu0
        %v5442 = vadd.f32 0.0, %v5441
        %v5443 = vpop.f32.mrb[0].mxu0
        %v5444 = vpop.f32.mrb[0].mxu0
        %v5445 = vadd.f32 0.0, %v5444
        %v5446 = vpop.f32.mrb[0].mxu0
        %5447 = vmatprep.mubr.bf16.mxu0 0
        %5448 = vmatmul.mubr.bf16.gmra.mrb[0].mxu0 %v5086
        %v5449 = vpop.f32.mrb[0].mxu0
        %v5450 = vadd.f32 0.0, %v5449
        %v5451 = vpop.f32.mrb[0].mxu0
        %v5452 = vpop.f32.mrb[0].mxu0
        %v5453 = vadd.f32 0.0, %v5452
        %v5454 = vpop.f32.mrb[0].mxu0
        %5455 = vmatprep.mubr.bf16.mxu0 0
        %5456 = vmatmul.mubr.bf16.gmra.mrb[0].mxu0 %v5094
        %v5457 = vpop.f32.mrb[0].mxu0
        %v5458 = vadd.f32 0.0, %v5457
        %v5459 = vpop.f32.mrb[0].mxu0
        %v5460 = vpop.f32.mrb[0].mxu0
        %v5461 = vadd.f32 0.0, %v5460
        %v5462 = vpop.f32.mrb[0].mxu0
        %5463 = vmatprep.mubr.bf16.mxu0 0
        %5464 = vmatmul.mubr.bf16.gmra.mrb[0].mxu0 %v5102
        %v5465 = vpop.f32.mrb[0].mxu0
        %v5466 = vadd.f32 0.0, %v5465
        %v5467 = vpop.f32.mrb[0].mxu0
        %v5468 = vpop.f32.mrb[0].mxu0
        %v5469 = vadd.f32 0.0, %v5468
        %v5470 = vpop.f32.mrb[0].mxu0
        %5471 = vmatprep.mubr.bf16.mxu0 0
        %5472 = vmatmul.mubr.bf16.gmra.mrb[0].mxu0 %v5110
        %v5473 = vpop.f32.mrb[0].mxu0
        %v5474 = vadd.f32 0.0, %v5473
        %v5475 = vpop.f32.mrb[0].mxu0
        %v5476 = vpop.f32.mrb[0].mxu0
        %v5477 = vadd.f32 0.0, %v5476
        %v5478 = vpop.f32.mrb[0].mxu0
        %5479 = vmatprep.mubr.bf16.mxu0 0
        %5480 = vmatmul.mubr.bf16.gmra.mrb[0].mxu0 %v5118
        %v5481 = vpop.f32.mrb[0].mxu0
        %v5482 = vadd.f32 0.0, %v5481
        %v5483 = vpop.f32.mrb[0].mxu0
        %v5484 = vpop.f32.mrb[0].mxu0
        %v5485 = vadd.f32 0.0, %v5484
        %v5486 = vpop.f32.mrb[0].mxu0
        %5487 = vmatprep.mubr.bf16.mxu0 0
        %5488 = vmatmul.mubr.bf16.gmra.mrb[0].mxu0 %v5126
        %v5489 = vpop.f32.mrb[0].mxu0
        %v5490 = vadd.f32 0.0, %v5489
        %v5491 = vpop.f32.mrb[0].mxu0
        %v5492 = vpop.f32.mrb[0].mxu0
        %v5493 = vadd.f32 0.0, %v5492
        %v5494 = vpop.f32.mrb[0].mxu0
        %5495 = vmatprep.mubr.bf16.mxu0 0
        %5496 = vmatmul.mubr.bf16.gmra.mrb[0].mxu0 %v5134
        %v5497 = vpop.f32.mrb[0].mxu0
        %v5498 = vadd.f32 0.0, %v5497
        %v5499 = vpop.f32.mrb[0].mxu0
        %v5500 = vpop.f32.mrb[0].mxu0
        %v5501 = vadd.f32 0.0, %v5500
        %v5502 = vpop.f32.mrb[0].mxu0
        %5503 = vmatprep.mubr.bf16.mxu0 0
        %5504 = vmatmul.mubr.bf16.gmra.mrb[0].mxu0 %v5142
        %v5505 = vpop.f32.mrb[0].mxu0
        %v5506 = vadd.f32 0.0, %v5505
        %v5507 = vpop.f32.mrb[0].mxu0
        %v5508 = vpop.f32.mrb[0].mxu0
        %v5509 = vadd.f32 0.0, %v5508
        %v5510 = vpop.f32.mrb[0].mxu0
        %5511 = vmatprep.mubr.bf16.mxu0 0
        %5512 = vmatmul.mubr.bf16.gmra.mrb[0].mxu0 %v5150
        %v5513 = vpop.f32.mrb[0].mxu0
        %v5514 = vadd.f32 0.0, %v5513
        %v5515 = vpop.f32.mrb[0].mxu0
        %v5516 = vpop.f32.mrb[0].mxu0
        %v5517 = vadd.f32 0.0, %v5516
        %v5518 = vpop.f32.mrb[0].mxu0
        %5519 = vmatprep.mubr.bf16.mxu0 0
        %5520 = vmatmul.mubr.bf16.gmra.mrb[0].mxu0 %v5158
        %v5521 = vpop.f32.mrb[0].mxu0
        %v5522 = vadd.f32 0.0, %v5521
        %v5523 = vpop.f32.mrb[0].mxu0
        %v5524 = vpop.f32.mrb[0].mxu0
        %v5525 = vadd.f32 0.0, %v5524
        %v5526 = vpop.f32.mrb[0].mxu0
        %5527 = vmatprep.mubr.bf16.mxu0 0
        %5528 = vmatmul.mubr.bf16.gmra.mrb[0].mxu0 %v5166
        %v5529 = vpop.f32.mrb[0].mxu0
        %v5530 = vadd.f32 0.0, %v5529
        %v5531 = vpop.f32.mrb[0].mxu0
        %v5532 = vpop.f32.mrb[0].mxu0
        %v5533 = vadd.f32 0.0, %v5532
        %v5534 = vpop.f32.mrb[0].mxu0
        %5535 = vmatprep.mubr.bf16.mxu0 0
        %5536 = vmatmul.mubr.bf16.gmra.mrb[0].mxu0 %v5174
        %v5537 = vpop.f32.mrb[0].mxu0
        %v5538 = vadd.f32 0.0, %v5537
        %v5539 = vpop.f32.mrb[0].mxu0
        %v5540 = vpop.f32.mrb[0].mxu0
        %v5541 = vadd.f32 0.0, %v5540
        %v5542 = vpop.f32.mrb[0].mxu0
        %5543 = vmatprep.mubr.bf16.mxu0 0
        %5544 = vmatmul.mubr.bf16.gmra.mrb[0].mxu0 %v5182
        %v5545 = vpop.f32.mrb[0].mxu0
        %v5546 = vadd.f32 0.0, %v5545
        %v5547 = vpop.f32.mrb[0].mxu0
        %v5548 = vpop.f32.mrb[0].mxu0
        %v5549 = vadd.f32 0.0, %v5548
        %v5550 = vpop.f32.mrb[0].mxu0
        %5551 = vmatprep.mubr.bf16.mxu0 0
        %5552 = vmatmul.mubr.bf16.gmra.mrb[0].mxu0 %v5190
        %v5553 = vpop.f32.mrb[0].mxu0
        %v5554 = vadd.f32 0.0, %v5553
        %v5555 = vpop.f32.mrb[0].mxu0
        %v5556 = vpop.f32.mrb[0].mxu0
        %v5557 = vadd.f32 0.0, %v5556
        %v5558 = vpop.f32.mrb[0].mxu0
        %5559 = vmatprep.mubr.bf16.mxu0 0
        %5560 = vmatmul.mubr.bf16.gmra.mrb[0].mxu0 %v5198
        %v5561 = vpop.f32.mrb[0].mxu0
        %v5562 = vadd.f32 0.0, %v5561
        %v5563 = vpop.f32.mrb[0].mxu0
        %v5564 = vpop.f32.mrb[0].mxu0
        %v5565 = vadd.f32 0.0, %v5564
        %v5566 = vpop.f32.mrb[0].mxu0
        %5567 = vmatprep.mubr.bf16.mxu0 0
        %5568 = vmatmul.mubr.bf16.gmra.mrb[0].mxu0 %v5206
        %v5569 = vpop.f32.mrb[0].mxu0
        %v5570 = vadd.f32 0.0, %v5569
        %v5571 = vpop.f32.mrb[0].mxu0
        %v5572 = vpop.f32.mrb[0].mxu0
        %v5573 = vadd.f32 0.0, %v5572
        %v5574 = vpop.f32.mrb[0].mxu0
        %5575 = vmatprep.mubr.bf16.mxu0 0
        %5576 = vmatmul.mubr.bf16.gmra.mrb[0].mxu0 %v5214
        %v5577 = vpop.f32.mrb[0].mxu0
        %v5578 = vadd.f32 0.0, %v5577
        %v5579 = vpop.f32.mrb[0].mxu0
        %v5580 = vpop.f32.mrb[0].mxu0
        %v5581 = vadd.f32 0.0, %v5580
        %v5582 = vpop.f32.mrb[0].mxu0
        %5583 = vmatprep.mubr.bf16.mxu0 0
        %5584 = vmatmul.mubr.bf16.gmra.mrb[0].mxu0 %v5222
        %v5585 = vpop.f32.mrb[0].mxu0
        %v5586 = vadd.f32 0.0, %v5585
        %v5587 = vpop.f32.mrb[0].mxu0
        %v5588 = vpop.f32.mrb[0].mxu0
        %v5589 = vadd.f32 0.0, %v5588
        %v5590 = vpop.f32.mrb[0].mxu0
        %5591 = vmatprep.mubr.bf16.mxu0 0
        %5592 = vmatmul.mubr.bf16.gmra.mrb[0].mxu0 %v5230
        %v5593 = vpop.f32.mrb[0].mxu0
        %v5594 = vadd.f32 0.0, %v5593
        %v5595 = vpop.f32.mrb[0].mxu0
        %v5596 = vpop.f32.mrb[0].mxu0
        %v5597 = vadd.f32 0.0, %v5596
        %v5598 = vpop.f32.mrb[0].mxu0
        %5599 = vmatprep.mubr.bf16.mxu0 0
        %5600 = vmatmul.mubr.bf16.gmra.mrb[0].mxu0 %v5238
        %v5601 = vpop.f32.mrb[0].mxu0
        %v5602 = vadd.f32 0.0, %v5601
        %v5603 = vpop.f32.mrb[0].mxu0
        %v5604 = vpop.f32.mrb[0].mxu0
        %v5605 = vadd.f32 0.0, %v5604
        %v5606 = vpop.f32.mrb[0].mxu0
        %5607 = vmatprep.mubr.bf16.mxu0 0
        %5608 = vmatmul.mubr.bf16.gmra.mrb[0].mxu0 %v5246
        %v5609 = vpop.f32.mrb[0].mxu0
        %v5610 = vadd.f32 0.0, %v5609
        %v5611 = vpop.f32.mrb[0].mxu0
        %v5612 = vpop.f32.mrb[0].mxu0
        %v5613 = vadd.f32 0.0, %v5612
        %v5614 = vpop.f32.mrb[0].mxu0
        %5615 = vmatprep.mubr.bf16.mxu0 0
        %5616 = vmatmul.mubr.bf16.gmra.mrb[0].mxu0 %v5254
        %v5617 = vpop.f32.mrb[0].mxu0
        %v5618 = vadd.f32 0.0, %v5617
        %v5619 = vpop.f32.mrb[0].mxu0
        %v5620 = vpop.f32.mrb[0].mxu0
        %v5621 = vadd.f32 0.0, %v5620
        %v5622 = vpop.f32.mrb[0].mxu0
        %5623 = vmatprep.mubr.bf16.mxu0 0
        %5624 = vmatmul.mubr.bf16.gmra.mrb[0].mxu0 %v5262
        %v5625 = vpop.f32.mrb[0].mxu0
        %v5626 = vadd.f32 0.0, %v5625
        %v5627 = vpop.f32.mrb[0].mxu0
        %v5628 = vpop.f32.mrb[0].mxu0
        %v5629 = vadd.f32 0.0, %v5628
        %v5630 = vpop.f32.mrb[0].mxu0
        %5631 = vmatprep.mubr.bf16.mxu0 0
        %5632 = vmatmul.mubr.bf16.gmra.mrb[0].mxu0 %v5270
        %v5633 = vpop.f32.mrb[0].mxu0
        %v5634 = vadd.f32 0.0, %v5633
        %v5635 = vpop.f32.mrb[0].mxu0
        %v5636 = vpop.f32.mrb[0].mxu0
        %v5637 = vadd.f32 0.0, %v5636
        %v5638 = vpop.f32.mrb[0].mxu0
        %5639 = vmatprep.mubr.bf16.mxu0 0
        %5640 = vmatmul.mubr.bf16.gmra.mrb[0].mxu0 %v5278
        %v5641 = vpop.f32.mrb[0].mxu0
        %v5642 = vadd.f32 0.0, %v5641
        %v5643 = vpop.f32.mrb[0].mxu0
        %v5644 = vpop.f32.mrb[0].mxu0
        %v5645 = vadd.f32 0.0, %v5644
        %v5646 = vpop.f32.mrb[0].mxu0
        %5647 = vmatprep.mubr.bf16.mxu0 0
        %5648 = vmatmul.mubr.bf16.gmra.mrb[0].mxu0 %v5286
        %v5649 = vpop.f32.mrb[0].mxu0
        %v5650 = vadd.f32 0.0, %v5649
        %v5651 = vpop.f32.mrb[0].mxu0
        %v5652 = vpop.f32.mrb[0].mxu0
        %v5653 = vadd.f32 0.0, %v5652
        %v5654 = vpop.f32.mrb[0].mxu0
        %5655 = vmatprep.mubr.bf16.mxu0 0
        %5656 = vmatmul.mubr.bf16.gmra.mrb[0].mxu0 %v5294
        %v5657 = vpop.f32.mrb[0].mxu0
        %v5658 = vadd.f32 0.0, %v5657
        %v5659 = vpop.f32.mrb[0].mxu0
        %v5660 = vpop.f32.mrb[0].mxu0
        %v5661 = vadd.f32 0.0, %v5660
        %v5662 = vpop.f32.mrb[0].mxu0
        %5663 = vdwg.mxu0
        %v5664 = vadd.f32 %v4726, %v5410
        %v5665 = vadd.f32 %v4727, %v5413
        %v5666 = vadd.f32 %v4728, %v5418
        %v5667 = vadd.f32 %v4729, %v5421
        %v5668 = vadd.f32 %v4730, %v5426
        %v5669 = vadd.f32 %v4731, %v5429
        %v5670 = vadd.f32 %v4732, %v5434
        %v5671 = vadd.f32 %v4733, %v5437
        %v5672 = vadd.f32 %v4734, %v5442
        %v5673 = vadd.f32 %v4735, %v5445
        %v5674 = vadd.f32 %v4736, %v5450
        %v5675 = vadd.f32 %v4737, %v5453
        %v5676 = vadd.f32 %v4738, %v5458
        %v5677 = vadd.f32 %v4739, %v5461
        %v5678 = vadd.f32 %v4740, %v5466
        %v5679 = vadd.f32 %v4741, %v5469
        %v5680 = vadd.f32 %v4742, %v5474
        %v5681 = vadd.f32 %v4743, %v5477
        %v5682 = vadd.f32 %v4744, %v5482
        %v5683 = vadd.f32 %v4745, %v5485
        %v5684 = vadd.f32 %v4746, %v5490
        %v5685 = vadd.f32 %v4747, %v5493
        %v5686 = vadd.f32 %v4748, %v5498
        %v5687 = vadd.f32 %v4749, %v5501
        %v5688 = vadd.f32 %v4750, %v5506
        %v5689 = vadd.f32 %v4751, %v5509
        %v5690 = vadd.f32 %v4752, %v5514
        %v5691 = vadd.f32 %v4753, %v5517
        %v5692 = vadd.f32 %v4754, %v5522
        %v5693 = vadd.f32 %v4755, %v5525
        %v5694 = vadd.f32 %v4756, %v5530
        %v5695 = vadd.f32 %v4757, %v5533
        %v5696 = vadd.f32 %v4758, %v5538
        %v5697 = vadd.f32 %v4759, %v5541
        %v5698 = vadd.f32 %v4760, %v5546
        %v5699 = vadd.f32 %v4761, %v5549
        %v5700 = vadd.f32 %v4762, %v5554
        %v5701 = vadd.f32 %v4763, %v5557
        %v5702 = vadd.f32 %v4764, %v5562
        %v5703 = vadd.f32 %v4765, %v5565
        %v5704 = vadd.f32 %v4766, %v5570
        %v5705 = vadd.f32 %v4767, %v5573
        %v5706 = vadd.f32 %v4768, %v5578
        %v5707 = vadd.f32 %v4769, %v5581
        %v5708 = vadd.f32 %v4770, %v5586
        %v5709 = vadd.f32 %v4771, %v5589
        %v5710 = vadd.f32 %v4772, %v5594
        %v5711 = vadd.f32 %v4773, %v5597
        %v5712 = vadd.f32 %v4774, %v5602
        %v5713 = vadd.f32 %v4775, %v5605
        %v5714 = vadd.f32 %v4776, %v5610
        %v5715 = vadd.f32 %v4777, %v5613
        %v5716 = vadd.f32 %v4778, %v5618
        %v5717 = vadd.f32 %v4779, %v5621
        %v5718 = vadd.f32 %v4780, %v5626
        %v5719 = vadd.f32 %v4781, %v5629
        %v5720 = vadd.f32 %v4782, %v5634
        %v5721 = vadd.f32 %v4783, %v5637
        %v5722 = vadd.f32 %v4784, %v5642
        %v5723 = vadd.f32 %v4785, %v5645
        %v5724 = vadd.f32 %v4786, %v5650
        %v5725 = vadd.f32 %v4787, %v5653
        %v5726 = vadd.f32 %v4788, %v5658
        %v5727 = vadd.f32 %v4789, %v5661
        %v5728 = vld [vmem:[%s177 + $0x20] sm:$0xe]
        %s5729 = scalar_lea.vmem [#allocation5], 512
        %v5730 = vld [vmem:[%s5729] sm:$0xf]
        %v5731 = vld [vmem:[%s5729 + $0x4] sm:$0xf]
        %v5732 = vld [vmem:[%s5729 + $0x8] sm:$0xf]
        %v5733 = vld [vmem:[%s5729 + $0xc] sm:$0xf]
        %v5734 = vld [vmem:[%s5729 + $0x10] sm:$0xf]
        %v5735 = vld [vmem:[%s5729 + $0x14] sm:$0xf]
        %v5736 = vld [vmem:[%s5729 + $0x18] sm:$0xf]
        %v5737 = vld [vmem:[%s5729 + $0x1c] sm:$0xf]
        %v5738 = vld [vmem:[%s5729 + $0x20] sm:$0xf]
        %v5739 = vld [vmem:[%s5729 + $0x24] sm:$0xf]
        %v5740 = vld [vmem:[%s5729 + $0x28] sm:$0xf]
        %v5741 = vld [vmem:[%s5729 + $0x2c] sm:$0xf]
        %v5742 = vld [vmem:[%s5729 + $0x30] sm:$0xf]
        %v5743 = vld [vmem:[%s5729 + $0x34] sm:$0xf]
        %v5744 = vld [vmem:[%s5729 + $0x38] sm:$0xf]
        %v5745 = vld [vmem:[%s5729 + $0x3c] sm:$0xf]
        %v5747 = vunpack.c.l.b16 %v5728
        %v5748 = vpack.c.b16 %v4938, %v5747
        %v5749 = vrot.slane %v5748, 1
        %v5750 = vrot.slane %v5003, 1
        %v5751 = vsel %vm1486, %v5749, %v5750
        %v5752 = vrot.slane %v5004, 1
        %v5753 = vsel %vm1486, %v5750, %v5752
        %v5754 = vrot.slane %v5005, 1
        %v5755 = vsel %vm1486, %v5752, %v5754
        %v5756 = vrot.slane %v5006, 1
        %v5757 = vsel %vm1486, %v5754, %v5756
        %v5758 = vrot.slane %v5007, 1
        %v5759 = vsel %vm1486, %v5756, %v5758
        %v5760 = vrot.slane %v5008, 1
        %v5761 = vsel %vm1486, %v5758, %v5760
        %v5762 = vrot.slane %v5009, 1
        %v5763 = vsel %vm1486, %v5760, %v5762
        %v5764 = vrot.slane %v5010, 1
        %v5765 = vsel %vm1486, %v5762, %v5764
        %v5766 = vrot.slane %v5011, 1
        %v5767 = vsel %vm1486, %v5764, %v5766
        %v5768 = vrot.slane %v5012, 1
        %v5769 = vsel %vm1486, %v5766, %v5768
        %v5770 = vrot.slane %v5013, 1
        %v5771 = vsel %vm1486, %v5768, %v5770
        %v5772 = vrot.slane %v5014, 1
        %v5773 = vsel %vm1486, %v5770, %v5772
        %v5774 = vrot.slane %v5015, 1
        %v5775 = vsel %vm1486, %v5772, %v5774
        %v5776 = vrot.slane %v5016, 1
        %v5777 = vsel %vm1486, %v5774, %v5776
        %v5778 = vrot.slane %v5017, 1
        %v5779 = vsel %vm1486, %v5776, %v5778
        %v5780 = vrot.slane %v5018, 1
        %v5781 = vsel %vm1486, %v5778, %v5780
        %v5782 = vrot.slane %v5019, 1
        %v5783 = vsel %vm1486, %v5780, %v5782
        %v5784 = vrot.slane %v5020, 1
        %v5785 = vsel %vm1486, %v5782, %v5784
        %v5786 = vrot.slane %v5021, 1
        %v5787 = vsel %vm1486, %v5784, %v5786
        %v5788 = vrot.slane %v5022, 1
        %v5789 = vsel %vm1486, %v5786, %v5788
        %v5790 = vrot.slane %v5023, 1
        %v5791 = vsel %vm1486, %v5788, %v5790
        %v5792 = vrot.slane %v5024, 1
        %v5793 = vsel %vm1486, %v5790, %v5792
        %v5794 = vrot.slane %v5025, 1
        %v5795 = vsel %vm1486, %v5792, %v5794
        %v5796 = vrot.slane %v5026, 1
        %v5797 = vsel %vm1486, %v5794, %v5796
        %v5798 = vrot.slane %v5027, 1
        %v5799 = vsel %vm1486, %v5796, %v5798
        %v5800 = vrot.slane %v5028, 1
        %v5801 = vsel %vm1486, %v5798, %v5800
        %v5802 = vrot.slane %v5029, 1
        %v5803 = vsel %vm1486, %v5800, %v5802
        %v5804 = vrot.slane %v5030, 1
        %v5805 = vsel %vm1486, %v5802, %v5804
        %v5806 = vrot.slane %v5031, 1
        %v5807 = vsel %vm1486, %v5804, %v5806
        %v5808 = vrot.slane %v5032, 1
        %v5809 = vsel %vm1486, %v5806, %v5808
        %v5810 = vrot.slane %v5033, 1
        %v5811 = vsel %vm1486, %v5808, %v5810
        %v5812 = vrot.slane %v5034, 1
        %v5813 = vsel %vm1486, %v5810, %v5812
        %v5862 = vunpack.c.l.b16 %v5730
        %v5863 = vunpack.c.l.b16 %v5731
        %v5864 = vunpack.c.l.b16 %v5732
        %v5865 = vunpack.c.l.b16 %v5733
        %v5866 = vunpack.c.l.b16 %v5734
        %v5867 = vunpack.c.l.b16 %v5735
        %v5868 = vunpack.c.l.b16 %v5736
        %v5869 = vunpack.c.l.b16 %v5737
        %v5870 = vunpack.c.l.b16 %v5738
        %v5871 = vunpack.c.l.b16 %v5739
        %v5872 = vunpack.c.l.b16 %v5740
        %v5873 = vunpack.c.l.b16 %v5741
        %v5874 = vunpack.c.l.b16 %v5742
        %v5875 = vunpack.c.l.b16 %v5743
        %v5876 = vunpack.c.l.b16 %v5744
        %v5877 = vunpack.c.l.b16 %v5745
        %v5878 = vpack.c.b16 %v5863, %v5862
        %v5879 = vpack.c.b16 %v5865, %v5864
        %v5880 = vpack.c.b16 %v5867, %v5866
        %v5881 = vpack.c.b16 %v5869, %v5868
        %v5882 = vpack.c.b16 %v5871, %v5870
        %v5883 = vpack.c.b16 %v5873, %v5872
        %v5884 = vpack.c.b16 %v5875, %v5874
        %v5885 = vpack.c.b16 %v5877, %v5876
        %5894 = vmatprep.subr.bf16.mxu0 0
        %5895 = vmatpush1.bf16.msra.mxu0 %v5878
        %5896 = vmatprep.subr.bf16.mxu0 0
        %5897 = vmatpush1.bf16.msra.mxu0 %v5879
        %5898 = vmatprep.subr.bf16.mxu0 0
        %5899 = vmatpush1.bf16.msra.mxu0 %v5880
        %5900 = vmatprep.subr.bf16.mxu0 0
        %5901 = vmatpush1.bf16.msra.mxu0 %v5881
        %5902 = vmatprep.subr.bf16.mxu0 0
        %5903 = vmatpush1.bf16.msra.mxu0 %v5882
        %5904 = vmatprep.subr.bf16.mxu0 0
        %5905 = vmatpush1.bf16.msra.mxu0 %v5883
        %5906 = vmatprep.subr.bf16.mxu0 0
        %5907 = vmatpush1.bf16.msra.mxu0 %v5884
        %5908 = vmatprep.subr.bf16.mxu0 0
        %5909 = vmatpush1.bf16.msra.mxu0 %v5885
        %5910 = vmatprep.subr.bf16.mxu0 0
        %5911 = vmatpush1.bf16.msra.mxu0 0
        %5912 = vmatprep.subr.bf16.mxu0 0
        %5913 = vmatpush1.bf16.msra.mxu0 0
        %5914 = vmatprep.subr.bf16.mxu0 0
        %5915 = vmatpush1.bf16.msra.mxu0 0
        %5916 = vmatprep.subr.bf16.mxu0 0
        %5917 = vmatpush1.bf16.msra.mxu0 0
        %5918 = vmatprep.subr.bf16.mxu0 0
        %5919 = vmatpush1.bf16.msra.mxu0 0
        %5920 = vmatprep.subr.bf16.mxu0 0
        %5921 = vmatpush1.bf16.msra.mxu0 0
        %5922 = vmatprep.subr.bf16.mxu0 0
        %5923 = vmatpush1.bf16.msra.mxu0 0
        %5924 = vmatprep.subr.bf16.mxu0 0
        %5925 = vmatpush1.bf16.msra.mxu0 0
        %5926 = vmatprep.mubr.bf16.mxu0 0
        %5927 = vmatmul.mubr.bf16.gmra.mrb[0].mxu0 %v5751
        %v5928 = vpop.f32.mrb[0].mxu0
        %v5929 = vadd.f32 0.0, %v5928
        %v5930 = vpop.f32.mrb[0].mxu0
        %v5931 = vpop.f32.mrb[0].mxu0
        %v5932 = vadd.f32 0.0, %v5931
        %v5933 = vpop.f32.mrb[0].mxu0
        %5934 = vmatprep.mubr.bf16.mxu0 0
        %5935 = vmatmul.mubr.bf16.gmra.mrb[0].mxu0 %v5753
        %v5936 = vpop.f32.mrb[0].mxu0
        %v5937 = vadd.f32 0.0, %v5936
        %v5938 = vpop.f32.mrb[0].mxu0
        %v5939 = vpop.f32.mrb[0].mxu0
        %v5940 = vadd.f32 0.0, %v5939
        %v5941 = vpop.f32.mrb[0].mxu0
        %5942 = vmatprep.mubr.bf16.mxu0 0
        %5943 = vmatmul.mubr.bf16.gmra.mrb[0].mxu0 %v5755
        %v5944 = vpop.f32.mrb[0].mxu0
        %v5945 = vadd.f32 0.0, %v5944
        %v5946 = vpop.f32.mrb[0].mxu0
        %v5947 = vpop.f32.mrb[0].mxu0
        %v5948 = vadd.f32 0.0, %v5947
        %v5949 = vpop.f32.mrb[0].mxu0
        %5950 = vmatprep.mubr.bf16.mxu0 0
        %5951 = vmatmul.mubr.bf16.gmra.mrb[0].mxu0 %v5757
        %v5952 = vpop.f32.mrb[0].mxu0
        %v5953 = vadd.f32 0.0, %v5952
        %v5954 = vpop.f32.mrb[0].mxu0
        %v5955 = vpop.f32.mrb[0].mxu0
        %v5956 = vadd.f32 0.0, %v5955
        %v5957 = vpop.f32.mrb[0].mxu0
        %5958 = vmatprep.mubr.bf16.mxu0 0
        %5959 = vmatmul.mubr.bf16.gmra.mrb[0].mxu0 %v5759
        %v5960 = vpop.f32.mrb[0].mxu0
        %v5961 = vadd.f32 0.0, %v5960
        %v5962 = vpop.f32.mrb[0].mxu0
        %v5963 = vpop.f32.mrb[0].mxu0
        %v5964 = vadd.f32 0.0, %v5963
        %v5965 = vpop.f32.mrb[0].mxu0
        %5966 = vmatprep.mubr.bf16.mxu0 0
        %5967 = vmatmul.mubr.bf16.gmra.mrb[0].mxu0 %v5761
        %v5968 = vpop.f32.mrb[0].mxu0
        %v5969 = vadd.f32 0.0, %v5968
        %v5970 = vpop.f32.mrb[0].mxu0
        %v5971 = vpop.f32.mrb[0].mxu0
        %v5972 = vadd.f32 0.0, %v5971
        %v5973 = vpop.f32.mrb[0].mxu0
        %5974 = vmatprep.mubr.bf16.mxu0 0
        %5975 = vmatmul.mubr.bf16.gmra.mrb[0].mxu0 %v5763
        %v5976 = vpop.f32.mrb[0].mxu0
        %v5977 = vadd.f32 0.0, %v5976
        %v5978 = vpop.f32.mrb[0].mxu0
        %v5979 = vpop.f32.mrb[0].mxu0
        %v5980 = vadd.f32 0.0, %v5979
        %v5981 = vpop.f32.mrb[0].mxu0
        %5982 = vmatprep.mubr.bf16.mxu0 0
        %5983 = vmatmul.mubr.bf16.gmra.mrb[0].mxu0 %v5765
        %v5984 = vpop.f32.mrb[0].mxu0
        %v5985 = vadd.f32 0.0, %v5984
        %v5986 = vpop.f32.mrb[0].mxu0
        %v5987 = vpop.f32.mrb[0].mxu0
        %v5988 = vadd.f32 0.0, %v5987
        %v5989 = vpop.f32.mrb[0].mxu0
        %5990 = vmatprep.mubr.bf16.mxu0 0
        %5991 = vmatmul.mubr.bf16.gmra.mrb[0].mxu0 %v5767
        %v5992 = vpop.f32.mrb[0].mxu0
        %v5993 = vadd.f32 0.0, %v5992
        %v5994 = vpop.f32.mrb[0].mxu0
        %v5995 = vpop.f32.mrb[0].mxu0
        %v5996 = vadd.f32 0.0, %v5995
        %v5997 = vpop.f32.mrb[0].mxu0
        %5998 = vmatprep.mubr.bf16.mxu0 0
        %5999 = vmatmul.mubr.bf16.gmra.mrb[0].mxu0 %v5769
        %v6000 = vpop.f32.mrb[0].mxu0
        %v6001 = vadd.f32 0.0, %v6000
        %v6002 = vpop.f32.mrb[0].mxu0
        %v6003 = vpop.f32.mrb[0].mxu0
        %v6004 = vadd.f32 0.0, %v6003
        %v6005 = vpop.f32.mrb[0].mxu0
        %6006 = vmatprep.mubr.bf16.mxu0 0
        %6007 = vmatmul.mubr.bf16.gmra.mrb[0].mxu0 %v5771
        %v6008 = vpop.f32.mrb[0].mxu0
        %v6009 = vadd.f32 0.0, %v6008
        %v6010 = vpop.f32.mrb[0].mxu0
        %v6011 = vpop.f32.mrb[0].mxu0
        %v6012 = vadd.f32 0.0, %v6011
        %v6013 = vpop.f32.mrb[0].mxu0
        %6014 = vmatprep.mubr.bf16.mxu0 0
        %6015 = vmatmul.mubr.bf16.gmra.mrb[0].mxu0 %v5773
        %v6016 = vpop.f32.mrb[0].mxu0
        %v6017 = vadd.f32 0.0, %v6016
        %v6018 = vpop.f32.mrb[0].mxu0
        %v6019 = vpop.f32.mrb[0].mxu0
        %v6020 = vadd.f32 0.0, %v6019
        %v6021 = vpop.f32.mrb[0].mxu0
        %6022 = vmatprep.mubr.bf16.mxu0 0
        %6023 = vmatmul.mubr.bf16.gmra.mrb[0].mxu0 %v5775
        %v6024 = vpop.f32.mrb[0].mxu0
        %v6025 = vadd.f32 0.0, %v6024
        %v6026 = vpop.f32.mrb[0].mxu0
        %v6027 = vpop.f32.mrb[0].mxu0
        %v6028 = vadd.f32 0.0, %v6027
        %v6029 = vpop.f32.mrb[0].mxu0
        %6030 = vmatprep.mubr.bf16.mxu0 0
        %6031 = vmatmul.mubr.bf16.gmra.mrb[0].mxu0 %v5777
        %v6032 = vpop.f32.mrb[0].mxu0
        %v6033 = vadd.f32 0.0, %v6032
        %v6034 = vpop.f32.mrb[0].mxu0
        %v6035 = vpop.f32.mrb[0].mxu0
        %v6036 = vadd.f32 0.0, %v6035
        %v6037 = vpop.f32.mrb[0].mxu0
        %6038 = vmatprep.mubr.bf16.mxu0 0
        %6039 = vmatmul.mubr.bf16.gmra.mrb[0].mxu0 %v5779
        %v6040 = vpop.f32.mrb[0].mxu0
        %v6041 = vadd.f32 0.0, %v6040
        %v6042 = vpop.f32.mrb[0].mxu0
        %v6043 = vpop.f32.mrb[0].mxu0
        %v6044 = vadd.f32 0.0, %v6043
        %v6045 = vpop.f32.mrb[0].mxu0
        %6046 = vmatprep.mubr.bf16.mxu0 0
        %6047 = vmatmul.mubr.bf16.gmra.mrb[0].mxu0 %v5781
        %v6048 = vpop.f32.mrb[0].mxu0
        %v6049 = vadd.f32 0.0, %v6048
        %v6050 = vpop.f32.mrb[0].mxu0
        %v6051 = vpop.f32.mrb[0].mxu0
        %v6052 = vadd.f32 0.0, %v6051
        %v6053 = vpop.f32.mrb[0].mxu0
        %6054 = vmatprep.mubr.bf16.mxu0 0
        %6055 = vmatmul.mubr.bf16.gmra.mrb[0].mxu0 %v5783
        %v6056 = vpop.f32.mrb[0].mxu0
        %v6057 = vadd.f32 0.0, %v6056
        %v6058 = vpop.f32.mrb[0].mxu0
        %v6059 = vpop.f32.mrb[0].mxu0
        %v6060 = vadd.f32 0.0, %v6059
        %v6061 = vpop.f32.mrb[0].mxu0
        %6062 = vmatprep.mubr.bf16.mxu0 0
        %6063 = vmatmul.mubr.bf16.gmra.mrb[0].mxu0 %v5785
        %v6064 = vpop.f32.mrb[0].mxu0
        %v6065 = vadd.f32 0.0, %v6064
        %v6066 = vpop.f32.mrb[0].mxu0
        %v6067 = vpop.f32.mrb[0].mxu0
        %v6068 = vadd.f32 0.0, %v6067
        %v6069 = vpop.f32.mrb[0].mxu0
        %6070 = vmatprep.mubr.bf16.mxu0 0
        %6071 = vmatmul.mubr.bf16.gmra.mrb[0].mxu0 %v5787
        %v6072 = vpop.f32.mrb[0].mxu0
        %v6073 = vadd.f32 0.0, %v6072
        %v6074 = vpop.f32.mrb[0].mxu0
        %v6075 = vpop.f32.mrb[0].mxu0
        %v6076 = vadd.f32 0.0, %v6075
        %v6077 = vpop.f32.mrb[0].mxu0
        %6078 = vmatprep.mubr.bf16.mxu0 0
        %6079 = vmatmul.mubr.bf16.gmra.mrb[0].mxu0 %v5789
        %v6080 = vpop.f32.mrb[0].mxu0
        %v6081 = vadd.f32 0.0, %v6080
        %v6082 = vpop.f32.mrb[0].mxu0
        %v6083 = vpop.f32.mrb[0].mxu0
        %v6084 = vadd.f32 0.0, %v6083
        %v6085 = vpop.f32.mrb[0].mxu0
        %6086 = vmatprep.mubr.bf16.mxu0 0
        %6087 = vmatmul.mubr.bf16.gmra.mrb[0].mxu0 %v5791
        %v6088 = vpop.f32.mrb[0].mxu0
        %v6089 = vadd.f32 0.0, %v6088
        %v6090 = vpop.f32.mrb[0].mxu0
        %v6091 = vpop.f32.mrb[0].mxu0
        %v6092 = vadd.f32 0.0, %v6091
        %v6093 = vpop.f32.mrb[0].mxu0
        %6094 = vmatprep.mubr.bf16.mxu0 0
        %6095 = vmatmul.mubr.bf16.gmra.mrb[0].mxu0 %v5793
        %v6096 = vpop.f32.mrb[0].mxu0
        %v6097 = vadd.f32 0.0, %v6096
        %v6098 = vpop.f32.mrb[0].mxu0
        %v6099 = vpop.f32.mrb[0].mxu0
        %v6100 = vadd.f32 0.0, %v6099
        %v6101 = vpop.f32.mrb[0].mxu0
        %6102 = vmatprep.mubr.bf16.mxu0 0
        %6103 = vmatmul.mubr.bf16.gmra.mrb[0].mxu0 %v5795
        %v6104 = vpop.f32.mrb[0].mxu0
        %v6105 = vadd.f32 0.0, %v6104
        %v6106 = vpop.f32.mrb[0].mxu0
        %v6107 = vpop.f32.mrb[0].mxu0
        %v6108 = vadd.f32 0.0, %v6107
        %v6109 = vpop.f32.mrb[0].mxu0
        %6110 = vmatprep.mubr.bf16.mxu0 0
        %6111 = vmatmul.mubr.bf16.gmra.mrb[0].mxu0 %v5797
        %v6112 = vpop.f32.mrb[0].mxu0
        %v6113 = vadd.f32 0.0, %v6112
        %v6114 = vpop.f32.mrb[0].mxu0
        %v6115 = vpop.f32.mrb[0].mxu0
        %v6116 = vadd.f32 0.0, %v6115
        %v6117 = vpop.f32.mrb[0].mxu0
        %6118 = vmatprep.mubr.bf16.mxu0 0
        %6119 = vmatmul.mubr.bf16.gmra.mrb[0].mxu0 %v5799
        %v6120 = vpop.f32.mrb[0].mxu0
        %v6121 = vadd.f32 0.0, %v6120
        %v6122 = vpop.f32.mrb[0].mxu0
        %v6123 = vpop.f32.mrb[0].mxu0
        %v6124 = vadd.f32 0.0, %v6123
        %v6125 = vpop.f32.mrb[0].mxu0
        %6126 = vmatprep.mubr.bf16.mxu0 0
        %6127 = vmatmul.mubr.bf16.gmra.mrb[0].mxu0 %v5801
        %v6128 = vpop.f32.mrb[0].mxu0
        %v6129 = vadd.f32 0.0, %v6128
        %v6130 = vpop.f32.mrb[0].mxu0
        %v6131 = vpop.f32.mrb[0].mxu0
        %v6132 = vadd.f32 0.0, %v6131
        %v6133 = vpop.f32.mrb[0].mxu0
        %6134 = vmatprep.mubr.bf16.mxu0 0
        %6135 = vmatmul.mubr.bf16.gmra.mrb[0].mxu0 %v5803
        %v6136 = vpop.f32.mrb[0].mxu0
        %v6137 = vadd.f32 0.0, %v6136
        %v6138 = vpop.f32.mrb[0].mxu0
        %v6139 = vpop.f32.mrb[0].mxu0
        %v6140 = vadd.f32 0.0, %v6139
        %v6141 = vpop.f32.mrb[0].mxu0
        %6142 = vmatprep.mubr.bf16.mxu0 0
        %6143 = vmatmul.mubr.bf16.gmra.mrb[0].mxu0 %v5805
        %v6144 = vpop.f32.mrb[0].mxu0
        %v6145 = vadd.f32 0.0, %v6144
        %v6146 = vpop.f32.mrb[0].mxu0
        %v6147 = vpop.f32.mrb[0].mxu0
        %v6148 = vadd.f32 0.0, %v6147
        %v6149 = vpop.f32.mrb[0].mxu0
        %6150 = vmatprep.mubr.bf16.mxu0 0
        %6151 = vmatmul.mubr.bf16.gmra.mrb[0].mxu0 %v5807
        %v6152 = vpop.f32.mrb[0].mxu0
        %v6153 = vadd.f32 0.0, %v6152
        %v6154 = vpop.f32.mrb[0].mxu0
        %v6155 = vpop.f32.mrb[0].mxu0
        %v6156 = vadd.f32 0.0, %v6155
        %v6157 = vpop.f32.mrb[0].mxu0
        %6158 = vmatprep.mubr.bf16.mxu0 0
        %6159 = vmatmul.mubr.bf16.gmra.mrb[0].mxu0 %v5809
        %v6160 = vpop.f32.mrb[0].mxu0
        %v6161 = vadd.f32 0.0, %v6160
        %v6162 = vpop.f32.mrb[0].mxu0
        %v6163 = vpop.f32.mrb[0].mxu0
        %v6164 = vadd.f32 0.0, %v6163
        %v6165 = vpop.f32.mrb[0].mxu0
        %6166 = vmatprep.mubr.bf16.mxu0 0
        %6167 = vmatmul.mubr.bf16.gmra.mrb[0].mxu0 %v5811
        %v6168 = vpop.f32.mrb[0].mxu0
        %v6169 = vadd.f32 0.0, %v6168
        %v6170 = vpop.f32.mrb[0].mxu0
        %v6171 = vpop.f32.mrb[0].mxu0
        %v6172 = vadd.f32 0.0, %v6171
        %v6173 = vpop.f32.mrb[0].mxu0
        %6174 = vmatprep.mubr.bf16.mxu0 0
        %6175 = vmatmul.mubr.bf16.gmra.mrb[0].mxu0 %v5813
        %v6176 = vpop.f32.mrb[0].mxu0
        %v6177 = vadd.f32 0.0, %v6176
        %v6178 = vpop.f32.mrb[0].mxu0
        %v6179 = vpop.f32.mrb[0].mxu0
        %v6180 = vadd.f32 0.0, %v6179
        %v6181 = vpop.f32.mrb[0].mxu0
        %6182 = vdwg.mxu0
        %v6183 = vadd.f32 %v5664, %v5929
        %v6184 = vadd.f32 %v5665, %v5932
        %v6185 = vadd.f32 %v5666, %v5937
        %v6186 = vadd.f32 %v5667, %v5940
        %v6187 = vadd.f32 %v5668, %v5945
        %v6188 = vadd.f32 %v5669, %v5948
        %v6189 = vadd.f32 %v5670, %v5953
        %v6190 = vadd.f32 %v5671, %v5956
        %v6191 = vadd.f32 %v5672, %v5961
        %v6192 = vadd.f32 %v5673, %v5964
        %v6193 = vadd.f32 %v5674, %v5969
        %v6194 = vadd.f32 %v5675, %v5972
        %v6195 = vadd.f32 %v5676, %v5977
        %v6196 = vadd.f32 %v5677, %v5980
        %v6197 = vadd.f32 %v5678, %v5985
        %v6198 = vadd.f32 %v5679, %v5988
        %v6199 = vadd.f32 %v5680, %v5993
        %v6200 = vadd.f32 %v5681, %v5996
        %v6201 = vadd.f32 %v5682, %v6001
        %v6202 = vadd.f32 %v5683, %v6004
        %v6203 = vadd.f32 %v5684, %v6009
        %v6204 = vadd.f32 %v5685, %v6012
        %v6205 = vadd.f32 %v5686, %v6017
        %v6206 = vadd.f32 %v5687, %v6020
        %v6207 = vadd.f32 %v5688, %v6025
        %v6208 = vadd.f32 %v5689, %v6028
        %v6209 = vadd.f32 %v5690, %v6033
        %v6210 = vadd.f32 %v5691, %v6036
        %v6211 = vadd.f32 %v5692, %v6041
        %v6212 = vadd.f32 %v5693, %v6044
        %v6213 = vadd.f32 %v5694, %v6049
        %v6214 = vadd.f32 %v5695, %v6052
        %v6215 = vadd.f32 %v5696, %v6057
        %v6216 = vadd.f32 %v5697, %v6060
        %v6217 = vadd.f32 %v5698, %v6065
        %v6218 = vadd.f32 %v5699, %v6068
        %v6219 = vadd.f32 %v5700, %v6073
        %v6220 = vadd.f32 %v5701, %v6076
        %v6221 = vadd.f32 %v5702, %v6081
        %v6222 = vadd.f32 %v5703, %v6084
        %v6223 = vadd.f32 %v5704, %v6089
        %v6224 = vadd.f32 %v5705, %v6092
        %v6225 = vadd.f32 %v5706, %v6097
        %v6226 = vadd.f32 %v5707, %v6100
        %v6227 = vadd.f32 %v5708, %v6105
        %v6228 = vadd.f32 %v5709, %v6108
        %v6229 = vadd.f32 %v5710, %v6113
        %v6230 = vadd.f32 %v5711, %v6116
        %v6231 = vadd.f32 %v5712, %v6121
        %v6232 = vadd.f32 %v5713, %v6124
        %v6233 = vadd.f32 %v5714, %v6129
        %v6234 = vadd.f32 %v5715, %v6132
        %v6235 = vadd.f32 %v5716, %v6137
        %v6236 = vadd.f32 %v5717, %v6140
        %v6237 = vadd.f32 %v5718, %v6145
        %v6238 = vadd.f32 %v5719, %v6148
        %v6239 = vadd.f32 %v5720, %v6153
        %v6240 = vadd.f32 %v5721, %v6156
        %v6241 = vadd.f32 %v5722, %v6161
        %v6242 = vadd.f32 %v5723, %v6164
        %v6243 = vadd.f32 %v5724, %v6169
        %v6244 = vadd.f32 %v5725, %v6172
        %v6245 = vadd.f32 %v5726, %v6177
        %v6246 = vadd.f32 %v5727, %v6180
        %v6247 = vld [vmem:[%s2] sm:$0x1]
        %v6249 = vlaneseq
        %v6250 = vshrl.u32 %v6249, 7
        %v6251 = vsub.s32 0, %v6250
        %v6252 = vrot.slane %v6247, %v6251
        %v6254 = vadd.f32 %v6183, %v6252
        %v6255 = vadd.f32 %v6184, %v6252
        %v6256 = vadd.f32 %v6185, %v6252
        %v6257 = vadd.f32 %v6186, %v6252
        %v6258 = vadd.f32 %v6187, %v6252
        %v6259 = vadd.f32 %v6188, %v6252
        %v6260 = vadd.f32 %v6189, %v6252
        %v6261 = vadd.f32 %v6190, %v6252
        %v6262 = vadd.f32 %v6191, %v6252
        %v6263 = vadd.f32 %v6192, %v6252
        %v6264 = vadd.f32 %v6193, %v6252
        %v6265 = vadd.f32 %v6194, %v6252
        %v6266 = vadd.f32 %v6195, %v6252
        %v6267 = vadd.f32 %v6196, %v6252
        %v6268 = vadd.f32 %v6197, %v6252
        %v6269 = vadd.f32 %v6198, %v6252
        %v6270 = vadd.f32 %v6199, %v6252
        %v6271 = vadd.f32 %v6200, %v6252
        %v6272 = vadd.f32 %v6201, %v6252
        %v6273 = vadd.f32 %v6202, %v6252
        %v6274 = vadd.f32 %v6203, %v6252
        %v6275 = vadd.f32 %v6204, %v6252
        %v6276 = vadd.f32 %v6205, %v6252
        %v6277 = vadd.f32 %v6206, %v6252
        %v6278 = vadd.f32 %v6207, %v6252
        %v6279 = vadd.f32 %v6208, %v6252
        %v6280 = vadd.f32 %v6209, %v6252
        %v6281 = vadd.f32 %v6210, %v6252
        %v6282 = vadd.f32 %v6211, %v6252
        %v6283 = vadd.f32 %v6212, %v6252
        %v6284 = vadd.f32 %v6213, %v6252
        %v6285 = vadd.f32 %v6214, %v6252
        %v6286 = vadd.f32 %v6215, %v6252
        %v6287 = vadd.f32 %v6216, %v6252
        %v6288 = vadd.f32 %v6217, %v6252
        %v6289 = vadd.f32 %v6218, %v6252
        %v6290 = vadd.f32 %v6219, %v6252
        %v6291 = vadd.f32 %v6220, %v6252
        %v6292 = vadd.f32 %v6221, %v6252
        %v6293 = vadd.f32 %v6222, %v6252
        %v6294 = vadd.f32 %v6223, %v6252
        %v6295 = vadd.f32 %v6224, %v6252
        %v6296 = vadd.f32 %v6225, %v6252
        %v6297 = vadd.f32 %v6226, %v6252
        %v6298 = vadd.f32 %v6227, %v6252
        %v6299 = vadd.f32 %v6228, %v6252
        %v6300 = vadd.f32 %v6229, %v6252
        %v6301 = vadd.f32 %v6230, %v6252
        %v6302 = vadd.f32 %v6231, %v6252
        %v6303 = vadd.f32 %v6232, %v6252
        %v6304 = vadd.f32 %v6233, %v6252
        %v6305 = vadd.f32 %v6234, %v6252
        %v6306 = vadd.f32 %v6235, %v6252
        %v6307 = vadd.f32 %v6236, %v6252
        %v6308 = vadd.f32 %v6237, %v6252
        %v6309 = vadd.f32 %v6238, %v6252
        %v6310 = vadd.f32 %v6239, %v6252
        %v6311 = vadd.f32 %v6240, %v6252
        %v6312 = vadd.f32 %v6241, %v6252
        %v6313 = vadd.f32 %v6242, %v6252
        %v6314 = vadd.f32 %v6243, %v6252
        %v6315 = vadd.f32 %v6244, %v6252
        %v6316 = vadd.f32 %v6245, %v6252
        %v6317 = vadd.f32 %v6246, %v6252
        %v6318 = vlaneseq
        %v6319 = vshrl.u32 %v6318, 7
        %v6320 = vadd.s32 %v6319, 8
        %v6321 = vadd.s32 %v6319, 16
        %v6322 = vadd.s32 %v6319, 24
        %vm6323 = vcmp.lt.s32.totalorder %v6319, 16
        %vm6324 = vcmp.lt.s32.totalorder %v6320, 16
        %vm6325 = vcmp.lt.s32.totalorder %v6321, 16
        %vm6326 = vcmp.lt.s32.totalorder %v6322, 16
        %v6327 = vsel %vm6323, 1, 0
        %v6328 = vsel %vm6324, 1, 0
        %v6329 = vsel %vm6325, 1, 0
        %v6330 = vsel %vm6326, 1, 0
        %v6331 = vcvt.s32.f32 %v6327
        %v6332 = vcvt.s32.f32 %v6328
        %v6333 = vcvt.s32.f32 %v6329
        %v6334 = vcvt.s32.f32 %v6330
        %v6335 = vmul.f32 %v6254, %v6331
        %v6336 = vmul.f32 %v6255, %v6332
        %v6337 = vmul.f32 %v6256, %v6333
        %v6338 = vmul.f32 %v6257, %v6334
        %v6339 = vmul.f32 %v6258, %v6331
        %v6340 = vmul.f32 %v6259, %v6332
        %v6341 = vmul.f32 %v6260, %v6333
        %v6342 = vmul.f32 %v6261, %v6334
        %v6343 = vmul.f32 %v6262, %v6331
        %v6344 = vmul.f32 %v6263, %v6332
        %v6345 = vmul.f32 %v6264, %v6333
        %v6346 = vmul.f32 %v6265, %v6334
        %v6347 = vmul.f32 %v6266, %v6331
        %v6348 = vmul.f32 %v6267, %v6332
        %v6349 = vmul.f32 %v6268, %v6333
        %v6350 = vmul.f32 %v6269, %v6334
        %v6351 = vmul.f32 %v6270, %v6331
        %v6352 = vmul.f32 %v6271, %v6332
        %v6353 = vmul.f32 %v6272, %v6333
        %v6354 = vmul.f32 %v6273, %v6334
        %v6355 = vmul.f32 %v6274, %v6331
        %v6356 = vmul.f32 %v6275, %v6332
        %v6357 = vmul.f32 %v6276, %v6333
        %v6358 = vmul.f32 %v6277, %v6334
        %v6359 = vmul.f32 %v6278, %v6331
        %v6360 = vmul.f32 %v6279, %v6332
        %v6361 = vmul.f32 %v6280, %v6333
        %v6362 = vmul.f32 %v6281, %v6334
        %v6363 = vmul.f32 %v6282, %v6331
        %v6364 = vmul.f32 %v6283, %v6332
        %v6365 = vmul.f32 %v6284, %v6333
        %v6366 = vmul.f32 %v6285, %v6334
        %v6367 = vmul.f32 %v6286, %v6331
        %v6368 = vmul.f32 %v6287, %v6332
        %v6369 = vmul.f32 %v6288, %v6333
        %v6370 = vmul.f32 %v6289, %v6334
        %v6371 = vmul.f32 %v6290, %v6331
        %v6372 = vmul.f32 %v6291, %v6332
        %v6373 = vmul.f32 %v6292, %v6333
        %v6374 = vmul.f32 %v6293, %v6334
        %v6375 = vmul.f32 %v6294, %v6331
        %v6376 = vmul.f32 %v6295, %v6332
        %v6377 = vmul.f32 %v6296, %v6333
        %v6378 = vmul.f32 %v6297, %v6334
        %v6379 = vmul.f32 %v6298, %v6331
        %v6380 = vmul.f32 %v6299, %v6332
        %v6381 = vmul.f32 %v6300, %v6333
        %v6382 = vmul.f32 %v6301, %v6334
        %v6383 = vmul.f32 %v6302, %v6331
        %v6384 = vmul.f32 %v6303, %v6332
        %v6385 = vmul.f32 %v6304, %v6333
        %v6386 = vmul.f32 %v6305, %v6334
        %v6387 = vmul.f32 %v6306, %v6331
        %v6388 = vmul.f32 %v6307, %v6332
        %v6389 = vmul.f32 %v6308, %v6333
        %v6390 = vmul.f32 %v6309, %v6334
        %v6391 = vmul.f32 %v6310, %v6331
        %v6392 = vmul.f32 %v6311, %v6332
        %v6393 = vmul.f32 %v6312, %v6333
        %v6394 = vmul.f32 %v6313, %v6334
        %v6395 = vmul.f32 %v6314, %v6331
        %v6396 = vmul.f32 %v6315, %v6332
        %v6397 = vmul.f32 %v6316, %v6333
        %v6398 = vmul.f32 %v6317, %v6334
        %vm6463 = vcmask 1040384
        %v6464 = vrot.slane %v6335, 7
        %v6465 = vrot.slane %v6336, 7
        %v6466 = vsel %vm6463, %v6464, %v6465
        %v6467 = vrot.slane %v6337, 7
        %v6468 = vsel %vm6463, %v6465, %v6467
        %v6469 = vrot.slane %v6338, 7
        %v6470 = vsel %vm6463, %v6467, %v6469
        %v6471 = vrot.slane %v6339, 7
        %v6472 = vsel %vm6463, %v6469, %v6471
        %v6473 = vrot.slane %v6340, 7
        %v6474 = vsel %vm6463, %v6471, %v6473
        %v6475 = vrot.slane %v6341, 7
        %v6476 = vsel %vm6463, %v6473, %v6475
        %v6477 = vrot.slane %v6342, 7
        %v6478 = vsel %vm6463, %v6475, %v6477
        %v6479 = vrot.slane %v6343, 7
        %v6480 = vsel %vm6463, %v6477, %v6479
        %v6481 = vrot.slane %v6344, 7
        %v6482 = vsel %vm6463, %v6479, %v6481
        %v6483 = vrot.slane %v6345, 7
        %v6484 = vsel %vm6463, %v6481, %v6483
        %v6485 = vrot.slane %v6346, 7
        %v6486 = vsel %vm6463, %v6483, %v6485
        %v6487 = vrot.slane %v6347, 7
        %v6488 = vsel %vm6463, %v6485, %v6487
        %v6489 = vrot.slane %v6348, 7
        %v6490 = vsel %vm6463, %v6487, %v6489
        %v6491 = vrot.slane %v6349, 7
        %v6492 = vsel %vm6463, %v6489, %v6491
        %v6493 = vrot.slane %v6350, 7
        %v6494 = vsel %vm6463, %v6491, %v6493
        %v6495 = vrot.slane %v6351, 7
        %v6496 = vsel %vm6463, %v6493, %v6495
        %v6497 = vrot.slane %v6352, 7
        %v6498 = vsel %vm6463, %v6495, %v6497
        %v6499 = vrot.slane %v6353, 7
        %v6500 = vsel %vm6463, %v6497, %v6499
        %v6501 = vrot.slane %v6354, 7
        %v6502 = vsel %vm6463, %v6499, %v6501
        %v6503 = vrot.slane %v6355, 7
        %v6504 = vsel %vm6463, %v6501, %v6503
        %v6505 = vrot.slane %v6356, 7
        %v6506 = vsel %vm6463, %v6503, %v6505
        %v6507 = vrot.slane %v6357, 7
        %v6508 = vsel %vm6463, %v6505, %v6507
        %v6509 = vrot.slane %v6358, 7
        %v6510 = vsel %vm6463, %v6507, %v6509
        %v6511 = vrot.slane %v6359, 7
        %v6512 = vsel %vm6463, %v6509, %v6511
        %v6513 = vrot.slane %v6360, 7
        %v6514 = vsel %vm6463, %v6511, %v6513
        %v6515 = vrot.slane %v6361, 7
        %v6516 = vsel %vm6463, %v6513, %v6515
        %v6517 = vrot.slane %v6362, 7
        %v6518 = vsel %vm6463, %v6515, %v6517
        %v6519 = vrot.slane %v6363, 7
        %v6520 = vsel %vm6463, %v6517, %v6519
        %v6521 = vrot.slane %v6364, 7
        %v6522 = vsel %vm6463, %v6519, %v6521
        %v6523 = vrot.slane %v6365, 7
        %v6524 = vsel %vm6463, %v6521, %v6523
        %v6525 = vrot.slane %v6366, 7
        %v6526 = vsel %vm6463, %v6523, %v6525
        %v6527 = vrot.slane %v6367, 7
        %v6528 = vsel %vm6463, %v6525, %v6527
        %v6529 = vrot.slane %v6368, 7
        %v6530 = vsel %vm6463, %v6527, %v6529
        %v6531 = vrot.slane %v6369, 7
        %v6532 = vsel %vm6463, %v6529, %v6531
        %v6533 = vrot.slane %v6370, 7
        %v6534 = vsel %vm6463, %v6531, %v6533
        %v6535 = vrot.slane %v6371, 7
        %v6536 = vsel %vm6463, %v6533, %v6535
        %v6537 = vrot.slane %v6372, 7
        %v6538 = vsel %vm6463, %v6535, %v6537
        %v6539 = vrot.slane %v6373, 7
        %v6540 = vsel %vm6463, %v6537, %v6539
        %v6541 = vrot.slane %v6374, 7
        %v6542 = vsel %vm6463, %v6539, %v6541
        %v6543 = vrot.slane %v6375, 7
        %v6544 = vsel %vm6463, %v6541, %v6543
        %v6545 = vrot.slane %v6376, 7
        %v6546 = vsel %vm6463, %v6543, %v6545
        %v6547 = vrot.slane %v6377, 7
        %v6548 = vsel %vm6463, %v6545, %v6547
        %v6549 = vrot.slane %v6378, 7
        %v6550 = vsel %vm6463, %v6547, %v6549
        %v6551 = vrot.slane %v6379, 7
        %v6552 = vsel %vm6463, %v6549, %v6551
        %v6553 = vrot.slane %v6380, 7
        %v6554 = vsel %vm6463, %v6551, %v6553
        %v6555 = vrot.slane %v6381, 7
        %v6556 = vsel %vm6463, %v6553, %v6555
        %v6557 = vrot.slane %v6382, 7
        %v6558 = vsel %vm6463, %v6555, %v6557
        %v6559 = vrot.slane %v6383, 7
        %v6560 = vsel %vm6463, %v6557, %v6559
        %v6561 = vrot.slane %v6384, 7
        %v6562 = vsel %vm6463, %v6559, %v6561
        %v6563 = vrot.slane %v6385, 7
        %v6564 = vsel %vm6463, %v6561, %v6563
        %v6565 = vrot.slane %v6386, 7
        %v6566 = vsel %vm6463, %v6563, %v6565
        %v6567 = vrot.slane %v6387, 7
        %v6568 = vsel %vm6463, %v6565, %v6567
        %v6569 = vrot.slane %v6388, 7
        %v6570 = vsel %vm6463, %v6567, %v6569
        %v6571 = vrot.slane %v6389, 7
        %v6572 = vsel %vm6463, %v6569, %v6571
        %v6573 = vrot.slane %v6390, 7
        %v6574 = vsel %vm6463, %v6571, %v6573
        %v6575 = vrot.slane %v6391, 7
        %v6576 = vsel %vm6463, %v6573, %v6575
        %v6577 = vrot.slane %v6392, 7
        %v6578 = vsel %vm6463, %v6575, %v6577
        %v6579 = vrot.slane %v6393, 7
        %v6580 = vsel %vm6463, %v6577, %v6579
        %v6581 = vrot.slane %v6394, 7
        %v6582 = vsel %vm6463, %v6579, %v6581
        %v6583 = vrot.slane %v6395, 7
        %v6584 = vsel %vm6463, %v6581, %v6583
        %v6585 = vrot.slane %v6396, 7
        %v6586 = vsel %vm6463, %v6583, %v6585
        %v6587 = vrot.slane %v6397, 7
        %v6588 = vsel %vm6463, %v6585, %v6587
        %v6589 = vrot.slane %v6398, 7
        %v6590 = vsel %vm6463, %v6587, %v6589
        %v6656 = vsel %vm6463, 0.0, %v6464
        %v6657 = vsel %vm6463, %v6589, 0.0
        %v6658 = vpack.c.bf16 0.0, 0.0
        %v6659 = vpack.c.bf16 %v6466, %v6656
        %v6660 = vpack.c.bf16 %v6470, %v6468
        %v6661 = vpack.c.bf16 %v6474, %v6472
        %v6662 = vpack.c.bf16 %v6478, %v6476
        %v6663 = vpack.c.bf16 %v6482, %v6480
        %v6664 = vpack.c.bf16 %v6486, %v6484
        %v6665 = vpack.c.bf16 %v6490, %v6488
        %v6666 = vpack.c.bf16 %v6494, %v6492
        %v6667 = vpack.c.bf16 %v6498, %v6496
        %v6668 = vpack.c.bf16 %v6502, %v6500
        %v6669 = vpack.c.bf16 %v6506, %v6504
        %v6670 = vpack.c.bf16 %v6510, %v6508
        %v6671 = vpack.c.bf16 %v6514, %v6512
        %v6672 = vpack.c.bf16 %v6518, %v6516
        %v6673 = vpack.c.bf16 %v6522, %v6520
        %v6674 = vpack.c.bf16 %v6526, %v6524
        %v6675 = vpack.c.bf16 %v6530, %v6528
        %v6676 = vpack.c.bf16 %v6534, %v6532
        %v6677 = vpack.c.bf16 %v6538, %v6536
        %v6678 = vpack.c.bf16 %v6542, %v6540
        %v6679 = vpack.c.bf16 %v6546, %v6544
        %v6680 = vpack.c.bf16 %v6550, %v6548
        %v6681 = vpack.c.bf16 %v6554, %v6552
        %v6682 = vpack.c.bf16 %v6558, %v6556
        %v6683 = vpack.c.bf16 %v6562, %v6560
        %v6684 = vpack.c.bf16 %v6566, %v6564
        %v6685 = vpack.c.bf16 %v6570, %v6568
        %v6686 = vpack.c.bf16 %v6574, %v6572
        %v6687 = vpack.c.bf16 %v6578, %v6576
        %v6688 = vpack.c.bf16 %v6582, %v6580
        %v6689 = vpack.c.bf16 %v6586, %v6584
        %v6690 = vpack.c.bf16 %v6590, %v6588
        %v6691 = vpack.c.bf16 0.0, %v6657
        %v6726 = vunpack.c.l.b16 %v6658
        %v6727 = vunpack.c.h.b16 %v6658
        %v6728 = vunpack.c.l.b16 %v6659
        %v6729 = vunpack.c.h.b16 %v6659
        %v6730 = vunpack.c.l.b16 %v6660
        %v6731 = vunpack.c.h.b16 %v6660
        %v6732 = vunpack.c.l.b16 %v6661
        %v6733 = vunpack.c.h.b16 %v6661
        %v6734 = vunpack.c.l.b16 %v6662
        %v6735 = vunpack.c.h.b16 %v6662
        %v6736 = vunpack.c.l.b16 %v6663
        %v6737 = vunpack.c.h.b16 %v6663
        %v6738 = vunpack.c.l.b16 %v6664
        %v6739 = vunpack.c.h.b16 %v6664
        %v6740 = vunpack.c.l.b16 %v6665
        %v6741 = vunpack.c.h.b16 %v6665
        %v6742 = vunpack.c.l.b16 %v6666
        %v6743 = vunpack.c.h.b16 %v6666
        %v6744 = vunpack.c.l.b16 %v6667
        %v6745 = vunpack.c.h.b16 %v6667
        %v6746 = vunpack.c.l.b16 %v6668
        %v6747 = vunpack.c.h.b16 %v6668
        %v6748 = vunpack.c.l.b16 %v6669
        %v6749 = vunpack.c.h.b16 %v6669
        %v6750 = vunpack.c.l.b16 %v6670
        %v6751 = vunpack.c.h.b16 %v6670
        %v6752 = vunpack.c.l.b16 %v6671
        %v6753 = vunpack.c.h.b16 %v6671
        %v6754 = vunpack.c.l.b16 %v6672
        %v6755 = vunpack.c.h.b16 %v6672
        %v6756 = vunpack.c.l.b16 %v6673
        %v6757 = vunpack.c.h.b16 %v6673
        %v6758 = vunpack.c.l.b16 %v6674
        %v6759 = vunpack.c.h.b16 %v6674
        %v6760 = vunpack.c.l.b16 %v6675
        %v6761 = vunpack.c.h.b16 %v6675
        %v6762 = vunpack.c.l.b16 %v6676
        %v6763 = vunpack.c.h.b16 %v6676
        %v6764 = vunpack.c.l.b16 %v6677
        %v6765 = vunpack.c.h.b16 %v6677
        %v6766 = vunpack.c.l.b16 %v6678
        %v6767 = vunpack.c.h.b16 %v6678
        %v6768 = vunpack.c.l.b16 %v6679
        %v6769 = vunpack.c.h.b16 %v6679
        %v6770 = vunpack.c.l.b16 %v6680
        %v6771 = vunpack.c.h.b16 %v6680
        %v6772 = vunpack.c.l.b16 %v6681
        %v6773 = vunpack.c.h.b16 %v6681
        %v6774 = vunpack.c.l.b16 %v6682
        %v6775 = vunpack.c.h.b16 %v6682
        %v6776 = vunpack.c.l.b16 %v6683
        %v6777 = vunpack.c.h.b16 %v6683
        %v6778 = vunpack.c.l.b16 %v6684
        %v6779 = vunpack.c.h.b16 %v6684
        %v6780 = vunpack.c.l.b16 %v6685
        %v6781 = vunpack.c.h.b16 %v6685
        %v6782 = vunpack.c.l.b16 %v6686
        %v6783 = vunpack.c.h.b16 %v6686
        %v6784 = vunpack.c.l.b16 %v6687
        %v6785 = vunpack.c.h.b16 %v6687
        %v6786 = vunpack.c.l.b16 %v6688
        %v6787 = vunpack.c.h.b16 %v6688
        %v6788 = vunpack.c.l.b16 %v6689
        %v6789 = vunpack.c.h.b16 %v6689
        %v6790 = vunpack.c.l.b16 %v6690
        %v6791 = vunpack.c.h.b16 %v6690
        %v6792 = vunpack.c.l.b16 %v6691
        %v6793 = vunpack.c.h.b16 %v6691
        %v6794 = vpack.c.b16 %v6726, %v6726
        %v6795 = vpack.c.b16 %v6727, %v6727
        %v6796 = vpack.c.b16 %v6728, %v6728
        %v6797 = vpack.c.b16 %v6729, %v6729
        %v6798 = vpack.c.b16 %v6730, %v6730
        %v6799 = vpack.c.b16 %v6731, %v6731
        %v6800 = vpack.c.b16 %v6732, %v6732
        %v6801 = vpack.c.b16 %v6733, %v6733
        %v6802 = vpack.c.b16 %v6734, %v6734
        %v6803 = vpack.c.b16 %v6735, %v6735
        %v6804 = vpack.c.b16 %v6736, %v6736
        %v6805 = vpack.c.b16 %v6737, %v6737
        %v6806 = vpack.c.b16 %v6738, %v6738
        %v6807 = vpack.c.b16 %v6739, %v6739
        %v6808 = vpack.c.b16 %v6740, %v6740
        %v6809 = vpack.c.b16 %v6741, %v6741
        %v6810 = vpack.c.b16 %v6742, %v6742
        %v6811 = vpack.c.b16 %v6743, %v6743
        %v6812 = vpack.c.b16 %v6744, %v6744
        %v6813 = vpack.c.b16 %v6745, %v6745
        %v6814 = vpack.c.b16 %v6746, %v6746
        %v6815 = vpack.c.b16 %v6747, %v6747
        %v6816 = vpack.c.b16 %v6748, %v6748
        %v6817 = vpack.c.b16 %v6749, %v6749
        %v6818 = vpack.c.b16 %v6750, %v6750
        %v6819 = vpack.c.b16 %v6751, %v6751
        %v6820 = vpack.c.b16 %v6752, %v6752
        %v6821 = vpack.c.b16 %v6753, %v6753
        %v6822 = vpack.c.b16 %v6754, %v6754
        %v6823 = vpack.c.b16 %v6755, %v6755
        %v6824 = vpack.c.b16 %v6756, %v6756
        %v6825 = vpack.c.b16 %v6757, %v6757
        %v6826 = vpack.c.b16 %v6758, %v6758
        %v6827 = vpack.c.b16 %v6759, %v6759
        %v6828 = vpack.c.b16 %v6760, %v6760
        %v6829 = vpack.c.b16 %v6761, %v6761
        %v6830 = vpack.c.b16 %v6762, %v6762
        %v6831 = vpack.c.b16 %v6763, %v6763
        %v6832 = vpack.c.b16 %v6764, %v6764
        %v6833 = vpack.c.b16 %v6765, %v6765
        %v6834 = vpack.c.b16 %v6766, %v6766
        %v6835 = vpack.c.b16 %v6767, %v6767
        %v6836 = vpack.c.b16 %v6768, %v6768
        %v6837 = vpack.c.b16 %v6769, %v6769
        %v6838 = vpack.c.b16 %v6770, %v6770
        %v6839 = vpack.c.b16 %v6771, %v6771
        %v6840 = vpack.c.b16 %v6772, %v6772
        %v6841 = vpack.c.b16 %v6773, %v6773
        %v6842 = vpack.c.b16 %v6774, %v6774
        %v6843 = vpack.c.b16 %v6775, %v6775
        %v6844 = vpack.c.b16 %v6776, %v6776
        %v6845 = vpack.c.b16 %v6777, %v6777
        %v6846 = vpack.c.b16 %v6778, %v6778
        %v6847 = vpack.c.b16 %v6779, %v6779
        %v6848 = vpack.c.b16 %v6780, %v6780
        %v6849 = vpack.c.b16 %v6781, %v6781
        %v6850 = vpack.c.b16 %v6782, %v6782
        %v6851 = vpack.c.b16 %v6783, %v6783
        %v6852 = vpack.c.b16 %v6784, %v6784
        %v6853 = vpack.c.b16 %v6785, %v6785
        %v6854 = vpack.c.b16 %v6786, %v6786
        %v6855 = vpack.c.b16 %v6787, %v6787
        %v6856 = vpack.c.b16 %v6788, %v6788
        %v6857 = vpack.c.b16 %v6789, %v6789
        %v6858 = vpack.c.b16 %v6790, %v6790
        %v6859 = vpack.c.b16 %v6791, %v6791
        %v6860 = vpack.c.b16 %v6792, %v6792
        %v6861 = vpack.c.b16 %v6793, %v6793
        %6930 = vst [vmem:[%s203] sm:$0xf] %v6794
        %6931 = vst [vmem:[%s203 + $0x4] sm:$0xf] %v6795
        %6932 = vst [vmem:[%s203 + $0x8] sm:$0xf] %v6794
        %6933 = vst [vmem:[%s203 + $0xc] sm:$0xf] %v6795
        %6934 = vst [vmem:[%s203 + $0x10] sm:$0xf] %v6796
        %6935 = vst [vmem:[%s203 + $0x14] sm:$0xf] %v6797
        %6936 = vst [vmem:[%s203 + $0x18] sm:$0xf] %v6798
        %6937 = vst [vmem:[%s203 + $0x1c] sm:$0xf] %v6799
        %6938 = vst [vmem:[%s203 + $0x20] sm:$0xf] %v6800
        %6939 = vst [vmem:[%s203 + $0x24] sm:$0xf] %v6801
        %6940 = vst [vmem:[%s203 + $0x28] sm:$0xf] %v6802
        %6941 = vst [vmem:[%s203 + $0x2c] sm:$0xf] %v6803
        %6942 = vst [vmem:[%s203 + $0x30] sm:$0xf] %v6804
        %6943 = vst [vmem:[%s203 + $0x34] sm:$0xf] %v6805
        %6944 = vst [vmem:[%s203 + $0x38] sm:$0xf] %v6806
        %6945 = vst [vmem:[%s203 + $0x3c] sm:$0xf] %v6807
        %6946 = vst [vmem:[%s203 + $0x40] sm:$0xf] %v6808
        %6947 = vst [vmem:[%s203 + $0x44] sm:$0xf] %v6809
        %6948 = vst [vmem:[%s203 + $0x48] sm:$0xf] %v6810
        %6949 = vst [vmem:[%s203 + $0x4c] sm:$0xf] %v6811
        %6950 = vst [vmem:[%s203 + $0x50] sm:$0xf] %v6812
        %6951 = vst [vmem:[%s203 + $0x54] sm:$0xf] %v6813
        %6952 = vst [vmem:[%s203 + $0x58] sm:$0xf] %v6814
        %6953 = vst [vmem:[%s203 + $0x5c] sm:$0xf] %v6815
        %6954 = vst [vmem:[%s203 + $0x60] sm:$0xf] %v6816
        %6955 = vst [vmem:[%s203 + $0x64] sm:$0xf] %v6817
        %6956 = vst [vmem:[%s203 + $0x68] sm:$0xf] %v6818
        %6957 = vst [vmem:[%s203 + $0x6c] sm:$0xf] %v6819
        %6958 = vst [vmem:[%s203 + $0x70] sm:$0xf] %v6820
        %6959 = vst [vmem:[%s203 + $0x74] sm:$0xf] %v6821
        %6960 = vst [vmem:[%s203 + $0x78] sm:$0xf] %v6822
        %6961 = vst [vmem:[%s203 + $0x7c] sm:$0xf] %v6823
        %6962 = vst [vmem:[%s203 + $0x80] sm:$0xf] %v6824
        %6963 = vst [vmem:[%s203 + $0x84] sm:$0xf] %v6825
        %6964 = vst [vmem:[%s203 + $0x88] sm:$0xf] %v6826
        %6965 = vst [vmem:[%s203 + $0x8c] sm:$0xf] %v6827
        %6966 = vst [vmem:[%s203 + $0x90] sm:$0xf] %v6828
        %6967 = vst [vmem:[%s203 + $0x94] sm:$0xf] %v6829
        %6968 = vst [vmem:[%s203 + $0x98] sm:$0xf] %v6830
        %6969 = vst [vmem:[%s203 + $0x9c] sm:$0xf] %v6831
        %6970 = vst [vmem:[%s203 + $0xa0] sm:$0xf] %v6832
        %6971 = vst [vmem:[%s203 + $0xa4] sm:$0xf] %v6833
        %6972 = vst [vmem:[%s203 + $0xa8] sm:$0xf] %v6834
        %6973 = vst [vmem:[%s203 + $0xac] sm:$0xf] %v6835
        %6974 = vst [vmem:[%s203 + $0xb0] sm:$0xf] %v6836
        %6975 = vst [vmem:[%s203 + $0xb4] sm:$0xf] %v6837
        %6976 = vst [vmem:[%s203 + $0xb8] sm:$0xf] %v6838
        %6977 = vst [vmem:[%s203 + $0xbc] sm:$0xf] %v6839
        %6978 = vst [vmem:[%s203 + $0xc0] sm:$0xf] %v6840
        %6979 = vst [vmem:[%s203 + $0xc4] sm:$0xf] %v6841
        %6980 = vst [vmem:[%s203 + $0xc8] sm:$0xf] %v6842
        %6981 = vst [vmem:[%s203 + $0xcc] sm:$0xf] %v6843
        %6982 = vst [vmem:[%s203 + $0xd0] sm:$0xf] %v6844
        %6983 = vst [vmem:[%s203 + $0xd4] sm:$0xf] %v6845
        %6984 = vst [vmem:[%s203 + $0xd8] sm:$0xf] %v6846
        %6985 = vst [vmem:[%s203 + $0xdc] sm:$0xf] %v6847
        %6986 = vst [vmem:[%s203 + $0xe0] sm:$0xf] %v6848
        %6987 = vst [vmem:[%s203 + $0xe4] sm:$0xf] %v6849
        %6988 = vst [vmem:[%s203 + $0xe8] sm:$0xf] %v6850
        %6989 = vst [vmem:[%s203 + $0xec] sm:$0xf] %v6851
        %6990 = vst [vmem:[%s203 + $0xf0] sm:$0xf] %v6852
        %6991 = vst [vmem:[%s203 + $0xf4] sm:$0xf] %v6853
        %6992 = vst [vmem:[%s203 + $0xf8] sm:$0xf] %v6854
        %6993 = vst [vmem:[%s203 + $0xfc] sm:$0xf] %v6855
        %6994 = vst [vmem:[%s203 + $0x100] sm:$0xf] %v6856
        %6995 = vst [vmem:[%s203 + $0x104] sm:$0xf] %v6857
        %6996 = vst [vmem:[%s203 + $0x108] sm:$0xf] %v6858
        %6997 = vst [vmem:[%s203 + $0x10c] sm:$0xf] %v6859
        %6998 = vst [vmem:[%s203 + $0x110] sm:$0xf] %v6860
        %6999 = vst [vmem:[%s203 + $0x114] sm:$0xf] %v6861
        %7000 = vst [vmem:[%s203 + $0x118] sm:$0xf] %v6794
        %7001 = vst [vmem:[%s203 + $0x11c] sm:$0xf] %v6795
        %7002 = vst [vmem:[%s203 + $0x120] sm:$0xf] %v6794
        %7003 = vst [vmem:[%s203 + $0x124] sm:$0xf] %v6795
        %7004 = vst [vmem:[%s203 + $0x128] sm:$0xf] %v6794
        %7005 = vst [vmem:[%s203 + $0x12c] sm:$0xf] %v6795
        %s7006 = sand.u32 %s97, 1
        %s7007 = scalar_lea.sflag [#allocation4], %s7006
        %s7008 = sand.u32 %s97, 1
        %s7009 = smul.addr %s7008, 304
        %s7010 = scalar_lea.vmem [#allocation7], %s7009
        // Predicated region
        $region41: #{tpu_custom_call.1} parent=31 // pred_check
          %p7011 = pneg %p107
        $region42: #{tpu_custom_call.1} parent=31 // pred_check_branch
          %7013 = sbr.rel (%p7011) target = $region44
        $region43: #{tpu_custom_call.1} parent=31 // pred_region
          %s7015 = ssub.s32 4864, 4864
          %7016 = vsyncadd %s7007, %s7015
          %s7017 = smul.addr %s21, 76
          %s7018 = smul.addr %s7017, 64
          %s7019 = scalar_lea.hbm %s3, %s7018
          %s7020 = sshll.u32 %s7010, 4
          %s7021 = int_to_ptr.vmem [resolvable:$true] %s7020
          %7026 = dma.vmem_to_hbm [thread:$0]  %s7021, 4864, %s7019, %s7007, 64, 64, 4
        $region44: #{tpu_custom_call.1} parent=31 // pred_fallthru
          _
      $region32: #{tpu_custom_call.1} parent=5 // pred_fallthru
        _
      %p7027 = scmp.le.s32.totalorder 2, %s16
      // Predicated region
      $region45: #{tpu_custom_call.1} parent=5 // pred_check
        %p7028 = pneg %p7027
      $region46: #{tpu_custom_call.1} parent=5 // pred_check_branch
        %7030 = sbr.rel (%p7028) target = $region48
      $region47: #{tpu_custom_call.1} parent=5 // pred_region
        %s7031 = ssub.s32 %s16, 2
        // Predicated region
        $region49: #{tpu_custom_call.1} parent=47 // pred_check
          %p7032 = pneg %p113
        $region50: #{tpu_custom_call.1} parent=47 // pred_check_branch
          %7034 = sbr.rel (%p7032) target = $region52
        $region51: #{tpu_custom_call.1} parent=47 // pred_region
          %s7035 = sand.u32 %s98, 1
          %s7036 = scalar_lea.sflag [#allocation4], %s7035
          %s7037 = sand.u32 %s98, 1
          %s7038 = smul.addr %s7037, 304
          %s7039 = scalar_lea.vmem [#allocation7], %s7038
          %7040 = dma.done %s7036, 4864
        $region52: #{tpu_custom_call.1} parent=47 // pred_fallthru
          _
      $region48: #{tpu_custom_call.1} parent=5 // pred_fallthru
        _
    $region6: #{tpu_custom_call.1} parent=1 // loop_footer
      %s20 = sadd.s32 1, %s16
    $region7: #{tpu_custom_call.1} parent=1 // loop_footer_branch
      %15 = sbr.rel target = $region3
    $region8: #{tpu_custom_call.1} parent=1 // loop_exit
      _
    %7041 = vsyncpa [#allocation3], 1
    %s7042 = scalar_lea.sflag [#allocation3], 1
    %7043 = vsyncpa %s7042, 1
    %7044 = vsyncpa [#allocation6], 1
    %7045 = vsyncpa [#allocation4], 1
    %s7046 = scalar_lea.sflag [#allocation4], 1
    %7047 = vsyncpa %s7046, 1

</llo_original>
